<compile_context>
chip_gen: v6e
topology: v6e:2x2x1
jax: 0.10.0
libtpu: 0.0.40
codegen_flags: <defaults>
</compile_context>

<pallas_src>
import math
import functools

import jax
import jax.numpy as jnp
from jax import lax
from jax.experimental import pallas as pl
from jax.experimental.pallas import tpu as pltpu

LANE = 128
NEG_INF = -1000000000.0


def _round_up(x, m):
    return ((x + m - 1) // m) * m


def _pad_axis(x, target, axis):
    pad = target - x.shape[axis]
    if pad <= 0:
        return x
    widths = [(0, 0)] * x.ndim
    widths[axis] = (0, pad)
    return jnp.pad(x, widths)


def _pad2d(x, rows, cols):
    return _pad_axis(_pad_axis(x, rows, 0), cols, 1)


def _block_diag2(a, b):
    ra, ca = a.shape
    rb, cb = b.shape
    top = jnp.concatenate([a, jnp.zeros((ra, cb), a.dtype)], axis=1)
    bot = jnp.concatenate([jnp.zeros((rb, ca), b.dtype), b], axis=1)
    return jnp.concatenate([top, bot], axis=0)


def _tpu_flags():
    """bf16 MXU operands + 256-wide block-diag packing on v6e/v7x; f32/split on v5e-."""
    kind = ""
    try:
        kind = jax.devices()[0].device_kind.lower()
    except Exception:
        pass
    old_gen = any(t in kind for t in ("v2", "v3", "v4", "v5"))
    mxu_dtype = jnp.float32 if old_gen else jnp.bfloat16
    pack_256 = not old_gen
    return mxu_dtype, pack_256


def _softmax_last(x):
    m = jnp.max(x, axis=-1, keepdims=True)
    e = jnp.exp(x - m)
    return e * pl.reciprocal(jnp.sum(e, axis=-1, keepdims=True), approx=True)


# ----------------------------------------------------------------------------
# Fused Pallas kernel: attention adjacency + all GCN layers (one batch element
# per grid step; batch dim squeezed out of every ref)
# ----------------------------------------------------------------------------
def fused_gcn_kernel(x_ref, adj_ref, eye_ref, kbias_ref, rowm_ref, cbias_ref,
                     wqk_ref, bqk_ref, wpair_ref, bpair_ref, affpair_ref,
                     adjag_ref, dep_ref, ag_ref,
                     *, n_layers, pack_256, mxu_dtype):
    NP, DP = x_ref.shape                 # lane-padded seq len, padded d_model
    DMP = dep_ref.shape[-1]              # lane-padded mem_dim (== DP)

    x = x_ref[...]                       # (NP, DP), zero-padded feats/rows
    xm = x.astype(mxu_dtype)

    # ---- attention adjacency -------------------------------------------------
    # fused q/k projection; 1/sqrt(d_model) already folded into the q half.
    qk = jnp.dot(xm, wqk_ref[...].astype(mxu_dtype),
                 preferred_element_type=jnp.float32) + bqk_ref[...]
    q = qk[:, :DP].astype(mxu_dtype)
    k = qk[:, DP:].astype(mxu_dtype)

    # contract last dims of both operands (no transposes feeding the MXU)
    scores = jnp.einsum('nd,md->nm', q, k, preferred_element_type=jnp.float32)
    scores = scores + kbias_ref[...]     # (1, NP) additive -1e9 key mask
    attn = _softmax_last(scores)         # dropout = identity (eval)

    # diag := 1.0 (precomputed eye mask), then row-mask (reference ordering)
    adj_ag = jnp.where(eye_ref[...] > 0.0, 1.0, attn) * rowm_ref[...]
    adjag_ref[...] = adj_ag

    # ---- GCN layers (unrolled; state stays resident in vregs/VMEM) ----------
    adj = adj_ref[...]
    inv_dep = pl.reciprocal(jnp.sum(adj, axis=-1, keepdims=True) + 1.0,
                            approx=True)
    inv_ag = pl.reciprocal(jnp.sum(adj_ag, axis=-1, keepdims=True) + 1.0,
                           approx=True)

    adj_m = adj.astype(mxu_dtype)
    adjag_m = adj_ag.astype(mxu_dtype)
    cbias = cbias_ref[...]               # (1, NP): -1e9 on columns >= maxlen
    aff_m = affpair_ref[...].astype(mxu_dtype)   # hoisted out of the layer loop

    out_dep = x
    out_ag = x
    # TODO(synk): if n_layers grows beyond ~3, move this loop onto an
    # "arbitrary" grid axis / fori_loop with VMEM scratch to bound live ranges.
    for l in range(n_layers):
        wp = wpair_ref[l]                # (2DP, 2DMP) block-diag(w_dep, w_ag)
        bp = bpair_ref[l]                # (1, 2DMP)   [b_dep | b_ag]

        ax_dep = jnp.dot(adj_m, out_dep.astype(mxu_dtype),
                         preferred_element_type=jnp.float32)
        ax_ag = jnp.dot(adjag_m, out_ag.astype(mxu_dtype),
                        preferred_element_type=jnp.float32)

        if pack_256:
            # one 256-wide MXU push for the dep/ag pair
            ax_pair = jnp.concatenate([ax_dep, ax_ag], axis=-1).astype(mxu_dtype)
            axw = jnp.dot(ax_pair, wp.astype(mxu_dtype),
                          preferred_element_type=jnp.float32) + bp
            axw_dep = axw[:, :DMP]
            axw_ag = axw[:, DMP:]
        else:
            axw_dep = jnp.dot(ax_dep.astype(mxu_dtype),
                              wp[:DP, :DMP].astype(mxu_dtype),
                              preferred_element_type=jnp.float32) + bp[:, :DMP]
            axw_ag = jnp.dot(ax_ag.astype(mxu_dtype),
                             wp[DP:, DMP:].astype(mxu_dtype),
                             preferred_element_type=jnp.float32) + bp[:, DMP:]

        g_dep = jnp.maximum(axw_dep * inv_dep, 0.0)
        g_ag = jnp.maximum(axw_ag * inv_ag, 0.0)
        g_dep_m = g_dep.astype(mxu_dtype)
        g_ag_m = g_ag.astype(mxu_dtype)

        if pack_256:
            g_pair = jnp.concatenate([g_dep_m, g_ag_m], axis=-1)
            t_pair = jnp.dot(g_pair, aff_m, preferred_element_type=jnp.float32)
            t1 = t_pair[:, :DMP].astype(mxu_dtype)
            t2 = t_pair[:, DMP:].astype(mxu_dtype)
        else:
            t1 = jnp.dot(g_dep_m, aff_m[:DMP, :DMP],
                         preferred_element_type=jnp.float32).astype(mxu_dtype)
            t2 = jnp.dot(g_ag_m, aff_m[DMP:, DMP:],
                         preferred_element_type=jnp.float32).astype(mxu_dtype)

        # bilinear interaction + softmax mixing; padded columns masked additively
        s1 = jnp.einsum('nd,md->nm', t1, g_ag_m,
                        preferred_element_type=jnp.float32) + cbias
        s2 = jnp.einsum('nd,md->nm', t2, g_dep_m,
                        preferred_element_type=jnp.float32) + cbias
        a1 = _softmax_last(s1).astype(mxu_dtype)
        a2 = _softmax_last(s2).astype(mxu_dtype)

        out_dep = jnp.dot(a1, g_ag_m, preferred_element_type=jnp.float32)
        out_ag = jnp.dot(a2, g_dep_m, preferred_element_type=jnp.float32)
        # gcn_drop: identity (eval)

    dep_ref[...] = out_dep.astype(dep_ref.dtype)
    ag_ref[...] = out_ag.astype(ag_ref.dtype)


def fused_gcn(x_p, adj_p, eye, key_bias, row_mask, col_bias,
              wqk, bqk, w_pair, b_pair, aff_pair, n_layers):
    """One pallas_call, grid over batch, weights VMEM-resident across steps."""
    B, NP, DP = x_p.shape
    DMP = aff_pair.shape[-1] // 2
    mxu_dtype, pack_256 = _tpu_flags()

    kern = functools.partial(fused_gcn_kernel, n_layers=n_layers,
                             pack_256=pack_256, mxu_dtype=mxu_dtype)

    # footprint-derived scoped-VMEM limit (inputs+outputs double-buffered +
    # unrolled-layer temporaries), clamped under v7x's 64 MiB physical VMEM.
    vmem_est = 4 * (
        2 * (NP * DP + 3 * NP * NP + 2 * NP * DMP
             + DP * 2 * DP + n_layers * 4 * DP * DMP + 4 * DMP * DMP)
        + (10 * NP * NP + 10 * NP * DP))
    vmem_limit = int(min(64 << 20, max(32 << 20, vmem_est)))

    const2 = lambda b: (0, 0)
    const3 = lambda b: (0, 0, 0)
    batch3 = lambda b: (b, 0, 0)

    adj_ag, out_dep, out_ag = pl.pallas_call(
        kern,
        out_shape=(jax.ShapeDtypeStruct((B, NP, NP), jnp.float32),
                   jax.ShapeDtypeStruct((B, NP, DMP), jnp.float32),
                   jax.ShapeDtypeStruct((B, NP, DMP), jnp.float32)),
        grid=(B,),
        in_specs=[
            pl.BlockSpec((None, NP, DP), batch3),              # x
            pl.BlockSpec((None, NP, NP), batch3),              # adj
            pl.BlockSpec((NP, NP), const2),                    # eye mask
            pl.BlockSpec((None, 1, NP), batch3),               # key bias (-1e9)
            pl.BlockSpec((None, NP, 1), batch3),               # row mask
            pl.BlockSpec((1, NP), const2),                     # pad-col bias
            pl.BlockSpec((DP, 2 * DP), const2),                # wqk
            pl.BlockSpec((1, 2 * DP), const2),                 # bqk
            pl.BlockSpec((n_layers, 2 * DP, 2 * DMP), const3),  # w_pair stack
            pl.BlockSpec((n_layers, 1, 2 * DMP), const3),       # b_pair stack
            pl.BlockSpec((2 * DMP, 2 * DMP), const2),          # aff pair
        ],
        out_specs=[
            pl.BlockSpec((None, NP, NP), batch3),
            pl.BlockSpec((None, NP, DMP), batch3),
            pl.BlockSpec((None, NP, DMP), batch3),
        ],
        compiler_params=pltpu.CompilerParams(
            dimension_semantics=("parallel",),
            vmem_limit_bytes=vmem_limit),
    )(x_p, adj_p, eye, key_bias, row_mask, col_bias,
      wqk, bqk, w_pair, b_pair, aff_pair)
    return adj_ag, out_dep, out_ag


# ----------------------------------------------------------------------------
# Plain-JAX glue: embeddings + BiLSTM encoder
# ----------------------------------------------------------------------------
# TODO(synk): BiLSTM recurrence kept in plain JAX (lax.scan); the sequential
# dependency at these tiny sizes is not a useful Pallas target.  Input-gate
# projection is hoisted out of the scan and both directions share one scan.
def bilstm_encode(x, params, hidden=50):
    B, T, _ = x.shape
    w_ih = jnp.stack([params["w_ih_f"], params["w_ih_b"]])   # (2, 4H, I)
    w_hh = jnp.stack([params["w_hh_f"], params["w_hh_b"]])   # (2, 4H, H)
    b_ih = jnp.stack([params["b_ih_f"], params["b_ih_b"]])   # (2, 4H)
    b_hh = jnp.stack([params["b_hh_f"], params["b_hh_b"]])   # (2, 4H)

    x_both = jnp.stack([x, x[:, ::-1, :]])                    # (2, B, T, I)
    x_proj = jnp.einsum('dbti,dgi->dbtg', x_both, w_ih) \
        + (b_ih + b_hh)[:, None, None, :]                     # (2, B, T, 4H)
    x_proj = jnp.transpose(x_proj, (2, 0, 1, 3))              # (T, 2, B, 4H)

    def step(carry, xp_t):
        h, c = carry                                          # (2, B, H)
        gates = xp_t + jnp.einsum('dbh,dgh->dbg', h, w_hh)
        i, f, g, o = jnp.split(gates, 4, axis=-1)             # PyTorch order
        i = jax.nn.sigmoid(i)
        f = jax.nn.sigmoid(f)
        g = jnp.tanh(g)
        o = jax.nn.sigmoid(o)
        c = f * c + i * g
        h = o * jnp.tanh(c)
        return (h, c), h

    h0 = jnp.zeros((2, B, hidden), jnp.float32)
    c0 = jnp.zeros((2, B, hidden), jnp.float32)
    _, hs = lax.scan(step, (h0, c0), x_proj)                  # (T, 2, B, H)
    fwd = jnp.transpose(hs[:, 0], (1, 0, 2))                  # (B, T, H)
    bwd = jnp.transpose(hs[:, 1], (1, 0, 2))[:, ::-1, :]
    return jnp.concatenate([fwd, bwd], axis=-1)               # (B, T, 2H)


# ----------------------------------------------------------------------------
# Full GCN forward
# ----------------------------------------------------------------------------
def gcn_forward(params, adj, tok, pos, post, lengths, n_layers, mem_dim=50):
    # embeddings:  (B, L, 300) + (B, L, 30) + (B, L, 30) -> (B, L, 360)
    word_embs = jnp.take(params["emb"], tok, axis=0)
    pos_embs = jnp.take(params["pos_emb"], pos, axis=0)
    post_embs = jnp.take(params["post_emb"], post, axis=0)
    embs = jnp.concatenate([word_embs, pos_embs, post_embs], axis=-1)
    # in_drop / rnn_drop: identity (eval)

    maxlen = int(max(lengths))
    embs = embs[:, :maxlen]
    adj = adj[:, :maxlen, :maxlen].astype(jnp.float32)
    tok_m = tok[:, :maxlen]

    gcn_inputs = bilstm_encode(embs, params["lstm"], hidden=50)   # (B, N, 100)
    _, _, d_model = gcn_inputs.shape

    # lane-pad feature dims AND the sequence dim (exact math in valid region,
    # lane-dense vregs / MXU operands / output stores; sliced back below).
    DP = _round_up(d_model, LANE)
    DMP = _round_up(mem_dim, LANE)
    assert DP == DMP, "stacked per-layer weights require padded Din == Dm"
    NP = _round_up(maxlen, LANE)

    x_p = _pad_axis(_pad_axis(gcn_inputs, NP, 1), DP, 2)          # (B, NP, DP)
    adj_p = _pad_axis(_pad_axis(adj, NP, 1), NP, 2)               # (B, NP, NP)

    valid = _pad_axis((tok_m != 0).astype(jnp.float32), NP, 1)    # (B, NP)
    key_bias = jnp.where(valid > 0, 0.0, NEG_INF)[:, None, :]     # (B, 1, NP)
    row_mask = valid[:, :, None]                                  # (B, NP, 1)
    col_bias = jnp.where(jnp.arange(NP) < maxlen,
                         0.0, NEG_INF)[None, :]                   # (1, NP)
    eye = jnp.eye(NP, dtype=jnp.float32)                          # (NP, NP)

    # fused q|k weights with 1/sqrt(d_model) folded into the q half
    scale = 1.0 / math.sqrt(d_model)
    wqk = jnp.concatenate([_pad2d(params["attn_wq_t"], DP, DP) * scale,
                           _pad2d(params["attn_wk_t"], DP, DP)], axis=1)
    bqk = jnp.concatenate([_pad_axis(params["attn_bq"], DP, 1) * scale,
                           _pad_axis(params["attn_bk"], DP, 1)], axis=1)

    # per-layer dep/ag weights packed block-diagonally (built once, trace time)
    w_pair = jnp.stack([_block_diag2(_pad2d(wd, DP, DMP), _pad2d(wa, DP, DMP))
                        for wd, wa in zip(params["W_t"], params["wl_t"])])
    b_pair = jnp.stack([jnp.concatenate([_pad_axis(bd, DMP, 1),
                                         _pad_axis(ba, DMP, 1)], axis=1)
                        for bd, ba in zip(params["W_b"], params["wl_b"])])
    aff_pair = _block_diag2(_pad2d(params["affine1"], DMP, DMP),
                            _pad2d(params["affine2"], DMP, DMP))

    adj_ag_p, out_dep_p, out_ag_p = fused_gcn(
        x_p, adj_p, eye, key_bias, row_mask, col_bias,
        wqk, bqk, w_pair, b_pair, aff_pair, n_layers)

    outputs_ag = out_ag_p[:, :maxlen, :mem_dim]
    outputs_dep = out_dep_p[:, :maxlen, :mem_dim]
    adj_ag = adj_ag_p[:, :maxlen, :maxlen]
    return outputs_ag, outputs_dep, adj_ag


# ----------------------------------------------------------------------------
# Deterministic parameter construction (logical / unpadded shapes)
# ----------------------------------------------------------------------------
def make_params(key, vocab=20, n_pos=10, n_post=10, mem_dim=50, n_layers=2):
    emb_dim, pos_dim, post_dim = 300, 30, 30
    lstm_in, hidden = emb_dim + pos_dim + post_dim, 50     # 360 -> 50x2
    d_model = 2 * mem_dim                                  # 100
    input_dim = 2 * hidden                                 # 100

    ks = list(jax.random.split(key, 32))
    nxt = lambda: ks.pop(0)
    rnd = lambda shape, scale=0.1: scale * jax.random.normal(
        nxt(), shape, dtype=jnp.float32)

    params = {
        "emb": rnd((vocab, emb_dim)),
        "pos_emb": rnd((n_pos, pos_dim)),
        "post_emb": rnd((n_post, post_dim)),
        "lstm": {
            "w_ih_f": rnd((4 * hidden, lstm_in)),
            "w_hh_f": rnd((4 * hidden, hidden)),
            "b_ih_f": rnd((4 * hidden,)),
            "b_hh_f": rnd((4 * hidden,)),
            "w_ih_b": rnd((4 * hidden, lstm_in)),
            "w_hh_b": rnd((4 * hidden, hidden)),
            "b_ih_b": rnd((4 * hidden,)),
            "b_hh_b": rnd((4 * hidden,)),
        },
        # MultiHeadAttention linears (pre-transposed: y = x @ W.T + b)
        "attn_wq_t": rnd((d_model, d_model)).T,
        "attn_bq": rnd((1, d_model)),
        "attn_wk_t": rnd((d_model, d_model)).T,
        "attn_bk": rnd((1, d_model)),
        "affine1": rnd((mem_dim, mem_dim)),
        "affine2": rnd((mem_dim, mem_dim)),
        "W_t": [], "W_b": [], "wl_t": [], "wl_b": [],
    }
    for layer in range(n_layers):
        din = input_dim if layer == 0 else mem_dim
        params["W_t"].append(rnd((mem_dim, din)).T)     # (Din, Dm)
        params["W_b"].append(rnd((1, mem_dim)))
        params["wl_t"].append(rnd((mem_dim, din)).T)
        params["wl_b"].append(rnd((1, mem_dim)))
    return params


# ----------------------------------------------------------------------------
if __name__ == "__main__":
    B, L = 2, 8
    n_layers = 2
    vocab, n_pos, n_post = 20, 10, 10

    key = jax.random.PRNGKey(0)
    kp, k_tok, k_pos, k_post, k_adj = jax.random.split(key, 5)

    params = make_params(kp, vocab=vocab, n_pos=n_pos, n_post=n_post,
                         mem_dim=50, n_layers=n_layers)

    # inputs (tok non-zero so src_mask / mask_ are all-ones; full lengths so
    # pack_padded_sequence semantics reduce to a plain BiLSTM)
    tok = jax.random.randint(k_tok, (B, L), 1, vocab, dtype=jnp.int32)
    pos = jax.random.randint(k_pos, (B, L), 0, n_pos, dtype=jnp.int32)
    post = jax.random.randint(k_post, (B, L), 0, n_post, dtype=jnp.int32)
    adj = (jax.random.uniform(k_adj, (B, L, L)) > 0.5).astype(jnp.float32)
    lengths = [L, L]

    outputs_ag, outputs_dep, adj_ag = gcn_forward(
        params, adj, tok, pos, post, lengths, n_layers, mem_dim=50)

    jax.block_until_ready((outputs_ag, outputs_dep, adj_ag))
    assert outputs_ag.shape == (B, L, 50)
    assert outputs_dep.shape == (B, L, 50)
    assert adj_ag.shape == (B, L, L)
    print("KERNEL_OK")
</pallas_src>

<mosaic_0001>
module attributes {stable_mosaic.version = 11 : i64} {
  func.func @fused_gcn_kernel(%arg0: i32, %arg1: memref<1x128x128xf32, #tpu.memory_space<vmem>>, %arg2: memref<1x128x128xf32, #tpu.memory_space<vmem>>, %arg3: memref<128x128xf32, #tpu.memory_space<vmem>>, %arg4: memref<1x1x128xf32, #tpu.memory_space<vmem>>, %arg5: memref<1x128x1xf32, #tpu.memory_space<vmem>>, %arg6: memref<1x128xf32, #tpu.memory_space<vmem>>, %arg7: memref<128x256xf32, #tpu.memory_space<vmem>>, %arg8: memref<1x256xf32, #tpu.memory_space<vmem>>, %arg9: memref<2x256x256xf32, #tpu.memory_space<vmem>>, %arg10: memref<2x1x256xf32, #tpu.memory_space<vmem>>, %arg11: memref<256x256xf32, #tpu.memory_space<vmem>>, %arg12: memref<1x128x128xf32, #tpu.memory_space<vmem>>, %arg13: memref<1x128x128xf32, #tpu.memory_space<vmem>>, %arg14: memref<1x128x128xf32, #tpu.memory_space<vmem>>) attributes {dimension_semantics = [#tpu.dimension_semantics<parallel>], iteration_bounds = array<i64: 2>, scalar_prefetch = 0 : i64, scratch_operands = 0 : i64, tpu.core_type = #tpu.core_type<tc>, window_params = [{transform_indices = @transform_0, window_bounds = array<i64: 1, 128, 128>}, {transform_indices = @transform_1, window_bounds = array<i64: 1, 128, 128>}, {pipeline_mode = #tpu.pipeline_mode<synchronous>, transform_indices = @transform_2, window_bounds = array<i64: 128, 128>}, {transform_indices = @transform_3, window_bounds = array<i64: 1, 1, 128>}, {transform_indices = @transform_4, window_bounds = array<i64: 1, 128, 1>}, {pipeline_mode = #tpu.pipeline_mode<synchronous>, transform_indices = @transform_5, window_bounds = array<i64: 1, 128>}, {pipeline_mode = #tpu.pipeline_mode<synchronous>, transform_indices = @transform_6, window_bounds = array<i64: 128, 256>}, {pipeline_mode = #tpu.pipeline_mode<synchronous>, transform_indices = @transform_7, window_bounds = array<i64: 1, 256>}, {pipeline_mode = #tpu.pipeline_mode<synchronous>, transform_indices = @transform_8, window_bounds = array<i64: 2, 256, 256>}, {pipeline_mode = #tpu.pipeline_mode<synchronous>, transform_indices = @transform_9, window_bounds = array<i64: 2, 1, 256>}, {pipeline_mode = #tpu.pipeline_mode<synchronous>, transform_indices = @transform_10, window_bounds = array<i64: 256, 256>}, {transform_indices = @transform_11, window_bounds = array<i64: 1, 128, 128>}, {transform_indices = @transform_12, window_bounds = array<i64: 1, 128, 128>}, {transform_indices = @transform_13, window_bounds = array<i64: 1, 128, 128>}]} {
    %c0 = arith.constant 0 : index
    %c0_0 = arith.constant 0 : index
    %c0_1 = arith.constant 0 : index
    %0 = vector.load %arg1[%c0, %c0_0, %c0_1] : memref<1x128x128xf32, #tpu.memory_space<vmem>>, vector<1x128x128xf32>
    %1 = vector.shape_cast %0 : vector<1x128x128xf32> to vector<128x128xf32>
    %2 = arith.truncf %1 : vector<128x128xf32> to vector<128x128xbf16>
    %c0_2 = arith.constant 0 : index
    %c0_3 = arith.constant 0 : index
    %3 = vector.load %arg7[%c0_2, %c0_3] : memref<128x256xf32, #tpu.memory_space<vmem>>, vector<128x256xf32>
    %4 = arith.truncf %3 : vector<128x256xf32> to vector<128x256xbf16>
    %cst = arith.constant dense<0.000000e+00> : vector<128x256xf32>
    %5 = tpu.matmul %2, %4, %cst {dimension_numbers = #tpu.dot_dimension_numbers<[1], [0], [0], [1], [0, 0, 1, 1], [], []>} : vector<128x128xbf16>, vector<128x256xbf16>, vector<128x256xf32> -> vector<128x256xf32>
    %c0_4 = arith.constant 0 : index
    %c0_5 = arith.constant 0 : index
    %6 = vector.load %arg8[%c0_4, %c0_5] : memref<1x256xf32, #tpu.memory_space<vmem>>, vector<1x256xf32>
    %7 = vector.broadcast %6 : vector<1x256xf32> to vector<128x256xf32>
    %8 = arith.addf %5, %7 : vector<128x256xf32>
    %9 = vector.extract_strided_slice %8 {offsets = [0, 0], sizes = [128, 128], strides = [1, 1]} : vector<128x256xf32> to vector<128x128xf32>
    %10 = arith.truncf %9 : vector<128x128xf32> to vector<128x128xbf16>
    %11 = vector.extract_strided_slice %8 {offsets = [0, 128], sizes = [128, 128], strides = [1, 1]} : vector<128x256xf32> to vector<128x128xf32>
    %12 = arith.truncf %11 : vector<128x128xf32> to vector<128x128xbf16>
    "tpu.trace_start"() <{level = 10 : i32, message = "nd,md->nm"}> : () -> ()
    %cst_6 = arith.constant dense<0.000000e+00> : vector<128x128xf32>
    %13 = tpu.matmul %10, %12, %cst_6 {dimension_numbers = #tpu.dot_dimension_numbers<[1], [1], [0], [0], [0, 0, 1, 0], [], []>} : vector<128x128xbf16>, vector<128x128xbf16>, vector<128x128xf32> -> vector<128x128xf32>
    "tpu.trace_stop"() : () -> ()
    %c0_7 = arith.constant 0 : index
    %c0_8 = arith.constant 0 : index
    %c0_9 = arith.constant 0 : index
    %14 = vector.load %arg4[%c0_7, %c0_8, %c0_9] : memref<1x1x128xf32, #tpu.memory_space<vmem>>, vector<1x1x128xf32>
    %15 = vector.shape_cast %14 : vector<1x1x128xf32> to vector<1x128xf32>
    %16 = vector.broadcast %15 : vector<1x128xf32> to vector<128x128xf32>
    %17 = arith.addf %13, %16 : vector<128x128xf32>
    %cst_10 = arith.constant dense<0xFF800000> : vector<128xf32>
    %18 = vector.multi_reduction <maximumf>, %17, %cst_10 [1] : vector<128x128xf32> to vector<128xf32>
    %19 = vector.shape_cast %18 : vector<128xf32> to vector<128x1xf32>
    %20 = vector.broadcast %19 : vector<128x1xf32> to vector<128x128xf32>
    %21 = arith.subf %17, %20 : vector<128x128xf32>
    %22 = math.exp %21 : vector<128x128xf32>
    %cst_11 = arith.constant dense<0.000000e+00> : vector<128xf32>
    %23 = vector.multi_reduction <add>, %22, %cst_11 [1] : vector<128x128xf32> to vector<128xf32>
    %24 = vector.shape_cast %23 : vector<128xf32> to vector<128x1xf32>
    %25 = tpu.reciprocal %24 {approx = true} : vector<128x1xf32> -> vector<128x1xf32>
    %26 = vector.broadcast %25 : vector<128x1xf32> to vector<128x128xf32>
    %27 = arith.mulf %22, %26 : vector<128x128xf32>
    %c0_12 = arith.constant 0 : index
    %c0_13 = arith.constant 0 : index
    %28 = vector.load %arg3[%c0_12, %c0_13] : memref<128x128xf32, #tpu.memory_space<vmem>>, vector<128x128xf32>
    %cst_14 = arith.constant 0.000000e+00 : f32
    %29 = vector.broadcast %cst_14 : f32 to vector<128x128xf32>
    %30 = arith.cmpf ogt, %28, %29 : vector<128x128xf32>
    %cst_15 = arith.constant 1.000000e+00 : f32
    %31 = vector.broadcast %cst_15 : f32 to vector<128x128xf32>
    %32 = arith.select %30, %31, %27 : vector<128x128xi1>, vector<128x128xf32>
    %c0_16 = arith.constant 0 : index
    %c0_17 = arith.constant 0 : index
    %c0_18 = arith.constant 0 : index
    %33 = vector.load %arg5[%c0_16, %c0_17, %c0_18] : memref<1x128x1xf32, #tpu.memory_space<vmem>>, vector<1x128x1xf32>
    %34 = vector.shape_cast %33 : vector<1x128x1xf32> to vector<128x1xf32>
    %35 = vector.broadcast %34 : vector<128x1xf32> to vector<128x128xf32>
    %36 = arith.mulf %32, %35 : vector<128x128xf32>
    %c0_19 = arith.constant 0 : index
    %c0_20 = arith.constant 0 : index
    %c0_21 = arith.constant 0 : index
    %37 = vector.load %arg12[%c0_19, %c0_20, %c0_21] : memref<1x128x128xf32, #tpu.memory_space<vmem>>, vector<1x128x128xf32>
    %38 = vector.shape_cast %37 : vector<1x128x128xf32> to vector<128x128xf32>
    %39 = vector.shape_cast %36 : vector<128x128xf32> to vector<1x128x128xf32>
    tpu.vector_store %arg12[%c0_19, %c0_20, %c0_21], %39 {strides = array<i32>} : memref<1x128x128xf32, #tpu.memory_space<vmem>>, vector<1x128x128xf32>,
    %c0_22 = arith.constant 0 : index
    %c0_23 = arith.constant 0 : index
    %c0_24 = arith.constant 0 : index
    %40 = vector.load %arg2[%c0_22, %c0_23, %c0_24] : memref<1x128x128xf32, #tpu.memory_space<vmem>>, vector<1x128x128xf32>
    %41 = vector.shape_cast %40 : vector<1x128x128xf32> to vector<128x128xf32>
    %cst_25 = arith.constant dense<0.000000e+00> : vector<128xf32>
    %42 = vector.multi_reduction <add>, %41, %cst_25 [1] : vector<128x128xf32> to vector<128xf32>
    %43 = vector.shape_cast %42 : vector<128xf32> to vector<128x1xf32>
    %cst_26 = arith.constant 1.000000e+00 : f32
    %44 = vector.broadcast %cst_26 : f32 to vector<128x1xf32>
    %45 = arith.addf %43, %44 : vector<128x1xf32>
    %46 = tpu.reciprocal %45 {approx = true} : vector<128x1xf32> -> vector<128x1xf32>
    %cst_27 = arith.constant dense<0.000000e+00> : vector<128xf32>
    %47 = vector.multi_reduction <add>, %36, %cst_27 [1] : vector<128x128xf32> to vector<128xf32>
    %48 = vector.shape_cast %47 : vector<128xf32> to vector<128x1xf32>
    %cst_28 = arith.constant 1.000000e+00 : f32
    %49 = vector.broadcast %cst_28 : f32 to vector<128x1xf32>
    %50 = arith.addf %48, %49 : vector<128x1xf32>
    %51 = tpu.reciprocal %50 {approx = true} : vector<128x1xf32> -> vector<128x1xf32>
    %52 = arith.truncf %41 : vector<128x128xf32> to vector<128x128xbf16>
    %53 = arith.truncf %36 : vector<128x128xf32> to vector<128x128xbf16>
    %c0_29 = arith.constant 0 : index
    %c0_30 = arith.constant 0 : index
    %54 = vector.load %arg6[%c0_29, %c0_30] : memref<1x128xf32, #tpu.memory_space<vmem>>, vector<1x128xf32>
    %c0_31 = arith.constant 0 : index
    %c0_32 = arith.constant 0 : index
    %55 = vector.load %arg11[%c0_31, %c0_32] : memref<256x256xf32, #tpu.memory_space<vmem>>, vector<256x256xf32>
    %56 = arith.truncf %55 : vector<256x256xf32> to vector<256x256xbf16>
    %c0_33 = arith.constant 0 : index
    %c0_34 = arith.constant 0 : index
    %c0_35 = arith.constant 0 : index
    %57 = vector.load %arg9[%c0_33, %c0_34, %c0_35] : memref<2x256x256xf32, #tpu.memory_space<vmem>>, vector<1x256x256xf32>
    %58 = vector.shape_cast %57 : vector<1x256x256xf32> to vector<256x256xf32>
    %c0_36 = arith.constant 0 : index
    %c0_37 = arith.constant 0 : index
    %c0_38 = arith.constant 0 : index
    %59 = vector.load %arg10[%c0_36, %c0_37, %c0_38] : memref<2x1x256xf32, #tpu.memory_space<vmem>>, vector<1x1x256xf32>
    %60 = vector.shape_cast %59 : vector<1x1x256xf32> to vector<1x256xf32>
    %61 = arith.truncf %1 : vector<128x128xf32> to vector<128x128xbf16>
    %cst_39 = arith.constant dense<0.000000e+00> : vector<128x128xf32>
    %62 = tpu.matmul %52, %61, %cst_39 {dimension_numbers = #tpu.dot_dimension_numbers<[1], [0], [0], [1], [0, 0, 1, 1], [], []>} : vector<128x128xbf16>, vector<128x128xbf16>, vector<128x128xf32> -> vector<128x128xf32>
    %63 = arith.truncf %1 : vector<128x128xf32> to vector<128x128xbf16>
    %cst_40 = arith.constant dense<0.000000e+00> : vector<128x128xf32>
    %64 = tpu.matmul %53, %63, %cst_40 {dimension_numbers = #tpu.dot_dimension_numbers<[1], [0], [0], [1], [0, 0, 1, 1], [], []>} : vector<128x128xbf16>, vector<128x128xbf16>, vector<128x128xf32> -> vector<128x128xf32>
    %65 = tpu.concatenate %62, %64 in 1 : vector<128x128xf32>, vector<128x128xf32> -> vector<128x256xf32>
    %66 = arith.truncf %65 : vector<128x256xf32> to vector<128x256xbf16>
    %67 = arith.truncf %58 : vector<256x256xf32> to vector<256x256xbf16>
    %cst_41 = arith.constant dense<0.000000e+00> : vector<128x256xf32>
    %68 = tpu.matmul %66, %67, %cst_41 {dimension_numbers = #tpu.dot_dimension_numbers<[1], [0], [0], [1], [0, 0, 1, 1], [], []>} : vector<128x256xbf16>, vector<256x256xbf16>, vector<128x256xf32> -> vector<128x256xf32>
    %69 = vector.broadcast %60 : vector<1x256xf32> to vector<128x256xf32>
    %70 = arith.addf %68, %69 : vector<128x256xf32>
    %71 = vector.extract_strided_slice %70 {offsets = [0, 0], sizes = [128, 128], strides = [1, 1]} : vector<128x256xf32> to vector<128x128xf32>
    %72 = vector.extract_strided_slice %70 {offsets = [0, 128], sizes = [128, 128], strides = [1, 1]} : vector<128x256xf32> to vector<128x128xf32>
    %73 = vector.broadcast %46 : vector<128x1xf32> to vector<128x128xf32>
    %74 = arith.mulf %71, %73 : vector<128x128xf32>
    %cst_42 = arith.constant 0.000000e+00 : f32
    %75 = vector.broadcast %cst_42 : f32 to vector<128x128xf32>
    %76 = arith.maximumf %74, %75 : vector<128x128xf32>
    %77 = vector.broadcast %51 : vector<128x1xf32> to vector<128x128xf32>
    %78 = arith.mulf %72, %77 : vector<128x128xf32>
    %cst_43 = arith.constant 0.000000e+00 : f32
    %79 = vector.broadcast %cst_43 : f32 to vector<128x128xf32>
    %80 = arith.maximumf %78, %79 : vector<128x128xf32>
    %81 = arith.truncf %76 : vector<128x128xf32> to vector<128x128xbf16>
    %82 = arith.truncf %80 : vector<128x128xf32> to vector<128x128xbf16>
    %83 = tpu.concatenate %81, %82 in 1 : vector<128x128xbf16>, vector<128x128xbf16> -> vector<128x256xbf16>
    %cst_44 = arith.constant dense<0.000000e+00> : vector<128x256xf32>
    %84 = tpu.matmul %83, %56, %cst_44 {dimension_numbers = #tpu.dot_dimension_numbers<[1], [0], [0], [1], [0, 0, 1, 1], [], []>} : vector<128x256xbf16>, vector<256x256xbf16>, vector<128x256xf32> -> vector<128x256xf32>
    %85 = vector.extract_strided_slice %84 {offsets = [0, 0], sizes = [128, 128], strides = [1, 1]} : vector<128x256xf32> to vector<128x128xf32>
    %86 = arith.truncf %85 : vector<128x128xf32> to vector<128x128xbf16>
    %87 = vector.extract_strided_slice %84 {offsets = [0, 128], sizes = [128, 128], strides = [1, 1]} : vector<128x256xf32> to vector<128x128xf32>
    %88 = arith.truncf %87 : vector<128x128xf32> to vector<128x128xbf16>
    "tpu.trace_start"() <{level = 10 : i32, message = "nd,md->nm"}> : () -> ()
    %cst_45 = arith.constant dense<0.000000e+00> : vector<128x128xf32>
    %89 = tpu.matmul %86, %82, %cst_45 {dimension_numbers = #tpu.dot_dimension_numbers<[1], [1], [0], [0], [0, 0, 1, 0], [], []>} : vector<128x128xbf16>, vector<128x128xbf16>, vector<128x128xf32> -> vector<128x128xf32>
    "tpu.trace_stop"() : () -> ()
    %90 = vector.broadcast %54 : vector<1x128xf32> to vector<128x128xf32>
    %91 = arith.addf %89, %90 : vector<128x128xf32>
    "tpu.trace_start"() <{level = 10 : i32, message = "nd,md->nm"}> : () -> ()
    %cst_46 = arith.constant dense<0.000000e+00> : vector<128x128xf32>
    %92 = tpu.matmul %88, %81, %cst_46 {dimension_numbers = #tpu.dot_dimension_numbers<[1], [1], [0], [0], [0, 0, 1, 0], [], []>} : vector<128x128xbf16>, vector<128x128xbf16>, vector<128x128xf32> -> vector<128x128xf32>
    "tpu.trace_stop"() : () -> ()
    %93 = vector.broadcast %54 : vector<1x128xf32> to vector<128x128xf32>
    %94 = arith.addf %92, %93 : vector<128x128xf32>
    %cst_47 = arith.constant dense<0xFF800000> : vector<128xf32>
    %95 = vector.multi_reduction <maximumf>, %91, %cst_47 [1] : vector<128x128xf32> to vector<128xf32>
    %96 = vector.shape_cast %95 : vector<128xf32> to vector<128x1xf32>
    %97 = vector.broadcast %96 : vector<128x1xf32> to vector<128x128xf32>
    %98 = arith.subf %91, %97 : vector<128x128xf32>
    %99 = math.exp %98 : vector<128x128xf32>
    %cst_48 = arith.constant dense<0.000000e+00> : vector<128xf32>
    %100 = vector.multi_reduction <add>, %99, %cst_48 [1] : vector<128x128xf32> to vector<128xf32>
    %101 = vector.shape_cast %100 : vector<128xf32> to vector<128x1xf32>
    %102 = tpu.reciprocal %101 {approx = true} : vector<128x1xf32> -> vector<128x1xf32>
    %103 = vector.broadcast %102 : vector<128x1xf32> to vector<128x128xf32>
    %104 = arith.mulf %99, %103 : vector<128x128xf32>
    %105 = arith.truncf %104 : vector<128x128xf32> to vector<128x128xbf16>
    %cst_49 = arith.constant dense<0xFF800000> : vector<128xf32>
    %106 = vector.multi_reduction <maximumf>, %94, %cst_49 [1] : vector<128x128xf32> to vector<128xf32>
    %107 = vector.shape_cast %106 : vector<128xf32> to vector<128x1xf32>
    %108 = vector.broadcast %107 : vector<128x1xf32> to vector<128x128xf32>
    %109 = arith.subf %94, %108 : vector<128x128xf32>
    %110 = math.exp %109 : vector<128x128xf32>
    %cst_50 = arith.constant dense<0.000000e+00> : vector<128xf32>
    %111 = vector.multi_reduction <add>, %110, %cst_50 [1] : vector<128x128xf32> to vector<128xf32>
    %112 = vector.shape_cast %111 : vector<128xf32> to vector<128x1xf32>
    %113 = tpu.reciprocal %112 {approx = true} : vector<128x1xf32> -> vector<128x1xf32>
    %114 = vector.broadcast %113 : vector<128x1xf32> to vector<128x128xf32>
    %115 = arith.mulf %110, %114 : vector<128x128xf32>
    %116 = arith.truncf %115 : vector<128x128xf32> to vector<128x128xbf16>
    %cst_51 = arith.constant dense<0.000000e+00> : vector<128x128xf32>
    %117 = tpu.matmul %105, %82, %cst_51 {dimension_numbers = #tpu.dot_dimension_numbers<[1], [0], [0], [1], [0, 0, 1, 1], [], []>} : vector<128x128xbf16>, vector<128x128xbf16>, vector<128x128xf32> -> vector<128x128xf32>
    %cst_52 = arith.constant dense<0.000000e+00> : vector<128x128xf32>
    %118 = tpu.matmul %116, %81, %cst_52 {dimension_numbers = #tpu.dot_dimension_numbers<[1], [0], [0], [1], [0, 0, 1, 1], [], []>} : vector<128x128xbf16>, vector<128x128xbf16>, vector<128x128xf32> -> vector<128x128xf32>
    %c1 = arith.constant 1 : index
    %c0_53 = arith.constant 0 : index
    %c0_54 = arith.constant 0 : index
    %119 = vector.load %arg9[%c1, %c0_53, %c0_54] : memref<2x256x256xf32, #tpu.memory_space<vmem>>, vector<1x256x256xf32>
    %120 = vector.shape_cast %119 : vector<1x256x256xf32> to vector<256x256xf32>
    %c1_55 = arith.constant 1 : index
    %c0_56 = arith.constant 0 : index
    %c0_57 = arith.constant 0 : index
    %121 = vector.load %arg10[%c1_55, %c0_56, %c0_57] : memref<2x1x256xf32, #tpu.memory_space<vmem>>, vector<1x1x256xf32>
    %122 = vector.shape_cast %121 : vector<1x1x256xf32> to vector<1x256xf32>
    %123 = arith.truncf %117 : vector<128x128xf32> to vector<128x128xbf16>
    %cst_58 = arith.constant dense<0.000000e+00> : vector<128x128xf32>
    %124 = tpu.matmul %52, %123, %cst_58 {dimension_numbers = #tpu.dot_dimension_numbers<[1], [0], [0], [1], [0, 0, 1, 1], [], []>} : vector<128x128xbf16>, vector<128x128xbf16>, vector<128x128xf32> -> vector<128x128xf32>
    %125 = arith.truncf %118 : vector<128x128xf32> to vector<128x128xbf16>
    %cst_59 = arith.constant dense<0.000000e+00> : vector<128x128xf32>
    %126 = tpu.matmul %53, %125, %cst_59 {dimension_numbers = #tpu.dot_dimension_numbers<[1], [0], [0], [1], [0, 0, 1, 1], [], []>} : vector<128x128xbf16>, vector<128x128xbf16>, vector<128x128xf32> -> vector<128x128xf32>
    %127 = tpu.concatenate %124, %126 in 1 : vector<128x128xf32>, vector<128x128xf32> -> vector<128x256xf32>
    %128 = arith.truncf %127 : vector<128x256xf32> to vector<128x256xbf16>
    %129 = arith.truncf %120 : vector<256x256xf32> to vector<256x256xbf16>
    %cst_60 = arith.constant dense<0.000000e+00> : vector<128x256xf32>
    %130 = tpu.matmul %128, %129, %cst_60 {dimension_numbers = #tpu.dot_dimension_numbers<[1], [0], [0], [1], [0, 0, 1, 1], [], []>} : vector<128x256xbf16>, vector<256x256xbf16>, vector<128x256xf32> -> vector<128x256xf32>
    %131 = vector.broadcast %122 : vector<1x256xf32> to vector<128x256xf32>
    %132 = arith.addf %130, %131 : vector<128x256xf32>
    %133 = vector.extract_strided_slice %132 {offsets = [0, 0], sizes = [128, 128], strides = [1, 1]} : vector<128x256xf32> to vector<128x128xf32>
    %134 = vector.extract_strided_slice %132 {offsets = [0, 128], sizes = [128, 128], strides = [1, 1]} : vector<128x256xf32> to vector<128x128xf32>
    %135 = vector.broadcast %46 : vector<128x1xf32> to vector<128x128xf32>
    %136 = arith.mulf %133, %135 : vector<128x128xf32>
    %cst_61 = arith.constant 0.000000e+00 : f32
    %137 = vector.broadcast %cst_61 : f32 to vector<128x128xf32>
    %138 = arith.maximumf %136, %137 : vector<128x128xf32>
    %139 = vector.broadcast %51 : vector<128x1xf32> to vector<128x128xf32>
    %140 = arith.mulf %134, %139 : vector<128x128xf32>
    %cst_62 = arith.constant 0.000000e+00 : f32
    %141 = vector.broadcast %cst_62 : f32 to vector<128x128xf32>
    %142 = arith.maximumf %140, %141 : vector<128x128xf32>
    %143 = arith.truncf %138 : vector<128x128xf32> to vector<128x128xbf16>
    %144 = arith.truncf %142 : vector<128x128xf32> to vector<128x128xbf16>
    %145 = tpu.concatenate %143, %144 in 1 : vector<128x128xbf16>, vector<128x128xbf16> -> vector<128x256xbf16>
    %cst_63 = arith.constant dense<0.000000e+00> : vector<128x256xf32>
    %146 = tpu.matmul %145, %56, %cst_63 {dimension_numbers = #tpu.dot_dimension_numbers<[1], [0], [0], [1], [0, 0, 1, 1], [], []>} : vector<128x256xbf16>, vector<256x256xbf16>, vector<128x256xf32> -> vector<128x256xf32>
    %147 = vector.extract_strided_slice %146 {offsets = [0, 0], sizes = [128, 128], strides = [1, 1]} : vector<128x256xf32> to vector<128x128xf32>
    %148 = arith.truncf %147 : vector<128x128xf32> to vector<128x128xbf16>
    %149 = vector.extract_strided_slice %146 {offsets = [0, 128], sizes = [128, 128], strides = [1, 1]} : vector<128x256xf32> to vector<128x128xf32>
    %150 = arith.truncf %149 : vector<128x128xf32> to vector<128x128xbf16>
    "tpu.trace_start"() <{level = 10 : i32, message = "nd,md->nm"}> : () -> ()
    %cst_64 = arith.constant dense<0.000000e+00> : vector<128x128xf32>
    %151 = tpu.matmul %148, %144, %cst_64 {dimension_numbers = #tpu.dot_dimension_numbers<[1], [1], [0], [0], [0, 0, 1, 0], [], []>} : vector<128x128xbf16>, vector<128x128xbf16>, vector<128x128xf32> -> vector<128x128xf32>
    "tpu.trace_stop"() : () -> ()
    %152 = vector.broadcast %54 : vector<1x128xf32> to vector<128x128xf32>
    %153 = arith.addf %151, %152 : vector<128x128xf32>
    "tpu.trace_start"() <{level = 10 : i32, message = "nd,md->nm"}> : () -> ()
    %cst_65 = arith.constant dense<0.000000e+00> : vector<128x128xf32>
    %154 = tpu.matmul %150, %143, %cst_65 {dimension_numbers = #tpu.dot_dimension_numbers<[1], [1], [0], [0], [0, 0, 1, 0], [], []>} : vector<128x128xbf16>, vector<128x128xbf16>, vector<128x128xf32> -> vector<128x128xf32>
    "tpu.trace_stop"() : () -> ()
    %155 = vector.broadcast %54 : vector<1x128xf32> to vector<128x128xf32>
    %156 = arith.addf %154, %155 : vector<128x128xf32>
    %cst_66 = arith.constant dense<0xFF800000> : vector<128xf32>
    %157 = vector.multi_reduction <maximumf>, %153, %cst_66 [1] : vector<128x128xf32> to vector<128xf32>
    %158 = vector.shape_cast %157 : vector<128xf32> to vector<128x1xf32>
    %159 = vector.broadcast %158 : vector<128x1xf32> to vector<128x128xf32>
    %160 = arith.subf %153, %159 : vector<128x128xf32>
    %161 = math.exp %160 : vector<128x128xf32>
    %cst_67 = arith.constant dense<0.000000e+00> : vector<128xf32>
    %162 = vector.multi_reduction <add>, %161, %cst_67 [1] : vector<128x128xf32> to vector<128xf32>
    %163 = vector.shape_cast %162 : vector<128xf32> to vector<128x1xf32>
    %164 = tpu.reciprocal %163 {approx = true} : vector<128x1xf32> -> vector<128x1xf32>
    %165 = vector.broadcast %164 : vector<128x1xf32> to vector<128x128xf32>
    %166 = arith.mulf %161, %165 : vector<128x128xf32>
    %167 = arith.truncf %166 : vector<128x128xf32> to vector<128x128xbf16>
    %cst_68 = arith.constant dense<0xFF800000> : vector<128xf32>
    %168 = vector.multi_reduction <maximumf>, %156, %cst_68 [1] : vector<128x128xf32> to vector<128xf32>
    %169 = vector.shape_cast %168 : vector<128xf32> to vector<128x1xf32>
    %170 = vector.broadcast %169 : vector<128x1xf32> to vector<128x128xf32>
    %171 = arith.subf %156, %170 : vector<128x128xf32>
    %172 = math.exp %171 : vector<128x128xf32>
    %cst_69 = arith.constant dense<0.000000e+00> : vector<128xf32>
    %173 = vector.multi_reduction <add>, %172, %cst_69 [1] : vector<128x128xf32> to vector<128xf32>
    %174 = vector.shape_cast %173 : vector<128xf32> to vector<128x1xf32>
    %175 = tpu.reciprocal %174 {approx = true} : vector<128x1xf32> -> vector<128x1xf32>
    %176 = vector.broadcast %175 : vector<128x1xf32> to vector<128x128xf32>
    %177 = arith.mulf %172, %176 : vector<128x128xf32>
    %178 = arith.truncf %177 : vector<128x128xf32> to vector<128x128xbf16>
    %cst_70 = arith.constant dense<0.000000e+00> : vector<128x128xf32>
    %179 = tpu.matmul %167, %144, %cst_70 {dimension_numbers = #tpu.dot_dimension_numbers<[1], [0], [0], [1], [0, 0, 1, 1], [], []>} : vector<128x128xbf16>, vector<128x128xbf16>, vector<128x128xf32> -> vector<128x128xf32>
    %cst_71 = arith.constant dense<0.000000e+00> : vector<128x128xf32>
    %180 = tpu.matmul %178, %143, %cst_71 {dimension_numbers = #tpu.dot_dimension_numbers<[1], [0], [0], [1], [0, 0, 1, 1], [], []>} : vector<128x128xbf16>, vector<128x128xbf16>, vector<128x128xf32> -> vector<128x128xf32>
    %c0_72 = arith.constant 0 : index
    %c0_73 = arith.constant 0 : index
    %c0_74 = arith.constant 0 : index
    %181 = vector.load %arg13[%c0_72, %c0_73, %c0_74] : memref<1x128x128xf32, #tpu.memory_space<vmem>>, vector<1x128x128xf32>
    %182 = vector.shape_cast %181 : vector<1x128x128xf32> to vector<128x128xf32>
    %183 = vector.shape_cast %179 : vector<128x128xf32> to vector<1x128x128xf32>
    tpu.vector_store %arg13[%c0_72, %c0_73, %c0_74], %183 {strides = array<i32>} : memref<1x128x128xf32, #tpu.memory_space<vmem>>, vector<1x128x128xf32>,
    %c0_75 = arith.constant 0 : index
    %c0_76 = arith.constant 0 : index
    %c0_77 = arith.constant 0 : index
    %184 = vector.load %arg14[%c0_75, %c0_76, %c0_77] : memref<1x128x128xf32, #tpu.memory_space<vmem>>, vector<1x128x128xf32>
    %185 = vector.shape_cast %184 : vector<1x128x128xf32> to vector<128x128xf32>
    %186 = vector.shape_cast %180 : vector<128x128xf32> to vector<1x128x128xf32>
    tpu.vector_store %arg14[%c0_75, %c0_76, %c0_77], %186 {strides = array<i32>} : memref<1x128x128xf32, #tpu.memory_space<vmem>>, vector<1x128x128xf32>,
    return
  }
  func.func @transform_0(%arg0: i32) -> (i32, i32, i32) {
    %c0_i32 = arith.constant 0 : i32
    %c0_i32_0 = arith.constant 0 : i32
    %c0_i32_1 = arith.constant 0 : i32
    return %arg0, %c0_i32, %c0_i32_0 : i32, i32, i32
  }
  func.func @transform_1(%arg0: i32) -> (i32, i32, i32) {
    %c0_i32 = arith.constant 0 : i32
    %c0_i32_0 = arith.constant 0 : i32
    %c0_i32_1 = arith.constant 0 : i32
    return %arg0, %c0_i32, %c0_i32_0 : i32, i32, i32
  }
  func.func @transform_2(%arg0: i32) -> (i32, i32) {
    %c0_i32 = arith.constant 0 : i32
    %c0_i32_0 = arith.constant 0 : i32
    %c0_i32_1 = arith.constant 0 : i32
    return %c0_i32, %c0_i32_0 : i32, i32
  }
  func.func @transform_3(%arg0: i32) -> (i32, i32, i32) {
    %c0_i32 = arith.constant 0 : i32
    %c0_i32_0 = arith.constant 0 : i32
    %c0_i32_1 = arith.constant 0 : i32
    return %arg0, %c0_i32, %c0_i32_0 : i32, i32, i32
  }
  func.func @transform_4(%arg0: i32) -> (i32, i32, i32) {
    %c0_i32 = arith.constant 0 : i32
    %c0_i32_0 = arith.constant 0 : i32
    %c0_i32_1 = arith.constant 0 : i32
    return %arg0, %c0_i32, %c0_i32_0 : i32, i32, i32
  }
  func.func @transform_5(%arg0: i32) -> (i32, i32) {
    %c0_i32 = arith.constant 0 : i32
    %c0_i32_0 = arith.constant 0 : i32
    %c0_i32_1 = arith.constant 0 : i32
    return %c0_i32, %c0_i32_0 : i32, i32
  }
  func.func @transform_6(%arg0: i32) -> (i32, i32) {
    %c0_i32 = arith.constant 0 : i32
    %c0_i32_0 = arith.constant 0 : i32
    %c0_i32_1 = arith.constant 0 : i32
    return %c0_i32, %c0_i32_0 : i32, i32
  }
  func.func @transform_7(%arg0: i32) -> (i32, i32) {
    %c0_i32 = arith.constant 0 : i32
    %c0_i32_0 = arith.constant 0 : i32
    %c0_i32_1 = arith.constant 0 : i32
    return %c0_i32, %c0_i32_0 : i32, i32
  }
  func.func @transform_8(%arg0: i32) -> (i32, i32, i32) {
    %c0_i32 = arith.constant 0 : i32
    %c0_i32_0 = arith.constant 0 : i32
    %c0_i32_1 = arith.constant 0 : i32
    %c0_i32_2 = arith.constant 0 : i32
    return %c0_i32, %c0_i32_0, %c0_i32_1 : i32, i32, i32
  }
  func.func @transform_9(%arg0: i32) -> (i32, i32, i32) {
    %c0_i32 = arith.constant 0 : i32
    %c0_i32_0 = arith.constant 0 : i32
    %c0_i32_1 = arith.constant 0 : i32
    %c0_i32_2 = arith.constant 0 : i32
    return %c0_i32, %c0_i32_0, %c0_i32_1 : i32, i32, i32
  }
  func.func @transform_10(%arg0: i32) -> (i32, i32) {
    %c0_i32 = arith.constant 0 : i32
    %c0_i32_0 = arith.constant 0 : i32
    %c0_i32_1 = arith.constant 0 : i32
    return %c0_i32, %c0_i32_0 : i32, i32
  }
  func.func @transform_11(%arg0: i32) -> (i32, i32, i32) {
    %c0_i32 = arith.constant 0 : i32
    %c0_i32_0 = arith.constant 0 : i32
    %c0_i32_1 = arith.constant 0 : i32
    return %arg0, %c0_i32, %c0_i32_0 : i32, i32, i32
  }
  func.func @transform_12(%arg0: i32) -> (i32, i32, i32) {
    %c0_i32 = arith.constant 0 : i32
    %c0_i32_0 = arith.constant 0 : i32
    %c0_i32_1 = arith.constant 0 : i32
    return %arg0, %c0_i32, %c0_i32_0 : i32, i32, i32
  }
  func.func @transform_13(%arg0: i32) -> (i32, i32, i32) {
    %c0_i32 = arith.constant 0 : i32
    %c0_i32_0 = arith.constant 0 : i32
    %c0_i32_1 = arith.constant 0 : i32
    return %arg0, %c0_i32, %c0_i32_0 : i32, i32, i32
  }
}

</mosaic_0001>

<llo_original>
// kernel: tpu_custom_call.1
$region0: #{tpu_custom_call.1}
  #allocation0 [shape = 'u32[]', space=smem, size = 0x4, offset = 0x4, fixed_abs, tag = 'smem constant byte address 0x4 - core index']
  #allocation1 [shape = 'u32[144,128]{1,0:T(1,128)}', space=vmem, size = 0x12000, scoped, tag = 'internal scratch']
  %s0 = inlined_call_operand.vmem [shape: f32[2,128,128], index: 0, kind: input, shape index: {}]
  %s1 = inlined_call_operand.hbm [shape: f32[2,128,128], index: 1, kind: input, shape index: {}]
  %s2 = inlined_call_operand.hbm [shape: f32[128,128], index: 2, kind: input, shape index: {}]
  %s3 = inlined_call_operand.hbm [shape: f32[2,1,128], index: 3, kind: input, shape index: {}]
  %s4 = inlined_call_operand.vmem [shape: f32[2,128,1], index: 4, kind: input, shape index: {}]
  %s5 = inlined_call_operand.vmem [shape: f32[1,128], index: 5, kind: input, shape index: {}]
  %s6 = inlined_call_operand.hbm [shape: f32[128,256], index: 6, kind: input, shape index: {}]
  %s7 = inlined_call_operand.vmem [shape: f32[1,256], index: 7, kind: input, shape index: {}]
  %s8 = inlined_call_operand.hbm [shape: f32[2,256,256], index: 8, kind: input, shape index: {}]
  %s9 = inlined_call_operand.vmem [shape: f32[2,1,256], index: 9, kind: input, shape index: {}]
  %s10 = inlined_call_operand.hbm [shape: f32[256,256], index: 10, kind: input, shape index: {}]
  %s11 = inlined_call_operand.hbm [shape: f32[2,128,128], index: 11, kind: output, shape index: {0}]
  %s12 = inlined_call_operand.hbm [shape: f32[2,128,128], index: 12, kind: output, shape index: {1}]
  %s13 = inlined_call_operand.hbm [shape: f32[2,128,128], index: 13, kind: output, shape index: {2}]
  %14 = xla_tuple %s11, %s12, %s13
  %s15 = sld [smem:[#allocation0]]
  $region117: #{tpu_custom_call.1} parent=0
    _
  %s17 = ssub.s32 1, %s15
  %s18 = scalar_select 0, %s17, %s15
  $region1: #{tpu_custom_call.1} parent=0
    #allocation2 [shape = 'u8[131072]{0}', space=vmem, size = 0x20000, scoped, tag = 'input window, operand 1']
    #allocation3 [shape = 's32[2]{0}', space=sflag, size = 0x8, scoped, tag = 'scoped memory for tpu_custom_call.1']
    #allocation4 [shape = 's32[2]{0}', space=sflag, size = 0x8, scoped, tag = 'scoped memory for tpu_custom_call.1']
    #allocation5 [shape = 'u8[65536]{0}', space=vmem, size = 0x10000, scoped, tag = 'input window, operand 2, single buffered']
    #allocation6 [shape = 's32[1]{0}', space=sflag, size = 0x4, scoped, tag = 'scoped memory for tpu_custom_call.1']
    #allocation7 [shape = 'u8[1024]{0}', space=vmem, size = 0x400, scoped, tag = 'input window, operand 3']
    #allocation8 [shape = 'u8[131072]{0}', space=vmem, size = 0x20000, scoped, tag = 'input window, operand 6, single buffered']
    #allocation9 [shape = 'u8[524288]{0}', space=vmem, size = 0x80000, scoped, tag = 'input window, operand 8, single buffered']
    #allocation10 [shape = 's32[1]{0}', space=sflag, size = 0x4, scoped, tag = 'scoped memory for tpu_custom_call.1']
    #allocation11 [shape = 'u8[262144]{0}', space=vmem, size = 0x40000, scoped, tag = 'input window, operand 10, single buffered']
    #allocation12 [shape = 'u8[131072]{0}', space=vmem, size = 0x20000, scoped, tag = 'output window, operand 0']
    #allocation13 [shape = 'u8[131072]{0}', space=vmem, size = 0x20000, scoped, tag = 'output window, operand 1']
    #allocation14 [shape = 's32[2]{0}', space=sflag, size = 0x8, scoped, tag = 'scoped memory for tpu_custom_call.1']
    #allocation15 [shape = 'u8[131072]{0}', space=vmem, size = 0x20000, scoped, tag = 'output window, operand 2']
    %19 = vsyncpa [#allocation3], 0
    %s20 = scalar_lea.sflag [#allocation3], 1
    %21 = vsyncpa %s20, 0
    %22 = vsyncpa [#allocation6], 0
    %23 = vsyncpa [#allocation10], 0
    %24 = vsyncpa [#allocation4], 0
    %s25 = scalar_lea.sflag [#allocation4], 1
    %26 = vsyncpa %s25, 0
    %27 = vsyncpa [#allocation14], 0
    %s28 = scalar_lea.sflag [#allocation14], 1
    %29 = vsyncpa %s28, 0
    loop: start=0, step=1, limit=4
    $region2: #{tpu_custom_call.1} parent=1 // loop_pre_header
      _
    $region3: #{tpu_custom_call.1} parent=1 // loop_header
      %s31 = sphi 0, %s35
      %p32 = scmp.ge.s32.totalorder %s31, 4
      %s41 = sphi 0, %s43
      %s44 = sphi 0, %s41
      %s45 = sphi 0, %s44
      %s61 = sphi 0, %s45
      %s67 = sphi 0, %s69
      %s70 = sphi 0, %s67
      %s71 = sphi 0, %s70
      %s87 = sphi 0, %s71
      %s91 = sphi 0, %s91
      %s93 = sphi 0, %s91
      %s94 = sphi 0, %s93
      %s108 = sphi 0, %s94
      %s114 = sphi 0, %s116
      %s117 = sphi 0, %s114
      %s118 = sphi 0, %s117
      %s134 = sphi 0, %s118
      %s140 = sphi 0, %s142
      %s143 = sphi 0, %s140
      %s144 = sphi 0, %s143
      %s160 = sphi 0, %s144
      %s164 = sphi 0, %s164
      %s166 = sphi 0, %s164
      %s167 = sphi 0, %s166
      %s181 = sphi 0, %s167
      %s185 = sphi 0, %s185
      %s187 = sphi 0, %s185
      %s188 = sphi 0, %s187
      %s202 = sphi 0, %s188
      %s206 = sphi 0, %s206
      %s208 = sphi 0, %s206
      %s209 = sphi 0, %s208
      %s223 = sphi 0, %s209
      %s227 = sphi 0, %s227
      %s229 = sphi 0, %s227
      %s230 = sphi 0, %s229
      %s244 = sphi 0, %s230
      %s248 = sphi 0, %s248
      %s250 = sphi 0, %s248
      %s251 = sphi 0, %s250
      %s265 = sphi 0, %s251
      %s269 = sphi 0, %s269
      %s271 = sphi 0, %s269
      %s272 = sphi 0, %s271
      %s286 = sphi 0, %s272
      %s292 = sphi 0, %s294
      %s295 = sphi 0, %s292
      %s296 = sphi 0, %s295
      %s312 = sphi 0, %s296
      %s318 = sphi 0, %s320
      %s321 = sphi 0, %s318
      %s322 = sphi 0, %s321
      %s338 = sphi 0, %s322
      %s344 = sphi 0, %s346
      %s347 = sphi 0, %s344
      %s348 = sphi 0, %s347
      %s364 = sphi 0, %s348
    $region4: #{tpu_custom_call.1} parent=1 // loop_header_branch
      %34 = sbr.rel (%p32) target = $region8
    $region5: #{tpu_custom_call.1} parent=1 // loop_body
      %s36 = ssub.s32 %s31, 1
      %s37 = ssub.s32 %s31, 2
      %s38 = sadd.s32 %s31, 1
      %s39 = ssub.s32 %s31, %s38
      %p40 = scmp.eq.s32.totalorder %s39, 0
      %s42 = sadd.s32 %s41, 1
      %s43 = scalar_select %p40, %s41, %s42
      %p46 = pneg %p40
      %p47 = scmp.eq.s32.totalorder %s31, 1
      %p48 = por %p46, %p47
      %p49 = scmp.ne.s32.totalorder %s41, %s44
      %p50 = scmp.eq.s32.totalorder %s31, 0
      %p51 = por %p49, %p50
      %p52 = scmp.ne.s32.totalorder %s41, %s44
      %p53 = scmp.eq.s32.totalorder %s36, 1
      %p54 = por %p52, %p53
      %p55 = scmp.ne.s32.totalorder %s44, %s45
      %p56 = scmp.eq.s32.totalorder %s36, 0
      %p57 = por %p55, %p56
      %p58 = scmp.ne.s32.totalorder %s44, %s45
      %p59 = scmp.eq.s32.totalorder %s37, 1
      %p60 = por %p58, %p59
      %p62 = scmp.ne.s32.totalorder %s45, %s61
      %p63 = scmp.eq.s32.totalorder %s37, 0
      %p64 = por %p62, %p63
      %s65 = ssub.s32 %s31, %s38
      %p66 = scmp.eq.s32.totalorder %s65, 0
      %s68 = sadd.s32 %s67, 1
      %s69 = scalar_select %p66, %s67, %s68
      %p72 = pneg %p66
      %p73 = scmp.eq.s32.totalorder %s31, 1
      %p74 = por %p72, %p73
      %p75 = scmp.ne.s32.totalorder %s67, %s70
      %p76 = scmp.eq.s32.totalorder %s31, 0
      %p77 = por %p75, %p76
      %p78 = scmp.ne.s32.totalorder %s67, %s70
      %p79 = scmp.eq.s32.totalorder %s36, 1
      %p80 = por %p78, %p79
      %p81 = scmp.ne.s32.totalorder %s70, %s71
      %p82 = scmp.eq.s32.totalorder %s36, 0
      %p83 = por %p81, %p82
      %p84 = scmp.ne.s32.totalorder %s70, %s71
      %p85 = scmp.eq.s32.totalorder %s37, 1
      %p86 = por %p84, %p85
      %p88 = scmp.ne.s32.totalorder %s71, %s87
      %p89 = scmp.eq.s32.totalorder %s37, 0
      %p90 = por %p88, %p89
      %s92 = sadd.s32 %s91, 1
      %p95 = scmp.eq.s32.totalorder %s31, 1
      %p96 = scmp.ne.s32.totalorder %s91, %s93
      %p97 = scmp.eq.s32.totalorder %s31, 0
      %p98 = por %p96, %p97
      %p99 = scmp.ne.s32.totalorder %s91, %s93
      %p100 = scmp.eq.s32.totalorder %s36, 1
      %p101 = por %p99, %p100
      %p102 = scmp.ne.s32.totalorder %s93, %s94
      %p103 = scmp.eq.s32.totalorder %s36, 0
      %p104 = por %p102, %p103
      %p105 = scmp.ne.s32.totalorder %s93, %s94
      %p106 = scmp.eq.s32.totalorder %s37, 1
      %p107 = por %p105, %p106
      %p109 = scmp.ne.s32.totalorder %s94, %s108
      %p110 = scmp.eq.s32.totalorder %s37, 0
      %p111 = por %p109, %p110
      %s112 = ssub.s32 %s31, %s38
      %p113 = scmp.eq.s32.totalorder %s112, 0
      %s115 = sadd.s32 %s114, 1
      %s116 = scalar_select %p113, %s114, %s115
      %p119 = pneg %p113
      %p120 = scmp.eq.s32.totalorder %s31, 1
      %p121 = por %p119, %p120
      %p122 = scmp.ne.s32.totalorder %s114, %s117
      %p123 = scmp.eq.s32.totalorder %s31, 0
      %p124 = por %p122, %p123
      %p125 = scmp.ne.s32.totalorder %s114, %s117
      %p126 = scmp.eq.s32.totalorder %s36, 1
      %p127 = por %p125, %p126
      %p128 = scmp.ne.s32.totalorder %s117, %s118
      %p129 = scmp.eq.s32.totalorder %s36, 0
      %p130 = por %p128, %p129
      %p131 = scmp.ne.s32.totalorder %s117, %s118
      %p132 = scmp.eq.s32.totalorder %s37, 1
      %p133 = por %p131, %p132
      %p135 = scmp.ne.s32.totalorder %s118, %s134
      %p136 = scmp.eq.s32.totalorder %s37, 0
      %p137 = por %p135, %p136
      %s138 = ssub.s32 %s31, %s38
      %p139 = scmp.eq.s32.totalorder %s138, 0
      %s141 = sadd.s32 %s140, 1
      %s142 = scalar_select %p139, %s140, %s141
      %p145 = pneg %p139
      %p146 = scmp.eq.s32.totalorder %s31, 1
      %p147 = por %p145, %p146
      %p148 = scmp.ne.s32.totalorder %s140, %s143
      %p149 = scmp.eq.s32.totalorder %s31, 0
      %p150 = por %p148, %p149
      %p151 = scmp.ne.s32.totalorder %s140, %s143
      %p152 = scmp.eq.s32.totalorder %s36, 1
      %p153 = por %p151, %p152
      %p154 = scmp.ne.s32.totalorder %s143, %s144
      %p155 = scmp.eq.s32.totalorder %s36, 0
      %p156 = por %p154, %p155
      %p157 = scmp.ne.s32.totalorder %s143, %s144
      %p158 = scmp.eq.s32.totalorder %s37, 1
      %p159 = por %p157, %p158
      %p161 = scmp.ne.s32.totalorder %s144, %s160
      %p162 = scmp.eq.s32.totalorder %s37, 0
      %p163 = por %p161, %p162
      %s165 = sadd.s32 %s164, 1
      %p168 = scmp.eq.s32.totalorder %s31, 1
      %p169 = scmp.ne.s32.totalorder %s164, %s166
      %p170 = scmp.eq.s32.totalorder %s31, 0
      %p171 = por %p169, %p170
      %p172 = scmp.ne.s32.totalorder %s164, %s166
      %p173 = scmp.eq.s32.totalorder %s36, 1
      %p174 = por %p172, %p173
      %p175 = scmp.ne.s32.totalorder %s166, %s167
      %p176 = scmp.eq.s32.totalorder %s36, 0
      %p177 = por %p175, %p176
      %p178 = scmp.ne.s32.totalorder %s166, %s167
      %p179 = scmp.eq.s32.totalorder %s37, 1
      %p180 = por %p178, %p179
      %p182 = scmp.ne.s32.totalorder %s167, %s181
      %p183 = scmp.eq.s32.totalorder %s37, 0
      %p184 = por %p182, %p183
      %s186 = sadd.s32 %s185, 1
      %p189 = scmp.eq.s32.totalorder %s31, 1
      %p190 = scmp.ne.s32.totalorder %s185, %s187
      %p191 = scmp.eq.s32.totalorder %s31, 0
      %p192 = por %p190, %p191
      %p193 = scmp.ne.s32.totalorder %s185, %s187
      %p194 = scmp.eq.s32.totalorder %s36, 1
      %p195 = por %p193, %p194
      %p196 = scmp.ne.s32.totalorder %s187, %s188
      %p197 = scmp.eq.s32.totalorder %s36, 0
      %p198 = por %p196, %p197
      %p199 = scmp.ne.s32.totalorder %s187, %s188
      %p200 = scmp.eq.s32.totalorder %s37, 1
      %p201 = por %p199, %p200
      %p203 = scmp.ne.s32.totalorder %s188, %s202
      %p204 = scmp.eq.s32.totalorder %s37, 0
      %p205 = por %p203, %p204
      %s207 = sadd.s32 %s206, 1
      %p210 = scmp.eq.s32.totalorder %s31, 1
      %p211 = scmp.ne.s32.totalorder %s206, %s208
      %p212 = scmp.eq.s32.totalorder %s31, 0
      %p213 = por %p211, %p212
      %p214 = scmp.ne.s32.totalorder %s206, %s208
      %p215 = scmp.eq.s32.totalorder %s36, 1
      %p216 = por %p214, %p215
      %p217 = scmp.ne.s32.totalorder %s208, %s209
      %p218 = scmp.eq.s32.totalorder %s36, 0
      %p219 = por %p217, %p218
      %p220 = scmp.ne.s32.totalorder %s208, %s209
      %p221 = scmp.eq.s32.totalorder %s37, 1
      %p222 = por %p220, %p221
      %p224 = scmp.ne.s32.totalorder %s209, %s223
      %p225 = scmp.eq.s32.totalorder %s37, 0
      %p226 = por %p224, %p225
      %s228 = sadd.s32 %s227, 1
      %p231 = scmp.eq.s32.totalorder %s31, 1
      %p232 = scmp.ne.s32.totalorder %s227, %s229
      %p233 = scmp.eq.s32.totalorder %s31, 0
      %p234 = por %p232, %p233
      %p235 = scmp.ne.s32.totalorder %s227, %s229
      %p236 = scmp.eq.s32.totalorder %s36, 1
      %p237 = por %p235, %p236
      %p238 = scmp.ne.s32.totalorder %s229, %s230
      %p239 = scmp.eq.s32.totalorder %s36, 0
      %p240 = por %p238, %p239
      %p241 = scmp.ne.s32.totalorder %s229, %s230
      %p242 = scmp.eq.s32.totalorder %s37, 1
      %p243 = por %p241, %p242
      %p245 = scmp.ne.s32.totalorder %s230, %s244
      %p246 = scmp.eq.s32.totalorder %s37, 0
      %p247 = por %p245, %p246
      %s249 = sadd.s32 %s248, 1
      %p252 = scmp.eq.s32.totalorder %s31, 1
      %p253 = scmp.ne.s32.totalorder %s248, %s250
      %p254 = scmp.eq.s32.totalorder %s31, 0
      %p255 = por %p253, %p254
      %p256 = scmp.ne.s32.totalorder %s248, %s250
      %p257 = scmp.eq.s32.totalorder %s36, 1
      %p258 = por %p256, %p257
      %p259 = scmp.ne.s32.totalorder %s250, %s251
      %p260 = scmp.eq.s32.totalorder %s36, 0
      %p261 = por %p259, %p260
      %p262 = scmp.ne.s32.totalorder %s250, %s251
      %p263 = scmp.eq.s32.totalorder %s37, 1
      %p264 = por %p262, %p263
      %p266 = scmp.ne.s32.totalorder %s251, %s265
      %p267 = scmp.eq.s32.totalorder %s37, 0
      %p268 = por %p266, %p267
      %s270 = sadd.s32 %s269, 1
      %p273 = scmp.eq.s32.totalorder %s31, 1
      %p274 = scmp.ne.s32.totalorder %s269, %s271
      %p275 = scmp.eq.s32.totalorder %s31, 0
      %p276 = por %p274, %p275
      %p277 = scmp.ne.s32.totalorder %s269, %s271
      %p278 = scmp.eq.s32.totalorder %s36, 1
      %p279 = por %p277, %p278
      %p280 = scmp.ne.s32.totalorder %s271, %s272
      %p281 = scmp.eq.s32.totalorder %s36, 0
      %p282 = por %p280, %p281
      %p283 = scmp.ne.s32.totalorder %s271, %s272
      %p284 = scmp.eq.s32.totalorder %s37, 1
      %p285 = por %p283, %p284
      %p287 = scmp.ne.s32.totalorder %s272, %s286
      %p288 = scmp.eq.s32.totalorder %s37, 0
      %p289 = por %p287, %p288
      %s290 = ssub.s32 %s31, %s38
      %p291 = scmp.eq.s32.totalorder %s290, 0
      %s293 = sadd.s32 %s292, 1
      %s294 = scalar_select %p291, %s292, %s293
      %p297 = pneg %p291
      %p298 = scmp.eq.s32.totalorder %s31, 1
      %p299 = por %p297, %p298
      %p300 = scmp.ne.s32.totalorder %s292, %s295
      %p301 = scmp.eq.s32.totalorder %s31, 0
      %p302 = por %p300, %p301
      %p303 = scmp.ne.s32.totalorder %s292, %s295
      %p304 = scmp.eq.s32.totalorder %s36, 1
      %p305 = por %p303, %p304
      %p306 = scmp.ne.s32.totalorder %s295, %s296
      %p307 = scmp.eq.s32.totalorder %s36, 0
      %p308 = por %p306, %p307
      %p309 = scmp.ne.s32.totalorder %s295, %s296
      %p310 = scmp.eq.s32.totalorder %s37, 1
      %p311 = por %p309, %p310
      %p313 = scmp.ne.s32.totalorder %s296, %s312
      %p314 = scmp.eq.s32.totalorder %s37, 0
      %p315 = por %p313, %p314
      %s316 = ssub.s32 %s31, %s38
      %p317 = scmp.eq.s32.totalorder %s316, 0
      %s319 = sadd.s32 %s318, 1
      %s320 = scalar_select %p317, %s318, %s319
      %p323 = pneg %p317
      %p324 = scmp.eq.s32.totalorder %s31, 1
      %p325 = por %p323, %p324
      %p326 = scmp.ne.s32.totalorder %s318, %s321
      %p327 = scmp.eq.s32.totalorder %s31, 0
      %p328 = por %p326, %p327
      %p329 = scmp.ne.s32.totalorder %s318, %s321
      %p330 = scmp.eq.s32.totalorder %s36, 1
      %p331 = por %p329, %p330
      %p332 = scmp.ne.s32.totalorder %s321, %s322
      %p333 = scmp.eq.s32.totalorder %s36, 0
      %p334 = por %p332, %p333
      %p335 = scmp.ne.s32.totalorder %s321, %s322
      %p336 = scmp.eq.s32.totalorder %s37, 1
      %p337 = por %p335, %p336
      %p339 = scmp.ne.s32.totalorder %s322, %s338
      %p340 = scmp.eq.s32.totalorder %s37, 0
      %p341 = por %p339, %p340
      %s342 = ssub.s32 %s31, %s38
      %p343 = scmp.eq.s32.totalorder %s342, 0
      %s345 = sadd.s32 %s344, 1
      %s346 = scalar_select %p343, %s344, %s345
      %p349 = pneg %p343
      %p350 = scmp.eq.s32.totalorder %s31, 1
      %p351 = por %p349, %p350
      %p352 = scmp.ne.s32.totalorder %s344, %s347
      %p353 = scmp.eq.s32.totalorder %s31, 0
      %p354 = por %p352, %p353
      %p355 = scmp.ne.s32.totalorder %s344, %s347
      %p356 = scmp.eq.s32.totalorder %s36, 1
      %p357 = por %p355, %p356
      %p358 = scmp.ne.s32.totalorder %s347, %s348
      %p359 = scmp.eq.s32.totalorder %s36, 0
      %p360 = por %p358, %p359
      %p361 = scmp.ne.s32.totalorder %s347, %s348
      %p362 = scmp.eq.s32.totalorder %s37, 1
      %p363 = por %p361, %p362
      %p365 = scmp.ne.s32.totalorder %s348, %s364
      %p366 = scmp.eq.s32.totalorder %s37, 0
      %p367 = por %p365, %p366
      %p368 = scmp.le.s32.totalorder 1, %s31
      %p369 = scmp.lt.s32.totalorder %s31, 3
      %p370 = pnand %p368, %p369
      %p371 = pneg %p370
      // Predicated region
      $region9: #{tpu_custom_call.1} parent=5 // pred_check
        _
      $region10: #{tpu_custom_call.1} parent=5 // pred_check_branch
        %373 = sbr.rel (%p370) target = $region12
      $region11: #{tpu_custom_call.1} parent=5 // pred_region
        %s374 = ssub.s32 %s31, 1
        // Predicated region
        $region13: #{tpu_custom_call.1} parent=11 // pred_check
          %p375 = pneg %p104
        $region14: #{tpu_custom_call.1} parent=11 // pred_check_branch
          %377 = sbr.rel (%p375) target = $region16
        $region15: #{tpu_custom_call.1} parent=11 // pred_region
          %s379 = ssub.s32 2048, 2048
          %380 = vsyncadd [#allocation6], %s379
          %s381 = sshll.u32 [#allocation5], 4
          %s382 = int_to_ptr.vmem [resolvable:$true] %s381
          %387 = dma.hbm_to_vmem [thread:$0]  %s2, 2048, %s382, [#allocation6], 128, 128, 8
        $region16: #{tpu_custom_call.1} parent=11 // pred_fallthru
          _
        // Predicated region
        $region17: #{tpu_custom_call.1} parent=11 // pred_check
          %p388 = pneg %p177
        $region18: #{tpu_custom_call.1} parent=11 // pred_check_branch
          %390 = sbr.rel (%p388) target = $region20
        $region19: #{tpu_custom_call.1} parent=11 // pred_region
          _
        $region20: #{tpu_custom_call.1} parent=11 // pred_fallthru
          _
        // Predicated region
        $region21: #{tpu_custom_call.1} parent=11 // pred_check
          %p391 = pneg %p198
        $region22: #{tpu_custom_call.1} parent=11 // pred_check_branch
          %393 = sbr.rel (%p391) target = $region24
        $region23: #{tpu_custom_call.1} parent=11 // pred_region
          %s395 = ssub.s32 4096, 4096
          %396 = vsyncadd [#allocation6], %s395
          %s397 = sshll.u32 [#allocation8], 4
          %s398 = int_to_ptr.vmem [resolvable:$true] %s397
          %403 = dma.hbm_to_vmem [thread:$0]  %s6, 4096, %s398, [#allocation6], 256, 256, 16
        $region24: #{tpu_custom_call.1} parent=11 // pred_fallthru
          _
        // Predicated region
        $region25: #{tpu_custom_call.1} parent=11 // pred_check
          %p404 = pneg %p219
        $region26: #{tpu_custom_call.1} parent=11 // pred_check_branch
          %406 = sbr.rel (%p404) target = $region28
        $region27: #{tpu_custom_call.1} parent=11 // pred_region
          _
        $region28: #{tpu_custom_call.1} parent=11 // pred_fallthru
          _
        // Predicated region
        $region29: #{tpu_custom_call.1} parent=11 // pred_check
          %p407 = pneg %p240
        $region30: #{tpu_custom_call.1} parent=11 // pred_check_branch
          %409 = sbr.rel (%p407) target = $region32
        $region31: #{tpu_custom_call.1} parent=11 // pred_region
          %s411 = ssub.s32 16384, 16384
          %412 = vsyncadd [#allocation10], %s411
          %s413 = sshll.u32 [#allocation9], 4
          %s414 = int_to_ptr.vmem [resolvable:$true] %s413
          %419 = dma.hbm_to_vmem [thread:$0]  %s8, 16384, %s414, [#allocation10], 256, 256, 16
        $region32: #{tpu_custom_call.1} parent=11 // pred_fallthru
          _
        // Predicated region
        $region33: #{tpu_custom_call.1} parent=11 // pred_check
          %p420 = pneg %p261
        $region34: #{tpu_custom_call.1} parent=11 // pred_check_branch
          %422 = sbr.rel (%p420) target = $region36
        $region35: #{tpu_custom_call.1} parent=11 // pred_region
          _
        $region36: #{tpu_custom_call.1} parent=11 // pred_fallthru
          _
        // Predicated region
        $region37: #{tpu_custom_call.1} parent=11 // pred_check
          %p423 = pneg %p282
        $region38: #{tpu_custom_call.1} parent=11 // pred_check_branch
          %425 = sbr.rel (%p423) target = $region40
        $region39: #{tpu_custom_call.1} parent=11 // pred_region
          %s427 = ssub.s32 8192, 8192
          %428 = vsyncadd [#allocation10], %s427
          %s429 = sshll.u32 [#allocation11], 4
          %s430 = int_to_ptr.vmem [resolvable:$true] %s429
          %435 = dma.hbm_to_vmem [thread:$0]  %s10, 8192, %s430, [#allocation10], 256, 256, 16
        $region40: #{tpu_custom_call.1} parent=11 // pred_fallthru
          _
      $region12: #{tpu_custom_call.1} parent=5 // pred_fallthru
        _
      %p436 = scmp.lt.s32.totalorder %s31, 2
      // Predicated region
      $region41: #{tpu_custom_call.1} parent=5 // pred_check
        %p437 = pneg %p436
      $region42: #{tpu_custom_call.1} parent=5 // pred_check_branch
        %439 = sbr.rel (%p437) target = $region44
      $region43: #{tpu_custom_call.1} parent=5 // pred_region
        // Predicated region
        $region45: #{tpu_custom_call.1} parent=43 // pred_check
          %p440 = pneg %p51
        $region46: #{tpu_custom_call.1} parent=43 // pred_check_branch
          %442 = sbr.rel (%p440) target = $region48
        $region47: #{tpu_custom_call.1} parent=43 // pred_region
          %p443 = scmp.lt.s32.totalorder %s31, 1
          %s444 = scalar_select %p443, %s31, 1
          %s445 = smul.addr %s444, 16
          %s446 = smul.addr %s445, 8
          %s447 = scalar_lea.vmem %s0, %s446
        $region48: #{tpu_custom_call.1} parent=43 // pred_fallthru
          _
        // Predicated region
        $region49: #{tpu_custom_call.1} parent=43 // pred_check
          %p448 = pneg %p77
        $region50: #{tpu_custom_call.1} parent=43 // pred_check_branch
          %450 = sbr.rel (%p448) target = $region52
        $region51: #{tpu_custom_call.1} parent=43 // pred_region
          %s451 = sand.u32 %s31, 1
          %s452 = scalar_lea.sflag [#allocation3], %s451
          %s453 = sand.u32 %s67, 1
          %s454 = smul.addr %s453, 128
          %s455 = scalar_lea.vmem [#allocation2], %s454
          %s457 = ssub.s32 2048, 2048
          %458 = vsyncadd %s452, %s457
          %s459 = smul.addr %s31, 16
          %s460 = smul.addr %s459, 128
          %s461 = scalar_lea.hbm %s1, %s460
          %s462 = sshll.u32 %s455, 4
          %s463 = int_to_ptr.vmem [resolvable:$true] %s462
          %468 = dma.hbm_to_vmem [thread:$0]  %s461, 2048, %s463, %s452, 128, 128, 8
        $region52: #{tpu_custom_call.1} parent=43 // pred_fallthru
          _
        // Predicated region
        $region53: #{tpu_custom_call.1} parent=43 // pred_check
          %p469 = pneg %p124
        $region54: #{tpu_custom_call.1} parent=43 // pred_check_branch
          %471 = sbr.rel (%p469) target = $region56
        $region55: #{tpu_custom_call.1} parent=43 // pred_region
          %s472 = sand.u32 %s31, 1
          %s473 = scalar_lea.sflag [#allocation3], %s472
          %s474 = sand.u32 %s114, 1
          %s475 = scalar_lea.vmem [#allocation7], %s474
          %s477 = ssub.s32 16, 16
          %478 = vsyncadd %s473, %s477
          %s479 = smul.addr %s31, 16
          %s480 = scalar_lea.hbm %s3, %s479
          %s482 = sshll.u32 %s475, 4
          %s483 = int_to_ptr.vmem [resolvable:$true] %s482
          %485 = dma.hbm_to_vmem [thread:$0]  %s480, 16, %s483, %s473
        $region56: #{tpu_custom_call.1} parent=43 // pred_fallthru
          _
        // Predicated region
        $region57: #{tpu_custom_call.1} parent=43 // pred_check
          %p486 = pneg %p150
        $region58: #{tpu_custom_call.1} parent=43 // pred_check_branch
          %488 = sbr.rel (%p486) target = $region60
        $region59: #{tpu_custom_call.1} parent=43 // pred_region
          %p489 = scmp.lt.s32.totalorder %s31, 1
          %s490 = scalar_select %p489, %s31, 1
          %s491 = smul.addr %s490, 16
          %s492 = smul.addr %s491, 8
          %s493 = scalar_lea.vmem %s4, %s492
        $region60: #{tpu_custom_call.1} parent=43 // pred_fallthru
          _
      $region44: #{tpu_custom_call.1} parent=5 // pred_fallthru
        _
      %p494 = scmp.le.s32.totalorder 1, %s31
      %p495 = scmp.lt.s32.totalorder %s31, 3
      %p496 = pnand %p494, %p495
      %p497 = pneg %p496
      // Predicated region
      $region61: #{tpu_custom_call.1} parent=5 // pred_check
        _
      $region62: #{tpu_custom_call.1} parent=5 // pred_check_branch
        %499 = sbr.rel (%p496) target = $region64
      $region63: #{tpu_custom_call.1} parent=5 // pred_region
        %s500 = ssub.s32 %s31, 1
        %s501 = sand.u32 %s36, 1
        %s502 = scalar_lea.sflag [#allocation3], %s501
        %s503 = sand.u32 %s70, 1
        %s504 = smul.addr %s503, 128
        %s505 = scalar_lea.vmem [#allocation2], %s504
        // Predicated region
        $region65: #{tpu_custom_call.1} parent=63 // pred_check
          %p506 = pneg %p83
        $region66: #{tpu_custom_call.1} parent=63 // pred_check_branch
          %508 = sbr.rel (%p506) target = $region68
        $region67: #{tpu_custom_call.1} parent=63 // pred_region
          %509 = dma.done %s502, 2048
        $region68: #{tpu_custom_call.1} parent=63 // pred_fallthru
          _
        // Predicated region
        $region69: #{tpu_custom_call.1} parent=63 // pred_check
          %p510 = pneg %p104
        $region70: #{tpu_custom_call.1} parent=63 // pred_check_branch
          %512 = sbr.rel (%p510) target = $region72
        $region71: #{tpu_custom_call.1} parent=63 // pred_region
          %513 = dma.done [#allocation6], 2048
        $region72: #{tpu_custom_call.1} parent=63 // pred_fallthru
          _
        %s514 = sand.u32 %s36, 1
        %s515 = scalar_lea.sflag [#allocation3], %s514
        %s516 = sand.u32 %s117, 1
        %s517 = scalar_lea.vmem [#allocation7], %s516
        // Predicated region
        $region73: #{tpu_custom_call.1} parent=63 // pred_check
          %p518 = pneg %p130
        $region74: #{tpu_custom_call.1} parent=63 // pred_check_branch
          %520 = sbr.rel (%p518) target = $region76
        $region75: #{tpu_custom_call.1} parent=63 // pred_region
          %521 = dma.done %s515, 16
        $region76: #{tpu_custom_call.1} parent=63 // pred_fallthru
          _
        // Predicated region
        $region77: #{tpu_custom_call.1} parent=63 // pred_check
          %p522 = pneg %p198
        $region78: #{tpu_custom_call.1} parent=63 // pred_check_branch
          %524 = sbr.rel (%p522) target = $region80
        $region79: #{tpu_custom_call.1} parent=63 // pred_region
          %525 = dma.done [#allocation6], 4096
        $region80: #{tpu_custom_call.1} parent=63 // pred_fallthru
          _
        // Predicated region
        $region81: #{tpu_custom_call.1} parent=63 // pred_check
          %p526 = pneg %p240
        $region82: #{tpu_custom_call.1} parent=63 // pred_check_branch
          %528 = sbr.rel (%p526) target = $region84
        $region83: #{tpu_custom_call.1} parent=63 // pred_region
          %529 = dma.done [#allocation10], 16384
        $region84: #{tpu_custom_call.1} parent=63 // pred_fallthru
          _
        // Predicated region
        $region85: #{tpu_custom_call.1} parent=63 // pred_check
          %p530 = pneg %p282
        $region86: #{tpu_custom_call.1} parent=63 // pred_check_branch
          %532 = sbr.rel (%p530) target = $region88
        $region87: #{tpu_custom_call.1} parent=63 // pred_region
          %533 = dma.done [#allocation10], 8192
        $region88: #{tpu_custom_call.1} parent=63 // pred_fallthru
          _
        %p534 = scmp.lt.s32.totalorder %s36, 1
        %s535 = scalar_select %p534, %s36, 1
        %s536 = smul.addr %s535, 16
        %s537 = smul.addr %s536, 8
        %s538 = scalar_lea.vmem %s0, %s537
        %p539 = pneg %p57
        %p540 = pneg %p54
        %s541 = sand.u32 %s36, 1
        %s542 = scalar_lea.sflag [#allocation3], %s541
        %s543 = sand.u32 %s70, 1
        %s544 = smul.addr %s543, 128
        %s545 = scalar_lea.vmem [#allocation2], %s544
        %p546 = pneg %p83
        %p547 = pneg %p80
        %p548 = pneg %p104
        %p549 = pneg %p101
        %s550 = sand.u32 %s36, 1
        %s551 = scalar_lea.sflag [#allocation3], %s550
        %s552 = sand.u32 %s117, 1
        %s553 = scalar_lea.vmem [#allocation7], %s552
        %p554 = pneg %p130
        %p555 = pneg %p127
        %p556 = scmp.lt.s32.totalorder %s36, 1
        %s557 = scalar_select %p556, %s36, 1
        %s558 = smul.addr %s557, 16
        %s559 = smul.addr %s558, 8
        %s560 = scalar_lea.vmem %s4, %s559
        %p561 = pneg %p156
        %p562 = pneg %p153
        %p563 = pneg %p177
        %p564 = pneg %p174
        %p565 = pneg %p198
        %p566 = pneg %p195
        %p567 = pneg %p219
        %p568 = pneg %p216
        %p569 = pneg %p240
        %p570 = pneg %p237
        %p571 = pneg %p261
        %p572 = pneg %p258
        %p573 = pneg %p282
        %p574 = pneg %p279
        %p575 = pneg %p308
        %p576 = pneg %p305
        %s577 = sand.u32 %s295, 1
        %s578 = scalar_lea.sflag [#allocation4], %s577
        %s579 = sand.u32 %s295, 1
        %s580 = smul.addr %s579, 128
        %s581 = scalar_lea.vmem [#allocation12], %s580
        %p582 = pneg %p334
        %p583 = pneg %p331
        %s584 = sand.u32 %s36, 1
        %s585 = scalar_lea.sflag [#allocation14], %s584
        %s586 = sand.u32 %s321, 1
        %s587 = smul.addr %s586, 128
        %s588 = scalar_lea.vmem [#allocation13], %s587
        %p589 = pneg %p360
        %p590 = pneg %p357
        %s591 = sand.u32 %s36, 1
        %s592 = scalar_lea.sflag [#allocation14], %s591
        %s593 = sand.u32 %s347, 1
        %s594 = smul.addr %s593, 128
        %s595 = scalar_lea.vmem [#allocation15], %s594
        %p596 = scmp.lt.s32.totalorder %s36, 1
        %s597 = scalar_select %p596, %s36, 1
        %s598 = smul.addr %s597, 16
        %s599 = smul.addr %s598, 8
        %s600 = scalar_lea.vmem %s0, %s599
        %p601 = scmp.lt.s32.totalorder %s36, 1
        %s602 = scalar_select %p601, %s36, 1
        %s603 = smul.addr %s602, 16
        %s604 = smul.addr %s603, 8
        %s605 = scalar_lea.vmem %s4, %s604
        %v607 = vld [vmem:[%s600] sm:$0xff]
        %v608 = vld [vmem:[%s600 + $0x8] sm:$0xff]
        %v609 = vld [vmem:[%s600 + $0x10] sm:$0xff]
        %v610 = vld [vmem:[%s600 + $0x18] sm:$0xff]
        %v611 = vld [vmem:[%s600 + $0x20] sm:$0xff]
        %v612 = vld [vmem:[%s600 + $0x28] sm:$0xff]
        %v613 = vld [vmem:[%s600 + $0x30] sm:$0xff]
        %v614 = vld [vmem:[%s600 + $0x38] sm:$0xff]
        %v615 = vld [vmem:[%s600 + $0x40] sm:$0xff]
        %v616 = vld [vmem:[%s600 + $0x48] sm:$0xff]
        %v617 = vld [vmem:[%s600 + $0x50] sm:$0xff]
        %v618 = vld [vmem:[%s600 + $0x58] sm:$0xff]
        %v619 = vld [vmem:[%s600 + $0x60] sm:$0xff]
        %v620 = vld [vmem:[%s600 + $0x68] sm:$0xff]
        %v621 = vld [vmem:[%s600 + $0x70] sm:$0xff]
        %v622 = vld [vmem:[%s600 + $0x78] sm:$0xff]
        %v623 = vpack.c.bf16 %v608, %v607
        %v624 = vpack.c.bf16 %v610, %v609
        %v625 = vpack.c.bf16 %v612, %v611
        %v626 = vpack.c.bf16 %v614, %v613
        %v627 = vpack.c.bf16 %v616, %v615
        %v628 = vpack.c.bf16 %v618, %v617
        %v629 = vpack.c.bf16 %v620, %v619
        %v630 = vpack.c.bf16 %v622, %v621
        %v631 = vld [vmem:[#allocation8] sm:$0xff]
        %v632 = vld [vmem:[#allocation8 + $0x8] sm:$0xff]
        %v633 = vld [vmem:[#allocation8 + $0x10] sm:$0xff]
        %v634 = vld [vmem:[#allocation8 + $0x18] sm:$0xff]
        %v635 = vld [vmem:[#allocation8 + $0x20] sm:$0xff]
        %v636 = vld [vmem:[#allocation8 + $0x28] sm:$0xff]
        %v637 = vld [vmem:[#allocation8 + $0x30] sm:$0xff]
        %v638 = vld [vmem:[#allocation8 + $0x38] sm:$0xff]
        %v639 = vld [vmem:[#allocation8 + $0x40] sm:$0xff]
        %v640 = vld [vmem:[#allocation8 + $0x48] sm:$0xff]
        %v641 = vld [vmem:[#allocation8 + $0x50] sm:$0xff]
        %v642 = vld [vmem:[#allocation8 + $0x58] sm:$0xff]
        %v643 = vld [vmem:[#allocation8 + $0x60] sm:$0xff]
        %v644 = vld [vmem:[#allocation8 + $0x68] sm:$0xff]
        %v645 = vld [vmem:[#allocation8 + $0x70] sm:$0xff]
        %v646 = vld [vmem:[#allocation8 + $0x78] sm:$0xff]
        %v647 = vld [vmem:[#allocation8 + $0x80] sm:$0xff]
        %v648 = vld [vmem:[#allocation8 + $0x88] sm:$0xff]
        %v649 = vld [vmem:[#allocation8 + $0x90] sm:$0xff]
        %v650 = vld [vmem:[#allocation8 + $0x98] sm:$0xff]
        %v651 = vld [vmem:[#allocation8 + $0xa0] sm:$0xff]
        %v652 = vld [vmem:[#allocation8 + $0xa8] sm:$0xff]
        %v653 = vld [vmem:[#allocation8 + $0xb0] sm:$0xff]
        %v654 = vld [vmem:[#allocation8 + $0xb8] sm:$0xff]
        %v655 = vld [vmem:[#allocation8 + $0xc0] sm:$0xff]
        %v656 = vld [vmem:[#allocation8 + $0xc8] sm:$0xff]
        %v657 = vld [vmem:[#allocation8 + $0xd0] sm:$0xff]
        %v658 = vld [vmem:[#allocation8 + $0xd8] sm:$0xff]
        %v659 = vld [vmem:[#allocation8 + $0xe0] sm:$0xff]
        %v660 = vld [vmem:[#allocation8 + $0xe8] sm:$0xff]
        %v661 = vld [vmem:[#allocation8 + $0xf0] sm:$0xff]
        %v662 = vld [vmem:[#allocation8 + $0xf8] sm:$0xff]
        %v663 = vpack.c.bf16 %v633, %v631
        %v664 = vpack.c.bf16 %v634, %v632
        %v665 = vpack.c.bf16 %v637, %v635
        %v666 = vpack.c.bf16 %v638, %v636
        %v667 = vpack.c.bf16 %v641, %v639
        %v668 = vpack.c.bf16 %v642, %v640
        %v669 = vpack.c.bf16 %v645, %v643
        %v670 = vpack.c.bf16 %v646, %v644
        %v671 = vpack.c.bf16 %v649, %v647
        %v672 = vpack.c.bf16 %v650, %v648
        %v673 = vpack.c.bf16 %v653, %v651
        %v674 = vpack.c.bf16 %v654, %v652
        %v675 = vpack.c.bf16 %v657, %v655
        %v676 = vpack.c.bf16 %v658, %v656
        %v677 = vpack.c.bf16 %v661, %v659
        %v678 = vpack.c.bf16 %v662, %v660
        %v679 = vld [vmem:[%s7] sm:$0x3]
        %v681 = vlaneseq
        %v682 = vshrl.u32 %v681, 7
        %v683 = vsub.s32 0, %v682
        %v684 = vrot.slane %v679, %v683
        %v685 = vlaneseq
        %v686 = vshrl.u32 %v685, 7
        %v687 = vsub.s32 1, %v686
        %v688 = vrot.slane %v679, %v687
        %691 = vmatprep.subr.bf16.mxu0 %v678
        %692 = vmatpush1.bf16.msra.mxu0 %v677
        %693 = vmatprep.subr.bf16.mxu0 %v676
        %694 = vmatpush1.bf16.msra.mxu0 %v675
        %695 = vmatprep.subr.bf16.mxu0 %v674
        %696 = vmatpush1.bf16.msra.mxu0 %v673
        %697 = vmatprep.subr.bf16.mxu0 %v672
        %698 = vmatpush1.bf16.msra.mxu0 %v671
        %699 = vmatprep.subr.bf16.mxu0 %v670
        %700 = vmatpush1.bf16.msra.mxu0 %v669
        %701 = vmatprep.subr.bf16.mxu0 %v668
        %702 = vmatpush1.bf16.msra.mxu0 %v667
        %703 = vmatprep.subr.bf16.mxu0 %v666
        %704 = vmatpush1.bf16.msra.mxu0 %v665
        %705 = vmatprep.subr.bf16.mxu0 %v664
        %706 = vmatpush1.bf16.msra.mxu0 %v663
        %707 = vmatprep.subr.bf16.mxu0 0
        %708 = vmatpush2.bf16.msra.mxu0 0
        %709 = vmatprep.subr.bf16.mxu0 0
        %710 = vmatpush2.bf16.msra.mxu0 0
        %711 = vmatprep.subr.bf16.mxu0 0
        %712 = vmatpush2.bf16.msra.mxu0 0
        %713 = vmatprep.subr.bf16.mxu0 0
        %714 = vmatpush2.bf16.msra.mxu0 0
        %715 = vmatprep.subr.bf16.mxu0 0
        %716 = vmatpush2.bf16.msra.mxu0 0
        %717 = vmatprep.subr.bf16.mxu0 0
        %718 = vmatpush2.bf16.msra.mxu0 0
        %719 = vmatprep.subr.bf16.mxu0 0
        %720 = vmatpush2.bf16.msra.mxu0 0
        %721 = vmatprep.subr.bf16.mxu0 0
        %722 = vmatpush2.bf16.msra.mxu0 0
        %723 = vmatprep.mubr.bf16.mxu0 0
        %724 = vmatmul.mubr.bf16.gmra.mxu0 %v623
        %v725 = vpop.f32.mrf.mxu0
        %v726 = vadd.f32 %v684, %v725
        %v727 = vpop.f32.mrf.mxu0
        %v728 = vadd.f32 %v688, %v727
        %v729 = vpop.f32.mrf.mxu0
        %v730 = vadd.f32 %v684, %v729
        %v731 = vpop.f32.mrf.mxu0
        %v732 = vadd.f32 %v688, %v731
        %733 = vmatprep.mubr.bf16.mxu0 0
        %734 = vmatmul.mubr.bf16.gmra.mxu0 %v624
        %v735 = vpop.f32.mrf.mxu0
        %v736 = vadd.f32 %v684, %v735
        %v737 = vpop.f32.mrf.mxu0
        %v738 = vadd.f32 %v688, %v737
        %v739 = vpop.f32.mrf.mxu0
        %v740 = vadd.f32 %v684, %v739
        %v741 = vpop.f32.mrf.mxu0
        %v742 = vadd.f32 %v688, %v741
        %743 = vmatprep.mubr.bf16.mxu0 0
        %744 = vmatmul.mubr.bf16.gmra.mxu0 %v625
        %v745 = vpop.f32.mrf.mxu0
        %v746 = vadd.f32 %v684, %v745
        %v747 = vpop.f32.mrf.mxu0
        %v748 = vadd.f32 %v688, %v747
        %v749 = vpop.f32.mrf.mxu0
        %v750 = vadd.f32 %v684, %v749
        %v751 = vpop.f32.mrf.mxu0
        %v752 = vadd.f32 %v688, %v751
        %753 = vmatprep.mubr.bf16.mxu0 0
        %754 = vmatmul.mubr.bf16.gmra.mxu0 %v626
        %v755 = vpop.f32.mrf.mxu0
        %v756 = vadd.f32 %v684, %v755
        %v757 = vpop.f32.mrf.mxu0
        %v758 = vadd.f32 %v688, %v757
        %v759 = vpop.f32.mrf.mxu0
        %v760 = vadd.f32 %v684, %v759
        %v761 = vpop.f32.mrf.mxu0
        %v762 = vadd.f32 %v688, %v761
        %763 = vmatprep.mubr.bf16.mxu0 0
        %764 = vmatmul.mubr.bf16.gmra.mxu0 %v627
        %v765 = vpop.f32.mrf.mxu0
        %v766 = vadd.f32 %v684, %v765
        %v767 = vpop.f32.mrf.mxu0
        %v768 = vadd.f32 %v688, %v767
        %v769 = vpop.f32.mrf.mxu0
        %v770 = vadd.f32 %v684, %v769
        %v771 = vpop.f32.mrf.mxu0
        %v772 = vadd.f32 %v688, %v771
        %773 = vmatprep.mubr.bf16.mxu0 0
        %774 = vmatmul.mubr.bf16.gmra.mxu0 %v628
        %v775 = vpop.f32.mrf.mxu0
        %v776 = vadd.f32 %v684, %v775
        %v777 = vpop.f32.mrf.mxu0
        %v778 = vadd.f32 %v688, %v777
        %v779 = vpop.f32.mrf.mxu0
        %v780 = vadd.f32 %v684, %v779
        %v781 = vpop.f32.mrf.mxu0
        %v782 = vadd.f32 %v688, %v781
        %783 = vmatprep.mubr.bf16.mxu0 0
        %784 = vmatmul.mubr.bf16.gmra.mxu0 %v629
        %v785 = vpop.f32.mrf.mxu0
        %v786 = vadd.f32 %v684, %v785
        %v787 = vpop.f32.mrf.mxu0
        %v788 = vadd.f32 %v688, %v787
        %v789 = vpop.f32.mrf.mxu0
        %v790 = vadd.f32 %v684, %v789
        %v791 = vpop.f32.mrf.mxu0
        %v792 = vadd.f32 %v688, %v791
        %793 = vmatprep.mubr.bf16.mxu0 0
        %794 = vmatmul.mubr.bf16.gmra.mxu0 %v630
        %v795 = vpop.f32.mrf.mxu0
        %v796 = vadd.f32 %v684, %v795
        %v797 = vpop.f32.mrf.mxu0
        %v798 = vadd.f32 %v688, %v797
        %v799 = vpop.f32.mrf.mxu0
        %v800 = vadd.f32 %v684, %v799
        %v801 = vpop.f32.mrf.mxu0
        %v802 = vadd.f32 %v688, %v801
        %803 = vdwg.mxu0
        %v804 = vpack.c.bf16 %v730, %v726
        %v805 = vpack.c.bf16 %v740, %v736
        %v806 = vpack.c.bf16 %v750, %v746
        %v807 = vpack.c.bf16 %v760, %v756
        %v808 = vpack.c.bf16 %v770, %v766
        %v809 = vpack.c.bf16 %v780, %v776
        %v810 = vpack.c.bf16 %v790, %v786
        %v811 = vpack.c.bf16 %v800, %v796
        %v812 = vpack.c.bf16 %v732, %v728
        %v813 = vpack.c.bf16 %v742, %v738
        %v814 = vpack.c.bf16 %v752, %v748
        %v815 = vpack.c.bf16 %v762, %v758
        %v816 = vpack.c.bf16 %v772, %v768
        %v817 = vpack.c.bf16 %v782, %v778
        %v818 = vpack.c.bf16 %v792, %v788
        %v819 = vpack.c.bf16 %v802, %v798
        %v820 = vld [vmem:[%s517] sm:$0x1]
        %v822 = vlaneseq
        %v823 = vshrl.u32 %v822, 7
        %v824 = vsub.s32 0, %v823
        %v825 = vrot.slane %v820, %v824
        %827 = vmatprep.subr.bf16.mxu0 0
        %828 = vmatpush1.bf16.xpose.msra.mxu0 %v819
        %829 = vmatprep.subr.bf16.mxu0 0
        %830 = vmatpush1.bf16.xpose.msra.mxu0 %v818
        %831 = vmatprep.subr.bf16.mxu0 0
        %832 = vmatpush1.bf16.xpose.msra.mxu0 %v817
        %833 = vmatprep.subr.bf16.mxu0 0
        %834 = vmatpush1.bf16.xpose.msra.mxu0 %v816
        %835 = vmatprep.subr.bf16.mxu0 0
        %836 = vmatpush1.bf16.xpose.msra.mxu0 %v815
        %837 = vmatprep.subr.bf16.mxu0 0
        %838 = vmatpush1.bf16.xpose.msra.mxu0 %v814
        %839 = vmatprep.subr.bf16.mxu0 0
        %840 = vmatpush1.bf16.xpose.msra.mxu0 %v813
        %841 = vmatprep.subr.bf16.mxu0 0
        %842 = vmatpush1.bf16.xpose.msra.mxu0 %v812
        %843 = vmatprep.subr.bf16.mxu0 0
        %844 = vmatpush2.bf16.xpose.msra.mxu0 0
        %845 = vmatprep.subr.bf16.mxu0 0
        %846 = vmatpush2.bf16.xpose.msra.mxu0 0
        %847 = vmatprep.subr.bf16.mxu0 0
        %848 = vmatpush2.bf16.xpose.msra.mxu0 0
        %849 = vmatprep.subr.bf16.mxu0 0
        %850 = vmatpush2.bf16.xpose.msra.mxu0 0
        %851 = vmatprep.subr.bf16.mxu0 0
        %852 = vmatpush2.bf16.xpose.msra.mxu0 0
        %853 = vmatprep.subr.bf16.mxu0 0
        %854 = vmatpush2.bf16.xpose.msra.mxu0 0
        %855 = vmatprep.subr.bf16.mxu0 0
        %856 = vmatpush2.bf16.xpose.msra.mxu0 0
        %857 = vmatprep.subr.bf16.mxu0 0
        %858 = vmatpush2.bf16.xpose.msra.mxu0 0
        %859 = vmatprep.mubr.bf16.mxu0 0
        %860 = vmatmul.mubr.bf16.gmra.mxu0 %v804
        %v861 = vpop.f32.mrf.mxu0
        %v862 = vadd.f32 %v825, %v861
        %v863 = vpop.f32.mrf.mxu0
        %v864 = vpop.f32.mrf.mxu0
        %v865 = vadd.f32 %v825, %v864
        %v866 = vpop.f32.mrf.mxu0
        %867 = vmatprep.mubr.bf16.mxu0 0
        %868 = vmatmul.mubr.bf16.gmra.mxu0 %v805
        %v869 = vpop.f32.mrf.mxu0
        %v870 = vadd.f32 %v825, %v869
        %v871 = vpop.f32.mrf.mxu0
        %v872 = vpop.f32.mrf.mxu0
        %v873 = vadd.f32 %v825, %v872
        %v874 = vpop.f32.mrf.mxu0
        %875 = vmatprep.mubr.bf16.mxu0 0
        %876 = vmatmul.mubr.bf16.gmra.mxu0 %v806
        %v877 = vpop.f32.mrf.mxu0
        %v878 = vadd.f32 %v825, %v877
        %v879 = vpop.f32.mrf.mxu0
        %v880 = vpop.f32.mrf.mxu0
        %v881 = vadd.f32 %v825, %v880
        %v882 = vpop.f32.mrf.mxu0
        %883 = vmatprep.mubr.bf16.mxu0 0
        %884 = vmatmul.mubr.bf16.gmra.mxu0 %v807
        %v885 = vpop.f32.mrf.mxu0
        %v886 = vadd.f32 %v825, %v885
        %v887 = vpop.f32.mrf.mxu0
        %v888 = vpop.f32.mrf.mxu0
        %v889 = vadd.f32 %v825, %v888
        %v890 = vpop.f32.mrf.mxu0
        %891 = vmatprep.mubr.bf16.mxu0 0
        %892 = vmatmul.mubr.bf16.gmra.mxu0 %v808
        %v893 = vpop.f32.mrf.mxu0
        %v894 = vadd.f32 %v825, %v893
        %v895 = vpop.f32.mrf.mxu0
        %v896 = vpop.f32.mrf.mxu0
        %v897 = vadd.f32 %v825, %v896
        %v898 = vpop.f32.mrf.mxu0
        %899 = vmatprep.mubr.bf16.mxu0 0
        %900 = vmatmul.mubr.bf16.gmra.mxu0 %v809
        %v901 = vpop.f32.mrf.mxu0
        %v902 = vadd.f32 %v825, %v901
        %v903 = vpop.f32.mrf.mxu0
        %v904 = vpop.f32.mrf.mxu0
        %v905 = vadd.f32 %v825, %v904
        %v906 = vpop.f32.mrf.mxu0
        %907 = vmatprep.mubr.bf16.mxu0 0
        %908 = vmatmul.mubr.bf16.gmra.mxu0 %v810
        %v909 = vpop.f32.mrf.mxu0
        %v910 = vadd.f32 %v825, %v909
        %v911 = vpop.f32.mrf.mxu0
        %v912 = vpop.f32.mrf.mxu0
        %v913 = vadd.f32 %v825, %v912
        %v914 = vpop.f32.mrf.mxu0
        %915 = vmatprep.mubr.bf16.mxu0 0
        %916 = vmatmul.mubr.bf16.gmra.mxu0 %v811
        %v917 = vpop.f32.mrf.mxu0
        %v918 = vadd.f32 %v825, %v917
        %v919 = vpop.f32.mrf.mxu0
        %v920 = vpop.f32.mrf.mxu0
        %v921 = vadd.f32 %v825, %v920
        %v922 = vpop.f32.mrf.mxu0
        %923 = vdwg.mxu0
        %924 = vmax.xlane.f32.xlu0 %v862
        %v925 = vpop.xlane.xlu0 %924
        %926 = vmax.xlane.f32.xlu0 %v865
        %v927 = vpop.xlane.xlu0 %926
        %928 = vmax.xlane.f32.xlu0 %v870
        %v929 = vpop.xlane.xlu0 %928
        %930 = vmax.xlane.f32.xlu0 %v873
        %v931 = vpop.xlane.xlu0 %930
        %932 = vmax.xlane.f32.xlu0 %v878
        %v933 = vpop.xlane.xlu0 %932
        %934 = vmax.xlane.f32.xlu0 %v881
        %v935 = vpop.xlane.xlu0 %934
        %936 = vmax.xlane.f32.xlu0 %v886
        %v937 = vpop.xlane.xlu0 %936
        %938 = vmax.xlane.f32.xlu0 %v889
        %v939 = vpop.xlane.xlu0 %938
        %940 = vmax.xlane.f32.xlu0 %v894
        %v941 = vpop.xlane.xlu0 %940
        %942 = vmax.xlane.f32.xlu0 %v897
        %v943 = vpop.xlane.xlu0 %942
        %944 = vmax.xlane.f32.xlu0 %v902
        %v945 = vpop.xlane.xlu0 %944
        %946 = vmax.xlane.f32.xlu0 %v905
        %v947 = vpop.xlane.xlu0 %946
        %948 = vmax.xlane.f32.xlu0 %v910
        %v949 = vpop.xlane.xlu0 %948
        %950 = vmax.xlane.f32.xlu0 %v913
        %v951 = vpop.xlane.xlu0 %950
        %952 = vmax.xlane.f32.xlu0 %v918
        %v953 = vpop.xlane.xlu0 %952
        %954 = vmax.xlane.f32.xlu0 %v921
        %v955 = vpop.xlane.xlu0 %954
        %v956 = vsub.f32 %v862, %v925
        %v957 = vsub.f32 %v865, %v927
        %v958 = vsub.f32 %v870, %v929
        %v959 = vsub.f32 %v873, %v931
        %v960 = vsub.f32 %v878, %v933
        %v961 = vsub.f32 %v881, %v935
        %v962 = vsub.f32 %v886, %v937
        %v963 = vsub.f32 %v889, %v939
        %v964 = vsub.f32 %v894, %v941
        %v965 = vsub.f32 %v897, %v943
        %v966 = vsub.f32 %v902, %v945
        %v967 = vsub.f32 %v905, %v947
        %v968 = vsub.f32 %v910, %v949
        %v969 = vsub.f32 %v913, %v951
        %v970 = vsub.f32 %v918, %v953
        %v971 = vsub.f32 %v921, %v955
        %v972 = vmul.f32 %v956, 1.442695
        %v973 = vpow.pop %v972
        %v974 = vmul.f32 %v957, 1.442695
        %v975 = vpow.pop %v974
        %v976 = vmul.f32 %v958, 1.442695
        %v977 = vpow.pop %v976
        %v978 = vmul.f32 %v959, 1.442695
        %v979 = vpow.pop %v978
        %v980 = vmul.f32 %v960, 1.442695
        %v981 = vpow.pop %v980
        %v982 = vmul.f32 %v961, 1.442695
        %v983 = vpow.pop %v982
        %v984 = vmul.f32 %v962, 1.442695
        %v985 = vpow.pop %v984
        %v986 = vmul.f32 %v963, 1.442695
        %v987 = vpow.pop %v986
        %v988 = vmul.f32 %v964, 1.442695
        %v989 = vpow.pop %v988
        %v990 = vmul.f32 %v965, 1.442695
        %v991 = vpow.pop %v990
        %v992 = vmul.f32 %v966, 1.442695
        %v993 = vpow.pop %v992
        %v994 = vmul.f32 %v967, 1.442695
        %v995 = vpow.pop %v994
        %v996 = vmul.f32 %v968, 1.442695
        %v997 = vpow.pop %v996
        %v998 = vmul.f32 %v969, 1.442695
        %v999 = vpow.pop %v998
        %v1000 = vmul.f32 %v970, 1.442695
        %v1001 = vpow.pop %v1000
        %v1002 = vmul.f32 %v971, 1.442695
        %v1003 = vpow.pop %v1002
        %1004 = vadd.xlane.f32.xlu0 %v973
        %v1005 = vpop.xlane.xlu0 %1004
        %1006 = vadd.xlane.f32.xlu0 %v975
        %v1007 = vpop.xlane.xlu0 %1006
        %1008 = vadd.xlane.f32.xlu0 %v977
        %v1009 = vpop.xlane.xlu0 %1008
        %1010 = vadd.xlane.f32.xlu0 %v979
        %v1011 = vpop.xlane.xlu0 %1010
        %1012 = vadd.xlane.f32.xlu0 %v981
        %v1013 = vpop.xlane.xlu0 %1012
        %1014 = vadd.xlane.f32.xlu0 %v983
        %v1015 = vpop.xlane.xlu0 %1014
        %1016 = vadd.xlane.f32.xlu0 %v985
        %v1017 = vpop.xlane.xlu0 %1016
        %1018 = vadd.xlane.f32.xlu0 %v987
        %v1019 = vpop.xlane.xlu0 %1018
        %1020 = vadd.xlane.f32.xlu0 %v989
        %v1021 = vpop.xlane.xlu0 %1020
        %1022 = vadd.xlane.f32.xlu0 %v991
        %v1023 = vpop.xlane.xlu0 %1022
        %1024 = vadd.xlane.f32.xlu0 %v993
        %v1025 = vpop.xlane.xlu0 %1024
        %1026 = vadd.xlane.f32.xlu0 %v995
        %v1027 = vpop.xlane.xlu0 %1026
        %1028 = vadd.xlane.f32.xlu0 %v997
        %v1029 = vpop.xlane.xlu0 %1028
        %1030 = vadd.xlane.f32.xlu0 %v999
        %v1031 = vpop.xlane.xlu0 %1030
        %1032 = vadd.xlane.f32.xlu0 %v1001
        %v1033 = vpop.xlane.xlu0 %1032
        %1034 = vadd.xlane.f32.xlu0 %v1003
        %v1035 = vpop.xlane.xlu0 %1034
        %v1036 = vrcp.pop %v1005
        %v1037 = vrcp.pop %v1007
        %v1038 = vrcp.pop %v1009
        %v1039 = vrcp.pop %v1011
        %v1040 = vrcp.pop %v1013
        %v1041 = vrcp.pop %v1015
        %v1042 = vrcp.pop %v1017
        %v1043 = vrcp.pop %v1019
        %v1044 = vrcp.pop %v1021
        %v1045 = vrcp.pop %v1023
        %v1046 = vrcp.pop %v1025
        %v1047 = vrcp.pop %v1027
        %v1048 = vrcp.pop %v1029
        %v1049 = vrcp.pop %v1031
        %v1050 = vrcp.pop %v1033
        %v1051 = vrcp.pop %v1035
        %v1052 = vmul.f32 %v973, %v1036
        %v1053 = vmul.f32 %v975, %v1037
        %v1054 = vmul.f32 %v977, %v1038
        %v1055 = vmul.f32 %v979, %v1039
        %v1056 = vmul.f32 %v981, %v1040
        %v1057 = vmul.f32 %v983, %v1041
        %v1058 = vmul.f32 %v985, %v1042
        %v1059 = vmul.f32 %v987, %v1043
        %v1060 = vmul.f32 %v989, %v1044
        %v1061 = vmul.f32 %v991, %v1045
        %v1062 = vmul.f32 %v993, %v1046
        %v1063 = vmul.f32 %v995, %v1047
        %v1064 = vmul.f32 %v997, %v1048
        %v1065 = vmul.f32 %v999, %v1049
        %v1066 = vmul.f32 %v1001, %v1050
        %v1067 = vmul.f32 %v1003, %v1051
        %v1068 = vld [vmem:[#allocation5] sm:$0xff]
        %v1069 = vld [vmem:[#allocation5 + $0x8] sm:$0xff]
        %v1070 = vld [vmem:[#allocation5 + $0x10] sm:$0xff]
        %v1071 = vld [vmem:[#allocation5 + $0x18] sm:$0xff]
        %v1072 = vld [vmem:[#allocation5 + $0x20] sm:$0xff]
        %v1073 = vld [vmem:[#allocation5 + $0x28] sm:$0xff]
        %v1074 = vld [vmem:[#allocation5 + $0x30] sm:$0xff]
        %v1075 = vld [vmem:[#allocation5 + $0x38] sm:$0xff]
        %v1076 = vld [vmem:[#allocation5 + $0x40] sm:$0xff]
        %v1077 = vld [vmem:[#allocation5 + $0x48] sm:$0xff]
        %v1078 = vld [vmem:[#allocation5 + $0x50] sm:$0xff]
        %v1079 = vld [vmem:[#allocation5 + $0x58] sm:$0xff]
        %v1080 = vld [vmem:[#allocation5 + $0x60] sm:$0xff]
        %v1081 = vld [vmem:[#allocation5 + $0x68] sm:$0xff]
        %v1082 = vld [vmem:[#allocation5 + $0x70] sm:$0xff]
        %v1083 = vld [vmem:[#allocation5 + $0x78] sm:$0xff]
        %vm1084 = vcmp.gt.f32.partialorder %v1068, 0.0
        %vm1085 = vcmp.gt.f32.partialorder %v1069, 0.0
        %vm1086 = vcmp.gt.f32.partialorder %v1070, 0.0
        %vm1087 = vcmp.gt.f32.partialorder %v1071, 0.0
        %vm1088 = vcmp.gt.f32.partialorder %v1072, 0.0
        %vm1089 = vcmp.gt.f32.partialorder %v1073, 0.0
        %vm1090 = vcmp.gt.f32.partialorder %v1074, 0.0
        %vm1091 = vcmp.gt.f32.partialorder %v1075, 0.0
        %vm1092 = vcmp.gt.f32.partialorder %v1076, 0.0
        %vm1093 = vcmp.gt.f32.partialorder %v1077, 0.0
        %vm1094 = vcmp.gt.f32.partialorder %v1078, 0.0
        %vm1095 = vcmp.gt.f32.partialorder %v1079, 0.0
        %vm1096 = vcmp.gt.f32.partialorder %v1080, 0.0
        %vm1097 = vcmp.gt.f32.partialorder %v1081, 0.0
        %vm1098 = vcmp.gt.f32.partialorder %v1082, 0.0
        %vm1099 = vcmp.gt.f32.partialorder %v1083, 0.0
        %v1100 = vsel %vm1084, 1.0, %v1052
        %v1101 = vsel %vm1085, 1.0, %v1053
        %v1102 = vsel %vm1086, 1.0, %v1054
        %v1103 = vsel %vm1087, 1.0, %v1055
        %v1104 = vsel %vm1088, 1.0, %v1056
        %v1105 = vsel %vm1089, 1.0, %v1057
        %v1106 = vsel %vm1090, 1.0, %v1058
        %v1107 = vsel %vm1091, 1.0, %v1059
        %v1108 = vsel %vm1092, 1.0, %v1060
        %v1109 = vsel %vm1093, 1.0, %v1061
        %v1110 = vsel %vm1094, 1.0, %v1062
        %v1111 = vsel %vm1095, 1.0, %v1063
        %v1112 = vsel %vm1096, 1.0, %v1064
        %v1113 = vsel %vm1097, 1.0, %v1065
        %v1114 = vsel %vm1098, 1.0, %v1066
        %v1115 = vsel %vm1099, 1.0, %v1067
        %v1116 = vld [vmem:[%s605] sm:$0xff]
        %v1117 = vld [vmem:[%s605 + $0x8] sm:$0xff]
        %v1118 = vld [vmem:[%s605 + $0x10] sm:$0xff]
        %v1119 = vld [vmem:[%s605 + $0x18] sm:$0xff]
        %v1120 = vld [vmem:[%s605 + $0x20] sm:$0xff]
        %v1121 = vld [vmem:[%s605 + $0x28] sm:$0xff]
        %v1122 = vld [vmem:[%s605 + $0x30] sm:$0xff]
        %v1123 = vld [vmem:[%s605 + $0x38] sm:$0xff]
        %v1124 = vld [vmem:[%s605 + $0x40] sm:$0xff]
        %v1125 = vld [vmem:[%s605 + $0x48] sm:$0xff]
        %v1126 = vld [vmem:[%s605 + $0x50] sm:$0xff]
        %v1127 = vld [vmem:[%s605 + $0x58] sm:$0xff]
        %v1128 = vld [vmem:[%s605 + $0x60] sm:$0xff]
        %v1129 = vld [vmem:[%s605 + $0x68] sm:$0xff]
        %v1130 = vld [vmem:[%s605 + $0x70] sm:$0xff]
        %v1131 = vld [vmem:[%s605 + $0x78] sm:$0xff]
        %1133 = vset.pattern.permute.xlu0 0
        %1134 = vperm.xlu0 %1133, %v1116
        %v1135 = vpop.permute.xlu0 %1134
        %1138 = vset.pattern.permute.xlu0 0
        %1139 = vperm.xlu0 %1138, %v1117
        %v1140 = vpop.permute.xlu0 %1139
        %1143 = vset.pattern.permute.xlu0 0
        %1144 = vperm.xlu0 %1143, %v1118
        %v1145 = vpop.permute.xlu0 %1144
        %1148 = vset.pattern.permute.xlu0 0
        %1149 = vperm.xlu0 %1148, %v1119
        %v1150 = vpop.permute.xlu0 %1149
        %1153 = vset.pattern.permute.xlu0 0
        %1154 = vperm.xlu0 %1153, %v1120
        %v1155 = vpop.permute.xlu0 %1154
        %1158 = vset.pattern.permute.xlu0 0
        %1159 = vperm.xlu0 %1158, %v1121
        %v1160 = vpop.permute.xlu0 %1159
        %1163 = vset.pattern.permute.xlu0 0
        %1164 = vperm.xlu0 %1163, %v1122
        %v1165 = vpop.permute.xlu0 %1164
        %1168 = vset.pattern.permute.xlu0 0
        %1169 = vperm.xlu0 %1168, %v1123
        %v1170 = vpop.permute.xlu0 %1169
        %1173 = vset.pattern.permute.xlu0 0
        %1174 = vperm.xlu0 %1173, %v1124
        %v1175 = vpop.permute.xlu0 %1174
        %1178 = vset.pattern.permute.xlu0 0
        %1179 = vperm.xlu0 %1178, %v1125
        %v1180 = vpop.permute.xlu0 %1179
        %1183 = vset.pattern.permute.xlu0 0
        %1184 = vperm.xlu0 %1183, %v1126
        %v1185 = vpop.permute.xlu0 %1184
        %1188 = vset.pattern.permute.xlu0 0
        %1189 = vperm.xlu0 %1188, %v1127
        %v1190 = vpop.permute.xlu0 %1189
        %1193 = vset.pattern.permute.xlu0 0
        %1194 = vperm.xlu0 %1193, %v1128
        %v1195 = vpop.permute.xlu0 %1194
        %1198 = vset.pattern.permute.xlu0 0
        %1199 = vperm.xlu0 %1198, %v1129
        %v1200 = vpop.permute.xlu0 %1199
        %1203 = vset.pattern.permute.xlu0 0
        %1204 = vperm.xlu0 %1203, %v1130
        %v1205 = vpop.permute.xlu0 %1204
        %1208 = vset.pattern.permute.xlu0 0
        %1209 = vperm.xlu0 %1208, %v1131
        %v1210 = vpop.permute.xlu0 %1209
        %v1212 = vmul.f32 %v1100, %v1135
        %v1213 = vmul.f32 %v1101, %v1140
        %v1214 = vmul.f32 %v1102, %v1145
        %v1215 = vmul.f32 %v1103, %v1150
        %v1216 = vmul.f32 %v1104, %v1155
        %v1217 = vmul.f32 %v1105, %v1160
        %v1218 = vmul.f32 %v1106, %v1165
        %v1219 = vmul.f32 %v1107, %v1170
        %v1220 = vmul.f32 %v1108, %v1175
        %v1221 = vmul.f32 %v1109, %v1180
        %v1222 = vmul.f32 %v1110, %v1185
        %v1223 = vmul.f32 %v1111, %v1190
        %v1224 = vmul.f32 %v1112, %v1195
        %v1225 = vmul.f32 %v1113, %v1200
        %v1226 = vmul.f32 %v1114, %v1205
        %v1227 = vmul.f32 %v1115, %v1210
        %1228 = vst [vmem:[%s581] sm:$0xff] %v1212
        %1229 = vst [vmem:[%s581 + $0x8] sm:$0xff] %v1213
        %1230 = vst [vmem:[%s581 + $0x10] sm:$0xff] %v1214
        %1231 = vst [vmem:[%s581 + $0x18] sm:$0xff] %v1215
        %1232 = vst [vmem:[%s581 + $0x20] sm:$0xff] %v1216
        %1233 = vst [vmem:[%s581 + $0x28] sm:$0xff] %v1217
        %1234 = vst [vmem:[%s581 + $0x30] sm:$0xff] %v1218
        %1235 = vst [vmem:[%s581 + $0x38] sm:$0xff] %v1219
        %1236 = vst [vmem:[%s581 + $0x40] sm:$0xff] %v1220
        %1237 = vst [vmem:[%s581 + $0x48] sm:$0xff] %v1221
        %1238 = vst [vmem:[%s581 + $0x50] sm:$0xff] %v1222
        %1239 = vst [vmem:[%s581 + $0x58] sm:$0xff] %v1223
        %1240 = vst [vmem:[%s581 + $0x60] sm:$0xff] %v1224
        %1241 = vst [vmem:[%s581 + $0x68] sm:$0xff] %v1225
        %1242 = vst [vmem:[%s581 + $0x70] sm:$0xff] %v1226
        %1243 = vst [vmem:[%s581 + $0x78] sm:$0xff] %v1227
        %v1244 = vld [vmem:[%s505] sm:$0xff]
        %v1245 = vld [vmem:[%s505 + $0x8] sm:$0xff]
        %v1246 = vld [vmem:[%s505 + $0x10] sm:$0xff]
        %v1247 = vld [vmem:[%s505 + $0x18] sm:$0xff]
        %v1248 = vld [vmem:[%s505 + $0x20] sm:$0xff]
        %v1249 = vld [vmem:[%s505 + $0x28] sm:$0xff]
        %v1250 = vld [vmem:[%s505 + $0x30] sm:$0xff]
        %v1251 = vld [vmem:[%s505 + $0x38] sm:$0xff]
        %v1252 = vld [vmem:[%s505 + $0x40] sm:$0xff]
        %v1253 = vld [vmem:[%s505 + $0x48] sm:$0xff]
        %v1254 = vld [vmem:[%s505 + $0x50] sm:$0xff]
        %v1255 = vld [vmem:[%s505 + $0x58] sm:$0xff]
        %v1256 = vld [vmem:[%s505 + $0x60] sm:$0xff]
        %v1257 = vld [vmem:[%s505 + $0x68] sm:$0xff]
        %v1258 = vld [vmem:[%s505 + $0x70] sm:$0xff]
        %v1259 = vld [vmem:[%s505 + $0x78] sm:$0xff]
        %1260 = vadd.xlane.f32.xlu0 %v1244
        %v1261 = vpop.xlane.xlu0 %1260
        %1262 = vadd.xlane.f32.xlu0 %v1245
        %v1263 = vpop.xlane.xlu0 %1262
        %1264 = vadd.xlane.f32.xlu0 %v1246
        %v1265 = vpop.xlane.xlu0 %1264
        %1266 = vadd.xlane.f32.xlu0 %v1247
        %v1267 = vpop.xlane.xlu0 %1266
        %1268 = vadd.xlane.f32.xlu0 %v1248
        %v1269 = vpop.xlane.xlu0 %1268
        %1270 = vadd.xlane.f32.xlu0 %v1249
        %v1271 = vpop.xlane.xlu0 %1270
        %1272 = vadd.xlane.f32.xlu0 %v1250
        %v1273 = vpop.xlane.xlu0 %1272
        %1274 = vadd.xlane.f32.xlu0 %v1251
        %v1275 = vpop.xlane.xlu0 %1274
        %1276 = vadd.xlane.f32.xlu0 %v1252
        %v1277 = vpop.xlane.xlu0 %1276
        %1278 = vadd.xlane.f32.xlu0 %v1253
        %v1279 = vpop.xlane.xlu0 %1278
        %1280 = vadd.xlane.f32.xlu0 %v1254
        %v1281 = vpop.xlane.xlu0 %1280
        %1282 = vadd.xlane.f32.xlu0 %v1255
        %v1283 = vpop.xlane.xlu0 %1282
        %1284 = vadd.xlane.f32.xlu0 %v1256
        %v1285 = vpop.xlane.xlu0 %1284
        %1286 = vadd.xlane.f32.xlu0 %v1257
        %v1287 = vpop.xlane.xlu0 %1286
        %1288 = vadd.xlane.f32.xlu0 %v1258
        %v1289 = vpop.xlane.xlu0 %1288
        %1290 = vadd.xlane.f32.xlu0 %v1259
        %v1291 = vpop.xlane.xlu0 %1290
        %v1292 = vadd.f32 %v1261, 1.0
        %v1293 = vadd.f32 %v1263, 1.0
        %v1294 = vadd.f32 %v1265, 1.0
        %v1295 = vadd.f32 %v1267, 1.0
        %v1296 = vadd.f32 %v1269, 1.0
        %v1297 = vadd.f32 %v1271, 1.0
        %v1298 = vadd.f32 %v1273, 1.0
        %v1299 = vadd.f32 %v1275, 1.0
        %v1300 = vadd.f32 %v1277, 1.0
        %v1301 = vadd.f32 %v1279, 1.0
        %v1302 = vadd.f32 %v1281, 1.0
        %v1303 = vadd.f32 %v1283, 1.0
        %v1304 = vadd.f32 %v1285, 1.0
        %v1305 = vadd.f32 %v1287, 1.0
        %v1306 = vadd.f32 %v1289, 1.0
        %v1307 = vadd.f32 %v1291, 1.0
        %v1308 = vrcp.pop %v1292
        %v1309 = vrcp.pop %v1293
        %v1310 = vrcp.pop %v1294
        %v1311 = vrcp.pop %v1295
        %v1312 = vrcp.pop %v1296
        %v1313 = vrcp.pop %v1297
        %v1314 = vrcp.pop %v1298
        %v1315 = vrcp.pop %v1299
        %v1316 = vrcp.pop %v1300
        %v1317 = vrcp.pop %v1301
        %v1318 = vrcp.pop %v1302
        %v1319 = vrcp.pop %v1303
        %v1320 = vrcp.pop %v1304
        %v1321 = vrcp.pop %v1305
        %v1322 = vrcp.pop %v1306
        %v1323 = vrcp.pop %v1307
        %1324 = vadd.xlane.f32.xlu0 %v1212
        %v1325 = vpop.xlane.xlu0 %1324
        %1326 = vadd.xlane.f32.xlu0 %v1213
        %v1327 = vpop.xlane.xlu0 %1326
        %1328 = vadd.xlane.f32.xlu0 %v1214
        %v1329 = vpop.xlane.xlu0 %1328
        %1330 = vadd.xlane.f32.xlu0 %v1215
        %v1331 = vpop.xlane.xlu0 %1330
        %1332 = vadd.xlane.f32.xlu0 %v1216
        %v1333 = vpop.xlane.xlu0 %1332
        %1334 = vadd.xlane.f32.xlu0 %v1217
        %v1335 = vpop.xlane.xlu0 %1334
        %1336 = vadd.xlane.f32.xlu0 %v1218
        %v1337 = vpop.xlane.xlu0 %1336
        %1338 = vadd.xlane.f32.xlu0 %v1219
        %v1339 = vpop.xlane.xlu0 %1338
        %1340 = vadd.xlane.f32.xlu0 %v1220
        %v1341 = vpop.xlane.xlu0 %1340
        %1342 = vadd.xlane.f32.xlu0 %v1221
        %v1343 = vpop.xlane.xlu0 %1342
        %1344 = vadd.xlane.f32.xlu0 %v1222
        %v1345 = vpop.xlane.xlu0 %1344
        %1346 = vadd.xlane.f32.xlu0 %v1223
        %v1347 = vpop.xlane.xlu0 %1346
        %1348 = vadd.xlane.f32.xlu0 %v1224
        %v1349 = vpop.xlane.xlu0 %1348
        %1350 = vadd.xlane.f32.xlu0 %v1225
        %v1351 = vpop.xlane.xlu0 %1350
        %1352 = vadd.xlane.f32.xlu0 %v1226
        %v1353 = vpop.xlane.xlu0 %1352
        %1354 = vadd.xlane.f32.xlu0 %v1227
        %v1355 = vpop.xlane.xlu0 %1354
        %v1356 = vadd.f32 %v1325, 1.0
        %v1357 = vadd.f32 %v1327, 1.0
        %v1358 = vadd.f32 %v1329, 1.0
        %v1359 = vadd.f32 %v1331, 1.0
        %v1360 = vadd.f32 %v1333, 1.0
        %v1361 = vadd.f32 %v1335, 1.0
        %v1362 = vadd.f32 %v1337, 1.0
        %v1363 = vadd.f32 %v1339, 1.0
        %v1364 = vadd.f32 %v1341, 1.0
        %v1365 = vadd.f32 %v1343, 1.0
        %v1366 = vadd.f32 %v1345, 1.0
        %v1367 = vadd.f32 %v1347, 1.0
        %v1368 = vadd.f32 %v1349, 1.0
        %v1369 = vadd.f32 %v1351, 1.0
        %v1370 = vadd.f32 %v1353, 1.0
        %v1371 = vadd.f32 %v1355, 1.0
        %v1372 = vrcp.pop %v1356
        %v1373 = vrcp.pop %v1357
        %v1374 = vrcp.pop %v1358
        %v1375 = vrcp.pop %v1359
        %v1376 = vrcp.pop %v1360
        %v1377 = vrcp.pop %v1361
        %v1378 = vrcp.pop %v1362
        %v1379 = vrcp.pop %v1363
        %v1380 = vrcp.pop %v1364
        %v1381 = vrcp.pop %v1365
        %v1382 = vrcp.pop %v1366
        %v1383 = vrcp.pop %v1367
        %v1384 = vrcp.pop %v1368
        %v1385 = vrcp.pop %v1369
        %v1386 = vrcp.pop %v1370
        %v1387 = vrcp.pop %v1371
        %v1388 = vpack.c.bf16 %v1245, %v1244
        %v1389 = vpack.c.bf16 %v1247, %v1246
        %v1390 = vpack.c.bf16 %v1249, %v1248
        %v1391 = vpack.c.bf16 %v1251, %v1250
        %v1392 = vpack.c.bf16 %v1253, %v1252
        %v1393 = vpack.c.bf16 %v1255, %v1254
        %v1394 = vpack.c.bf16 %v1257, %v1256
        %v1395 = vpack.c.bf16 %v1259, %v1258
        %v1396 = vpack.c.bf16 %v1213, %v1212
        %v1397 = vpack.c.bf16 %v1215, %v1214
        %v1398 = vpack.c.bf16 %v1217, %v1216
        %v1399 = vpack.c.bf16 %v1219, %v1218
        %v1400 = vpack.c.bf16 %v1221, %v1220
        %v1401 = vpack.c.bf16 %v1223, %v1222
        %v1402 = vpack.c.bf16 %v1225, %v1224
        %v1403 = vpack.c.bf16 %v1227, %v1226
        %v1404 = vld [vmem:[%s5] sm:$0x1]
        %v1405 = vld [vmem:[#allocation11] sm:$0xff]
        %v1406 = vld [vmem:[#allocation11 + $0x8] sm:$0xff]
        %v1407 = vld [vmem:[#allocation11 + $0x10] sm:$0xff]
        %v1408 = vld [vmem:[#allocation11 + $0x18] sm:$0xff]
        %v1409 = vld [vmem:[#allocation11 + $0x20] sm:$0xff]
        %v1410 = vld [vmem:[#allocation11 + $0x28] sm:$0xff]
        %v1411 = vld [vmem:[#allocation11 + $0x30] sm:$0xff]
        %v1412 = vld [vmem:[#allocation11 + $0x38] sm:$0xff]
        %v1413 = vld [vmem:[#allocation11 + $0x40] sm:$0xff]
        %v1414 = vld [vmem:[#allocation11 + $0x48] sm:$0xff]
        %v1415 = vld [vmem:[#allocation11 + $0x50] sm:$0xff]
        %v1416 = vld [vmem:[#allocation11 + $0x58] sm:$0xff]
        %v1417 = vld [vmem:[#allocation11 + $0x60] sm:$0xff]
        %v1418 = vld [vmem:[#allocation11 + $0x68] sm:$0xff]
        %v1419 = vld [vmem:[#allocation11 + $0x70] sm:$0xff]
        %v1420 = vld [vmem:[#allocation11 + $0x78] sm:$0xff]
        %v1421 = vld [vmem:[#allocation11 + $0x80] sm:$0xff]
        %v1422 = vld [vmem:[#allocation11 + $0x88] sm:$0xff]
        %v1423 = vld [vmem:[#allocation11 + $0x90] sm:$0xff]
        %v1424 = vld [vmem:[#allocation11 + $0x98] sm:$0xff]
        %v1425 = vld [vmem:[#allocation11 + $0xa0] sm:$0xff]
        %v1426 = vld [vmem:[#allocation11 + $0xa8] sm:$0xff]
        %v1427 = vld [vmem:[#allocation11 + $0xb0] sm:$0xff]
        %v1428 = vld [vmem:[#allocation11 + $0xb8] sm:$0xff]
        %v1429 = vld [vmem:[#allocation11 + $0xc0] sm:$0xff]
        %v1430 = vld [vmem:[#allocation11 + $0xc8] sm:$0xff]
        %v1431 = vld [vmem:[#allocation11 + $0xd0] sm:$0xff]
        %v1432 = vld [vmem:[#allocation11 + $0xd8] sm:$0xff]
        %v1433 = vld [vmem:[#allocation11 + $0xe0] sm:$0xff]
        %v1434 = vld [vmem:[#allocation11 + $0xe8] sm:$0xff]
        %v1435 = vld [vmem:[#allocation11 + $0xf0] sm:$0xff]
        %v1436 = vld [vmem:[#allocation11 + $0xf8] sm:$0xff]
        %v1437 = vld [vmem:[#allocation11 + $0x100] sm:$0xff]
        %v1438 = vld [vmem:[#allocation11 + $0x108] sm:$0xff]
        %v1439 = vld [vmem:[#allocation11 + $0x110] sm:$0xff]
        %v1440 = vld [vmem:[#allocation11 + $0x118] sm:$0xff]
        %v1441 = vld [vmem:[#allocation11 + $0x120] sm:$0xff]
        %v1442 = vld [vmem:[#allocation11 + $0x128] sm:$0xff]
        %v1443 = vld [vmem:[#allocation11 + $0x130] sm:$0xff]
        %v1444 = vld [vmem:[#allocation11 + $0x138] sm:$0xff]
        %v1445 = vld [vmem:[#allocation11 + $0x140] sm:$0xff]
        %v1446 = vld [vmem:[#allocation11 + $0x148] sm:$0xff]
        %v1447 = vld [vmem:[#allocation11 + $0x150] sm:$0xff]
        %v1448 = vld [vmem:[#allocation11 + $0x158] sm:$0xff]
        %v1449 = vld [vmem:[#allocation11 + $0x160] sm:$0xff]
        %v1450 = vld [vmem:[#allocation11 + $0x168] sm:$0xff]
        %v1451 = vld [vmem:[#allocation11 + $0x170] sm:$0xff]
        %v1452 = vld [vmem:[#allocation11 + $0x178] sm:$0xff]
        %v1453 = vld [vmem:[#allocation11 + $0x180] sm:$0xff]
        %v1454 = vld [vmem:[#allocation11 + $0x188] sm:$0xff]
        %v1455 = vld [vmem:[#allocation11 + $0x190] sm:$0xff]
        %v1456 = vld [vmem:[#allocation11 + $0x198] sm:$0xff]
        %v1457 = vld [vmem:[#allocation11 + $0x1a0] sm:$0xff]
        %v1458 = vld [vmem:[#allocation11 + $0x1a8] sm:$0xff]
        %v1459 = vld [vmem:[#allocation11 + $0x1b0] sm:$0xff]
        %v1460 = vld [vmem:[#allocation11 + $0x1b8] sm:$0xff]
        %v1461 = vld [vmem:[#allocation11 + $0x1c0] sm:$0xff]
        %v1462 = vld [vmem:[#allocation11 + $0x1c8] sm:$0xff]
        %v1463 = vld [vmem:[#allocation11 + $0x1d0] sm:$0xff]
        %v1464 = vld [vmem:[#allocation11 + $0x1d8] sm:$0xff]
        %v1465 = vld [vmem:[#allocation11 + $0x1e0] sm:$0xff]
        %v1466 = vld [vmem:[#allocation11 + $0x1e8] sm:$0xff]
        %v1467 = vld [vmem:[#allocation11 + $0x1f0] sm:$0xff]
        %v1468 = vld [vmem:[#allocation11 + $0x1f8] sm:$0xff]
        %v1469 = vpack.c.bf16 %v1407, %v1405
        %v1470 = vpack.c.bf16 %v1408, %v1406
        %v1471 = vpack.c.bf16 %v1411, %v1409
        %v1472 = vpack.c.bf16 %v1412, %v1410
        %v1473 = vpack.c.bf16 %v1415, %v1413
        %v1474 = vpack.c.bf16 %v1416, %v1414
        %v1475 = vpack.c.bf16 %v1419, %v1417
        %v1476 = vpack.c.bf16 %v1420, %v1418
        %v1477 = vpack.c.bf16 %v1423, %v1421
        %v1478 = vpack.c.bf16 %v1424, %v1422
        %v1479 = vpack.c.bf16 %v1427, %v1425
        %v1480 = vpack.c.bf16 %v1428, %v1426
        %v1481 = vpack.c.bf16 %v1431, %v1429
        %v1482 = vpack.c.bf16 %v1432, %v1430
        %v1483 = vpack.c.bf16 %v1435, %v1433
        %v1484 = vpack.c.bf16 %v1436, %v1434
        %v1485 = vpack.c.bf16 %v1439, %v1437
        %v1486 = vpack.c.bf16 %v1440, %v1438
        %v1487 = vpack.c.bf16 %v1443, %v1441
        %v1488 = vpack.c.bf16 %v1444, %v1442
        %v1489 = vpack.c.bf16 %v1447, %v1445
        %v1490 = vpack.c.bf16 %v1448, %v1446
        %v1491 = vpack.c.bf16 %v1451, %v1449
        %v1492 = vpack.c.bf16 %v1452, %v1450
        %v1493 = vpack.c.bf16 %v1455, %v1453
        %v1494 = vpack.c.bf16 %v1456, %v1454
        %v1495 = vpack.c.bf16 %v1459, %v1457
        %v1496 = vpack.c.bf16 %v1460, %v1458
        %v1497 = vpack.c.bf16 %v1463, %v1461
        %v1498 = vpack.c.bf16 %v1464, %v1462
        %v1499 = vpack.c.bf16 %v1467, %v1465
        %v1500 = vpack.c.bf16 %v1468, %v1466
        %v1501 = vld [vmem:[#allocation9] sm:$0xff]
        %v1502 = vld [vmem:[#allocation9 + $0x8] sm:$0xff]
        %v1503 = vld [vmem:[#allocation9 + $0x10] sm:$0xff]
        %v1504 = vld [vmem:[#allocation9 + $0x18] sm:$0xff]
        %v1505 = vld [vmem:[#allocation9 + $0x20] sm:$0xff]
        %v1506 = vld [vmem:[#allocation9 + $0x28] sm:$0xff]
        %v1507 = vld [vmem:[#allocation9 + $0x30] sm:$0xff]
        %v1508 = vld [vmem:[#allocation9 + $0x38] sm:$0xff]
        %v1509 = vld [vmem:[#allocation9 + $0x40] sm:$0xff]
        %v1510 = vld [vmem:[#allocation9 + $0x48] sm:$0xff]
        %v1511 = vld [vmem:[#allocation9 + $0x50] sm:$0xff]
        %v1512 = vld [vmem:[#allocation9 + $0x58] sm:$0xff]
        %v1513 = vld [vmem:[#allocation9 + $0x60] sm:$0xff]
        %v1514 = vld [vmem:[#allocation9 + $0x68] sm:$0xff]
        %v1515 = vld [vmem:[#allocation9 + $0x70] sm:$0xff]
        %v1516 = vld [vmem:[#allocation9 + $0x78] sm:$0xff]
        %v1517 = vld [vmem:[#allocation9 + $0x80] sm:$0xff]
        %v1518 = vld [vmem:[#allocation9 + $0x88] sm:$0xff]
        %v1519 = vld [vmem:[#allocation9 + $0x90] sm:$0xff]
        %v1520 = vld [vmem:[#allocation9 + $0x98] sm:$0xff]
        %v1521 = vld [vmem:[#allocation9 + $0xa0] sm:$0xff]
        %v1522 = vld [vmem:[#allocation9 + $0xa8] sm:$0xff]
        %v1523 = vld [vmem:[#allocation9 + $0xb0] sm:$0xff]
        %v1524 = vld [vmem:[#allocation9 + $0xb8] sm:$0xff]
        %v1525 = vld [vmem:[#allocation9 + $0xc0] sm:$0xff]
        %v1526 = vld [vmem:[#allocation9 + $0xc8] sm:$0xff]
        %v1527 = vld [vmem:[#allocation9 + $0xd0] sm:$0xff]
        %v1528 = vld [vmem:[#allocation9 + $0xd8] sm:$0xff]
        %v1529 = vld [vmem:[#allocation9 + $0xe0] sm:$0xff]
        %v1530 = vld [vmem:[#allocation9 + $0xe8] sm:$0xff]
        %v1531 = vld [vmem:[#allocation9 + $0xf0] sm:$0xff]
        %v1532 = vld [vmem:[#allocation9 + $0xf8] sm:$0xff]
        %v1533 = vld [vmem:[#allocation9 + $0x100] sm:$0xff]
        %v1534 = vld [vmem:[#allocation9 + $0x108] sm:$0xff]
        %v1535 = vld [vmem:[#allocation9 + $0x110] sm:$0xff]
        %v1536 = vld [vmem:[#allocation9 + $0x118] sm:$0xff]
        %v1537 = vld [vmem:[#allocation9 + $0x120] sm:$0xff]
        %v1538 = vld [vmem:[#allocation9 + $0x128] sm:$0xff]
        %v1539 = vld [vmem:[#allocation9 + $0x130] sm:$0xff]
        %v1540 = vld [vmem:[#allocation9 + $0x138] sm:$0xff]
        %v1541 = vld [vmem:[#allocation9 + $0x140] sm:$0xff]
        %v1542 = vld [vmem:[#allocation9 + $0x148] sm:$0xff]
        %v1543 = vld [vmem:[#allocation9 + $0x150] sm:$0xff]
        %v1544 = vld [vmem:[#allocation9 + $0x158] sm:$0xff]
        %v1545 = vld [vmem:[#allocation9 + $0x160] sm:$0xff]
        %v1546 = vld [vmem:[#allocation9 + $0x168] sm:$0xff]
        %v1547 = vld [vmem:[#allocation9 + $0x170] sm:$0xff]
        %v1548 = vld [vmem:[#allocation9 + $0x178] sm:$0xff]
        %v1549 = vld [vmem:[#allocation9 + $0x180] sm:$0xff]
        %v1550 = vld [vmem:[#allocation9 + $0x188] sm:$0xff]
        %v1551 = vld [vmem:[#allocation9 + $0x190] sm:$0xff]
        %v1552 = vld [vmem:[#allocation9 + $0x198] sm:$0xff]
        %v1553 = vld [vmem:[#allocation9 + $0x1a0] sm:$0xff]
        %v1554 = vld [vmem:[#allocation9 + $0x1a8] sm:$0xff]
        %v1555 = vld [vmem:[#allocation9 + $0x1b0] sm:$0xff]
        %v1556 = vld [vmem:[#allocation9 + $0x1b8] sm:$0xff]
        %v1557 = vld [vmem:[#allocation9 + $0x1c0] sm:$0xff]
        %v1558 = vld [vmem:[#allocation9 + $0x1c8] sm:$0xff]
        %v1559 = vld [vmem:[#allocation9 + $0x1d0] sm:$0xff]
        %v1560 = vld [vmem:[#allocation9 + $0x1d8] sm:$0xff]
        %v1561 = vld [vmem:[#allocation9 + $0x1e0] sm:$0xff]
        %v1562 = vld [vmem:[#allocation9 + $0x1e8] sm:$0xff]
        %v1563 = vld [vmem:[#allocation9 + $0x1f0] sm:$0xff]
        %v1564 = vld [vmem:[#allocation9 + $0x1f8] sm:$0xff]
        %v1565 = vld [vmem:[%s9] sm:$0x3]
        %1566 = vmatprep.subr.bf16.mxu0 0
        %1567 = vmatpush1.bf16.msra.mxu0 %v630
        %1568 = vmatprep.subr.bf16.mxu0 0
        %1569 = vmatpush1.bf16.msra.mxu0 %v629
        %1570 = vmatprep.subr.bf16.mxu0 0
        %1571 = vmatpush1.bf16.msra.mxu0 %v628
        %1572 = vmatprep.subr.bf16.mxu0 0
        %1573 = vmatpush1.bf16.msra.mxu0 %v627
        %1574 = vmatprep.subr.bf16.mxu0 0
        %1575 = vmatpush1.bf16.msra.mxu0 %v626
        %1576 = vmatprep.subr.bf16.mxu0 0
        %1577 = vmatpush1.bf16.msra.mxu0 %v625
        %1578 = vmatprep.subr.bf16.mxu0 0
        %1579 = vmatpush1.bf16.msra.mxu0 %v624
        %1580 = vmatprep.subr.bf16.mxu0 0
        %1581 = vmatpush1.bf16.msra.mxu0 %v623
        %1582 = vmatprep.subr.bf16.mxu0 0
        %1583 = vmatpush2.bf16.msra.mxu0 0
        %1584 = vmatprep.subr.bf16.mxu0 0
        %1585 = vmatpush2.bf16.msra.mxu0 0
        %1586 = vmatprep.subr.bf16.mxu0 0
        %1587 = vmatpush2.bf16.msra.mxu0 0
        %1588 = vmatprep.subr.bf16.mxu0 0
        %1589 = vmatpush2.bf16.msra.mxu0 0
        %1590 = vmatprep.subr.bf16.mxu0 0
        %1591 = vmatpush2.bf16.msra.mxu0 0
        %1592 = vmatprep.subr.bf16.mxu0 0
        %1593 = vmatpush2.bf16.msra.mxu0 0
        %1594 = vmatprep.subr.bf16.mxu0 0
        %1595 = vmatpush2.bf16.msra.mxu0 0
        %1596 = vmatprep.subr.bf16.mxu0 0
        %1597 = vmatpush2.bf16.msra.mxu0 0
        %1598 = vmatprep.mubr.bf16.mxu0 0
        %1599 = vmatmul.mubr.bf16.gmra.mxu0 %v1388
        %v1600 = vpop.f32.mrf.mxu0
        %v1601 = vadd.f32 0.0, %v1600
        %v1602 = vpop.f32.mrf.mxu0
        %v1603 = vpop.f32.mrf.mxu0
        %v1604 = vadd.f32 0.0, %v1603
        %v1605 = vpop.f32.mrf.mxu0
        %1606 = vmatprep.mubr.bf16.mxu0 0
        %1607 = vmatmul.mubr.bf16.gmra.mxu0 %v1389
        %v1608 = vpop.f32.mrf.mxu0
        %v1609 = vadd.f32 0.0, %v1608
        %v1610 = vpop.f32.mrf.mxu0
        %v1611 = vpop.f32.mrf.mxu0
        %v1612 = vadd.f32 0.0, %v1611
        %v1613 = vpop.f32.mrf.mxu0
        %1614 = vmatprep.mubr.bf16.mxu0 0
        %1615 = vmatmul.mubr.bf16.gmra.mxu0 %v1390
        %v1616 = vpop.f32.mrf.mxu0
        %v1617 = vadd.f32 0.0, %v1616
        %v1618 = vpop.f32.mrf.mxu0
        %v1619 = vpop.f32.mrf.mxu0
        %v1620 = vadd.f32 0.0, %v1619
        %v1621 = vpop.f32.mrf.mxu0
        %1622 = vmatprep.mubr.bf16.mxu0 0
        %1623 = vmatmul.mubr.bf16.gmra.mxu0 %v1391
        %v1624 = vpop.f32.mrf.mxu0
        %v1625 = vadd.f32 0.0, %v1624
        %v1626 = vpop.f32.mrf.mxu0
        %v1627 = vpop.f32.mrf.mxu0
        %v1628 = vadd.f32 0.0, %v1627
        %v1629 = vpop.f32.mrf.mxu0
        %1630 = vmatprep.mubr.bf16.mxu0 0
        %1631 = vmatmul.mubr.bf16.gmra.mxu0 %v1392
        %v1632 = vpop.f32.mrf.mxu0
        %v1633 = vadd.f32 0.0, %v1632
        %v1634 = vpop.f32.mrf.mxu0
        %v1635 = vpop.f32.mrf.mxu0
        %v1636 = vadd.f32 0.0, %v1635
        %v1637 = vpop.f32.mrf.mxu0
        %1638 = vmatprep.mubr.bf16.mxu0 0
        %1639 = vmatmul.mubr.bf16.gmra.mxu0 %v1393
        %v1640 = vpop.f32.mrf.mxu0
        %v1641 = vadd.f32 0.0, %v1640
        %v1642 = vpop.f32.mrf.mxu0
        %v1643 = vpop.f32.mrf.mxu0
        %v1644 = vadd.f32 0.0, %v1643
        %v1645 = vpop.f32.mrf.mxu0
        %1646 = vmatprep.mubr.bf16.mxu0 0
        %1647 = vmatmul.mubr.bf16.gmra.mxu0 %v1394
        %v1648 = vpop.f32.mrf.mxu0
        %v1649 = vadd.f32 0.0, %v1648
        %v1650 = vpop.f32.mrf.mxu0
        %v1651 = vpop.f32.mrf.mxu0
        %v1652 = vadd.f32 0.0, %v1651
        %v1653 = vpop.f32.mrf.mxu0
        %1654 = vmatprep.mubr.bf16.mxu0 0
        %1655 = vmatmul.mubr.bf16.gmra.mxu0 %v1395
        %v1656 = vpop.f32.mrf.mxu0
        %v1657 = vadd.f32 0.0, %v1656
        %v1658 = vpop.f32.mrf.mxu0
        %v1659 = vpop.f32.mrf.mxu0
        %v1660 = vadd.f32 0.0, %v1659
        %v1661 = vpop.f32.mrf.mxu0
        %1662 = vdwg.mxu0
        %1663 = vmatprep.subr.bf16.mxu0 0
        %1664 = vmatpush1.bf16.msra.mxu0 %v630
        %1665 = vmatprep.subr.bf16.mxu0 0
        %1666 = vmatpush1.bf16.msra.mxu0 %v629
        %1667 = vmatprep.subr.bf16.mxu0 0
        %1668 = vmatpush1.bf16.msra.mxu0 %v628
        %1669 = vmatprep.subr.bf16.mxu0 0
        %1670 = vmatpush1.bf16.msra.mxu0 %v627
        %1671 = vmatprep.subr.bf16.mxu0 0
        %1672 = vmatpush1.bf16.msra.mxu0 %v626
        %1673 = vmatprep.subr.bf16.mxu0 0
        %1674 = vmatpush1.bf16.msra.mxu0 %v625
        %1675 = vmatprep.subr.bf16.mxu0 0
        %1676 = vmatpush1.bf16.msra.mxu0 %v624
        %1677 = vmatprep.subr.bf16.mxu0 0
        %1678 = vmatpush1.bf16.msra.mxu0 %v623
        %1679 = vmatprep.subr.bf16.mxu0 0
        %1680 = vmatpush2.bf16.msra.mxu0 0
        %1681 = vmatprep.subr.bf16.mxu0 0
        %1682 = vmatpush2.bf16.msra.mxu0 0
        %1683 = vmatprep.subr.bf16.mxu0 0
        %1684 = vmatpush2.bf16.msra.mxu0 0
        %1685 = vmatprep.subr.bf16.mxu0 0
        %1686 = vmatpush2.bf16.msra.mxu0 0
        %1687 = vmatprep.subr.bf16.mxu0 0
        %1688 = vmatpush2.bf16.msra.mxu0 0
        %1689 = vmatprep.subr.bf16.mxu0 0
        %1690 = vmatpush2.bf16.msra.mxu0 0
        %1691 = vmatprep.subr.bf16.mxu0 0
        %1692 = vmatpush2.bf16.msra.mxu0 0
        %1693 = vmatprep.subr.bf16.mxu0 0
        %1694 = vmatpush2.bf16.msra.mxu0 0
        %1695 = vmatprep.mubr.bf16.mxu0 0
        %1696 = vmatmul.mubr.bf16.gmra.mxu0 %v1396
        %v1697 = vpop.f32.mrf.mxu0
        %v1698 = vadd.f32 0.0, %v1697
        %v1699 = vpop.f32.mrf.mxu0
        %v1700 = vpop.f32.mrf.mxu0
        %v1701 = vadd.f32 0.0, %v1700
        %v1702 = vpop.f32.mrf.mxu0
        %1703 = vmatprep.mubr.bf16.mxu0 0
        %1704 = vmatmul.mubr.bf16.gmra.mxu0 %v1397
        %v1705 = vpop.f32.mrf.mxu0
        %v1706 = vadd.f32 0.0, %v1705
        %v1707 = vpop.f32.mrf.mxu0
        %v1708 = vpop.f32.mrf.mxu0
        %v1709 = vadd.f32 0.0, %v1708
        %v1710 = vpop.f32.mrf.mxu0
        %1711 = vmatprep.mubr.bf16.mxu0 0
        %1712 = vmatmul.mubr.bf16.gmra.mxu0 %v1398
        %v1713 = vpop.f32.mrf.mxu0
        %v1714 = vadd.f32 0.0, %v1713
        %v1715 = vpop.f32.mrf.mxu0
        %v1716 = vpop.f32.mrf.mxu0
        %v1717 = vadd.f32 0.0, %v1716
        %v1718 = vpop.f32.mrf.mxu0
        %1719 = vmatprep.mubr.bf16.mxu0 0
        %1720 = vmatmul.mubr.bf16.gmra.mxu0 %v1399
        %v1721 = vpop.f32.mrf.mxu0
        %v1722 = vadd.f32 0.0, %v1721
        %v1723 = vpop.f32.mrf.mxu0
        %v1724 = vpop.f32.mrf.mxu0
        %v1725 = vadd.f32 0.0, %v1724
        %v1726 = vpop.f32.mrf.mxu0
        %1727 = vmatprep.mubr.bf16.mxu0 0
        %1728 = vmatmul.mubr.bf16.gmra.mxu0 %v1400
        %v1729 = vpop.f32.mrf.mxu0
        %v1730 = vadd.f32 0.0, %v1729
        %v1731 = vpop.f32.mrf.mxu0
        %v1732 = vpop.f32.mrf.mxu0
        %v1733 = vadd.f32 0.0, %v1732
        %v1734 = vpop.f32.mrf.mxu0
        %1735 = vmatprep.mubr.bf16.mxu0 0
        %1736 = vmatmul.mubr.bf16.gmra.mxu0 %v1401
        %v1737 = vpop.f32.mrf.mxu0
        %v1738 = vadd.f32 0.0, %v1737
        %v1739 = vpop.f32.mrf.mxu0
        %v1740 = vpop.f32.mrf.mxu0
        %v1741 = vadd.f32 0.0, %v1740
        %v1742 = vpop.f32.mrf.mxu0
        %1743 = vmatprep.mubr.bf16.mxu0 0
        %1744 = vmatmul.mubr.bf16.gmra.mxu0 %v1402
        %v1745 = vpop.f32.mrf.mxu0
        %v1746 = vadd.f32 0.0, %v1745
        %v1747 = vpop.f32.mrf.mxu0
        %v1748 = vpop.f32.mrf.mxu0
        %v1749 = vadd.f32 0.0, %v1748
        %v1750 = vpop.f32.mrf.mxu0
        %1751 = vmatprep.mubr.bf16.mxu0 0
        %1752 = vmatmul.mubr.bf16.gmra.mxu0 %v1403
        %v1753 = vpop.f32.mrf.mxu0
        %v1754 = vadd.f32 0.0, %v1753
        %v1755 = vpop.f32.mrf.mxu0
        %v1756 = vpop.f32.mrf.mxu0
        %v1757 = vadd.f32 0.0, %v1756
        %v1758 = vpop.f32.mrf.mxu0
        %1759 = vdwg.mxu0
        %v1760 = vpack.c.bf16 %v1604, %v1601
        %v1761 = vpack.c.bf16 %v1701, %v1698
        %v1762 = vpack.c.bf16 %v1612, %v1609
        %v1763 = vpack.c.bf16 %v1709, %v1706
        %v1764 = vpack.c.bf16 %v1620, %v1617
        %v1765 = vpack.c.bf16 %v1717, %v1714
        %v1766 = vpack.c.bf16 %v1628, %v1625
        %v1767 = vpack.c.bf16 %v1725, %v1722
        %v1768 = vpack.c.bf16 %v1636, %v1633
        %v1769 = vpack.c.bf16 %v1733, %v1730
        %v1770 = vpack.c.bf16 %v1644, %v1641
        %v1771 = vpack.c.bf16 %v1741, %v1738
        %v1772 = vpack.c.bf16 %v1652, %v1649
        %v1773 = vpack.c.bf16 %v1749, %v1746
        %v1774 = vpack.c.bf16 %v1660, %v1657
        %v1775 = vpack.c.bf16 %v1757, %v1754
        %v1776 = vpack.c.bf16 %v1503, %v1501
        %v1777 = vpack.c.bf16 %v1504, %v1502
        %v1778 = vpack.c.bf16 %v1507, %v1505
        %v1779 = vpack.c.bf16 %v1508, %v1506
        %v1780 = vpack.c.bf16 %v1511, %v1509
        %v1781 = vpack.c.bf16 %v1512, %v1510
        %v1782 = vpack.c.bf16 %v1515, %v1513
        %v1783 = vpack.c.bf16 %v1516, %v1514
        %v1784 = vpack.c.bf16 %v1519, %v1517
        %v1785 = vpack.c.bf16 %v1520, %v1518
        %v1786 = vpack.c.bf16 %v1523, %v1521
        %v1787 = vpack.c.bf16 %v1524, %v1522
        %v1788 = vpack.c.bf16 %v1527, %v1525
        %v1789 = vpack.c.bf16 %v1528, %v1526
        %v1790 = vpack.c.bf16 %v1531, %v1529
        %v1791 = vpack.c.bf16 %v1532, %v1530
        %v1792 = vpack.c.bf16 %v1535, %v1533
        %v1793 = vpack.c.bf16 %v1536, %v1534
        %v1794 = vpack.c.bf16 %v1539, %v1537
        %v1795 = vpack.c.bf16 %v1540, %v1538
        %v1796 = vpack.c.bf16 %v1543, %v1541
        %v1797 = vpack.c.bf16 %v1544, %v1542
        %v1798 = vpack.c.bf16 %v1547, %v1545
        %v1799 = vpack.c.bf16 %v1548, %v1546
        %v1800 = vpack.c.bf16 %v1551, %v1549
        %v1801 = vpack.c.bf16 %v1552, %v1550
        %v1802 = vpack.c.bf16 %v1555, %v1553
        %v1803 = vpack.c.bf16 %v1556, %v1554
        %v1804 = vpack.c.bf16 %v1559, %v1557
        %v1805 = vpack.c.bf16 %v1560, %v1558
        %v1806 = vpack.c.bf16 %v1563, %v1561
        %v1807 = vpack.c.bf16 %v1564, %v1562
        %v1809 = vlaneseq
        %v1810 = vshrl.u32 %v1809, 7
        %v1811 = vsub.s32 0, %v1810
        %v1812 = vrot.slane %v1565, %v1811
        %v1813 = vlaneseq
        %v1814 = vshrl.u32 %v1813, 7
        %v1815 = vsub.s32 1, %v1814
        %v1816 = vrot.slane %v1565, %v1815
        %1819 = vmatprep.subr.bf16.mxu0 %v1791
        %1820 = vmatpush1.bf16.msra.mxu0 %v1790
        %1821 = vmatprep.subr.bf16.mxu0 %v1789
        %1822 = vmatpush1.bf16.msra.mxu0 %v1788
        %1823 = vmatprep.subr.bf16.mxu0 %v1787
        %1824 = vmatpush1.bf16.msra.mxu0 %v1786
        %1825 = vmatprep.subr.bf16.mxu0 %v1785
        %1826 = vmatpush1.bf16.msra.mxu0 %v1784
        %1827 = vmatprep.subr.bf16.mxu0 %v1783
        %1828 = vmatpush1.bf16.msra.mxu0 %v1782
        %1829 = vmatprep.subr.bf16.mxu0 %v1781
        %1830 = vmatpush1.bf16.msra.mxu0 %v1780
        %1831 = vmatprep.subr.bf16.mxu0 %v1779
        %1832 = vmatpush1.bf16.msra.mxu0 %v1778
        %1833 = vmatprep.subr.bf16.mxu0 %v1777
        %1834 = vmatpush1.bf16.msra.mxu0 %v1776
        %1835 = vmatprep.subr.bf16.mxu0 %v1807
        %1836 = vmatpush2.bf16.msra.mxu0 %v1806
        %1837 = vmatprep.subr.bf16.mxu0 %v1805
        %1838 = vmatpush2.bf16.msra.mxu0 %v1804
        %1839 = vmatprep.subr.bf16.mxu0 %v1803
        %1840 = vmatpush2.bf16.msra.mxu0 %v1802
        %1841 = vmatprep.subr.bf16.mxu0 %v1801
        %1842 = vmatpush2.bf16.msra.mxu0 %v1800
        %1843 = vmatprep.subr.bf16.mxu0 %v1799
        %1844 = vmatpush2.bf16.msra.mxu0 %v1798
        %1845 = vmatprep.subr.bf16.mxu0 %v1797
        %1846 = vmatpush2.bf16.msra.mxu0 %v1796
        %1847 = vmatprep.subr.bf16.mxu0 %v1795
        %1848 = vmatpush2.bf16.msra.mxu0 %v1794
        %1849 = vmatprep.subr.bf16.mxu0 %v1793
        %1850 = vmatpush2.bf16.msra.mxu0 %v1792
        %1851 = vmatprep.mubr.bf16.mxu0 %v1761
        %1852 = vmatmul.mubr.bf16.gmra.mxu0 %v1760
        %v1853 = vpop.f32.mrf.mxu0
        %v1854 = vadd.f32 %v1812, %v1853
        %v1855 = vpop.f32.mrf.mxu0
        %v1856 = vadd.f32 %v1816, %v1855
        %v1857 = vpop.f32.mrf.mxu0
        %v1858 = vadd.f32 %v1812, %v1857
        %v1859 = vpop.f32.mrf.mxu0
        %v1860 = vadd.f32 %v1816, %v1859
        %1861 = vmatprep.mubr.bf16.mxu0 %v1763
        %1862 = vmatmul.mubr.bf16.gmra.mxu0 %v1762
        %v1863 = vpop.f32.mrf.mxu0
        %v1864 = vadd.f32 %v1812, %v1863
        %v1865 = vpop.f32.mrf.mxu0
        %v1866 = vadd.f32 %v1816, %v1865
        %v1867 = vpop.f32.mrf.mxu0
        %v1868 = vadd.f32 %v1812, %v1867
        %v1869 = vpop.f32.mrf.mxu0
        %v1870 = vadd.f32 %v1816, %v1869
        %1871 = vmatprep.mubr.bf16.mxu0 %v1765
        %1872 = vmatmul.mubr.bf16.gmra.mxu0 %v1764
        %v1873 = vpop.f32.mrf.mxu0
        %v1874 = vadd.f32 %v1812, %v1873
        %v1875 = vpop.f32.mrf.mxu0
        %v1876 = vadd.f32 %v1816, %v1875
        %v1877 = vpop.f32.mrf.mxu0
        %v1878 = vadd.f32 %v1812, %v1877
        %v1879 = vpop.f32.mrf.mxu0
        %v1880 = vadd.f32 %v1816, %v1879
        %1881 = vmatprep.mubr.bf16.mxu0 %v1767
        %1882 = vmatmul.mubr.bf16.gmra.mxu0 %v1766
        %v1883 = vpop.f32.mrf.mxu0
        %v1884 = vadd.f32 %v1812, %v1883
        %v1885 = vpop.f32.mrf.mxu0
        %v1886 = vadd.f32 %v1816, %v1885
        %v1887 = vpop.f32.mrf.mxu0
        %v1888 = vadd.f32 %v1812, %v1887
        %v1889 = vpop.f32.mrf.mxu0
        %v1890 = vadd.f32 %v1816, %v1889
        %1891 = vmatprep.mubr.bf16.mxu0 %v1769
        %1892 = vmatmul.mubr.bf16.gmra.mxu0 %v1768
        %v1893 = vpop.f32.mrf.mxu0
        %v1894 = vadd.f32 %v1812, %v1893
        %v1895 = vpop.f32.mrf.mxu0
        %v1896 = vadd.f32 %v1816, %v1895
        %v1897 = vpop.f32.mrf.mxu0
        %v1898 = vadd.f32 %v1812, %v1897
        %v1899 = vpop.f32.mrf.mxu0
        %v1900 = vadd.f32 %v1816, %v1899
        %1901 = vmatprep.mubr.bf16.mxu0 %v1771
        %1902 = vmatmul.mubr.bf16.gmra.mxu0 %v1770
        %v1903 = vpop.f32.mrf.mxu0
        %v1904 = vadd.f32 %v1812, %v1903
        %v1905 = vpop.f32.mrf.mxu0
        %v1906 = vadd.f32 %v1816, %v1905
        %v1907 = vpop.f32.mrf.mxu0
        %v1908 = vadd.f32 %v1812, %v1907
        %v1909 = vpop.f32.mrf.mxu0
        %v1910 = vadd.f32 %v1816, %v1909
        %1911 = vmatprep.mubr.bf16.mxu0 %v1773
        %1912 = vmatmul.mubr.bf16.gmra.mxu0 %v1772
        %v1913 = vpop.f32.mrf.mxu0
        %v1914 = vadd.f32 %v1812, %v1913
        %v1915 = vpop.f32.mrf.mxu0
        %v1916 = vadd.f32 %v1816, %v1915
        %v1917 = vpop.f32.mrf.mxu0
        %v1918 = vadd.f32 %v1812, %v1917
        %v1919 = vpop.f32.mrf.mxu0
        %v1920 = vadd.f32 %v1816, %v1919
        %1921 = vmatprep.mubr.bf16.mxu0 %v1775
        %1922 = vmatmul.mubr.bf16.gmra.mxu0 %v1774
        %v1923 = vpop.f32.mrf.mxu0
        %v1924 = vadd.f32 %v1812, %v1923
        %v1925 = vpop.f32.mrf.mxu0
        %v1926 = vadd.f32 %v1816, %v1925
        %v1927 = vpop.f32.mrf.mxu0
        %v1928 = vadd.f32 %v1812, %v1927
        %v1929 = vpop.f32.mrf.mxu0
        %v1930 = vadd.f32 %v1816, %v1929
        %1931 = vdwg.mxu0
        %v1932 = vmul.f32 %v1854, %v1308
        %v1933 = vmul.f32 %v1858, %v1309
        %v1934 = vmul.f32 %v1864, %v1310
        %v1935 = vmul.f32 %v1868, %v1311
        %v1936 = vmul.f32 %v1874, %v1312
        %v1937 = vmul.f32 %v1878, %v1313
        %v1938 = vmul.f32 %v1884, %v1314
        %v1939 = vmul.f32 %v1888, %v1315
        %v1940 = vmul.f32 %v1894, %v1316
        %v1941 = vmul.f32 %v1898, %v1317
        %v1942 = vmul.f32 %v1904, %v1318
        %v1943 = vmul.f32 %v1908, %v1319
        %v1944 = vmul.f32 %v1914, %v1320
        %v1945 = vmul.f32 %v1918, %v1321
        %v1946 = vmul.f32 %v1924, %v1322
        %v1947 = vmul.f32 %v1928, %v1323
        %v1948 = vmax.f32 %v1932, 0.0
        %v1949 = vmax.f32 %v1933, 0.0
        %v1950 = vmax.f32 %v1934, 0.0
        %v1951 = vmax.f32 %v1935, 0.0
        %v1952 = vmax.f32 %v1936, 0.0
        %v1953 = vmax.f32 %v1937, 0.0
        %v1954 = vmax.f32 %v1938, 0.0
        %v1955 = vmax.f32 %v1939, 0.0
        %v1956 = vmax.f32 %v1940, 0.0
        %v1957 = vmax.f32 %v1941, 0.0
        %v1958 = vmax.f32 %v1942, 0.0
        %v1959 = vmax.f32 %v1943, 0.0
        %v1960 = vmax.f32 %v1944, 0.0
        %v1961 = vmax.f32 %v1945, 0.0
        %v1962 = vmax.f32 %v1946, 0.0
        %v1963 = vmax.f32 %v1947, 0.0
        %v1964 = vmul.f32 %v1856, %v1372
        %v1965 = vmul.f32 %v1860, %v1373
        %v1966 = vmul.f32 %v1866, %v1374
        %v1967 = vmul.f32 %v1870, %v1375
        %v1968 = vmul.f32 %v1876, %v1376
        %v1969 = vmul.f32 %v1880, %v1377
        %v1970 = vmul.f32 %v1886, %v1378
        %v1971 = vmul.f32 %v1890, %v1379
        %v1972 = vmul.f32 %v1896, %v1380
        %v1973 = vmul.f32 %v1900, %v1381
        %v1974 = vmul.f32 %v1906, %v1382
        %v1975 = vmul.f32 %v1910, %v1383
        %v1976 = vmul.f32 %v1916, %v1384
        %v1977 = vmul.f32 %v1920, %v1385
        %v1978 = vmul.f32 %v1926, %v1386
        %v1979 = vmul.f32 %v1930, %v1387
        %v1980 = vmax.f32 %v1964, 0.0
        %v1981 = vmax.f32 %v1965, 0.0
        %v1982 = vmax.f32 %v1966, 0.0
        %v1983 = vmax.f32 %v1967, 0.0
        %v1984 = vmax.f32 %v1968, 0.0
        %v1985 = vmax.f32 %v1969, 0.0
        %v1986 = vmax.f32 %v1970, 0.0
        %v1987 = vmax.f32 %v1971, 0.0
        %v1988 = vmax.f32 %v1972, 0.0
        %v1989 = vmax.f32 %v1973, 0.0
        %v1990 = vmax.f32 %v1974, 0.0
        %v1991 = vmax.f32 %v1975, 0.0
        %v1992 = vmax.f32 %v1976, 0.0
        %v1993 = vmax.f32 %v1977, 0.0
        %v1994 = vmax.f32 %v1978, 0.0
        %v1995 = vmax.f32 %v1979, 0.0
        %v1996 = vpack.c.bf16 %v1949, %v1948
        %v1997 = vpack.c.bf16 %v1951, %v1950
        %v1998 = vpack.c.bf16 %v1953, %v1952
        %v1999 = vpack.c.bf16 %v1955, %v1954
        %v2000 = vpack.c.bf16 %v1957, %v1956
        %v2001 = vpack.c.bf16 %v1959, %v1958
        %v2002 = vpack.c.bf16 %v1961, %v1960
        %v2003 = vpack.c.bf16 %v1963, %v1962
        %v2004 = vpack.c.bf16 %v1981, %v1980
        %v2005 = vpack.c.bf16 %v1983, %v1982
        %v2006 = vpack.c.bf16 %v1985, %v1984
        %v2007 = vpack.c.bf16 %v1987, %v1986
        %v2008 = vpack.c.bf16 %v1989, %v1988
        %v2009 = vpack.c.bf16 %v1991, %v1990
        %v2010 = vpack.c.bf16 %v1993, %v1992
        %v2011 = vpack.c.bf16 %v1995, %v1994
        %2012 = vmatprep.subr.bf16.mxu0 %v1484
        %2013 = vmatpush1.bf16.msra.mxu0 %v1483
        %2014 = vmatprep.subr.bf16.mxu0 %v1482
        %2015 = vmatpush1.bf16.msra.mxu0 %v1481
        %2016 = vmatprep.subr.bf16.mxu0 %v1480
        %2017 = vmatpush1.bf16.msra.mxu0 %v1479
        %2018 = vmatprep.subr.bf16.mxu0 %v1478
        %2019 = vmatpush1.bf16.msra.mxu0 %v1477
        %2020 = vmatprep.subr.bf16.mxu0 %v1476
        %2021 = vmatpush1.bf16.msra.mxu0 %v1475
        %2022 = vmatprep.subr.bf16.mxu0 %v1474
        %2023 = vmatpush1.bf16.msra.mxu0 %v1473
        %2024 = vmatprep.subr.bf16.mxu0 %v1472
        %2025 = vmatpush1.bf16.msra.mxu0 %v1471
        %2026 = vmatprep.subr.bf16.mxu0 %v1470
        %2027 = vmatpush1.bf16.msra.mxu0 %v1469
        %2028 = vmatprep.subr.bf16.mxu0 %v1500
        %2029 = vmatpush2.bf16.msra.mxu0 %v1499
        %2030 = vmatprep.subr.bf16.mxu0 %v1498
        %2031 = vmatpush2.bf16.msra.mxu0 %v1497
        %2032 = vmatprep.subr.bf16.mxu0 %v1496
        %2033 = vmatpush2.bf16.msra.mxu0 %v1495
        %2034 = vmatprep.subr.bf16.mxu0 %v1494
        %2035 = vmatpush2.bf16.msra.mxu0 %v1493
        %2036 = vmatprep.subr.bf16.mxu0 %v1492
        %2037 = vmatpush2.bf16.msra.mxu0 %v1491
        %2038 = vmatprep.subr.bf16.mxu0 %v1490
        %2039 = vmatpush2.bf16.msra.mxu0 %v1489
        %2040 = vmatprep.subr.bf16.mxu0 %v1488
        %2041 = vmatpush2.bf16.msra.mxu0 %v1487
        %2042 = vmatprep.subr.bf16.mxu0 %v1486
        %2043 = vmatpush2.bf16.msra.mxu0 %v1485
        %2044 = vmatprep.mubr.bf16.mxu0 %v2004
        %2045 = vmatmul.mubr.bf16.gmra.mxu0 %v1996
        %v2046 = vpop.f32.mrf.mxu0
        %v2047 = vadd.f32 0.0, %v2046
        %v2048 = vpop.f32.mrf.mxu0
        %v2049 = vadd.f32 0.0, %v2048
        %v2050 = vpop.f32.mrf.mxu0
        %v2051 = vadd.f32 0.0, %v2050
        %v2052 = vpop.f32.mrf.mxu0
        %v2053 = vadd.f32 0.0, %v2052
        %2054 = vmatprep.mubr.bf16.mxu0 %v2005
        %2055 = vmatmul.mubr.bf16.gmra.mxu0 %v1997
        %v2056 = vpop.f32.mrf.mxu0
        %v2057 = vadd.f32 0.0, %v2056
        %v2058 = vpop.f32.mrf.mxu0
        %v2059 = vadd.f32 0.0, %v2058
        %v2060 = vpop.f32.mrf.mxu0
        %v2061 = vadd.f32 0.0, %v2060
        %v2062 = vpop.f32.mrf.mxu0
        %v2063 = vadd.f32 0.0, %v2062
        %2064 = vmatprep.mubr.bf16.mxu0 %v2006
        %2065 = vmatmul.mubr.bf16.gmra.mxu0 %v1998
        %v2066 = vpop.f32.mrf.mxu0
        %v2067 = vadd.f32 0.0, %v2066
        %v2068 = vpop.f32.mrf.mxu0
        %v2069 = vadd.f32 0.0, %v2068
        %v2070 = vpop.f32.mrf.mxu0
        %v2071 = vadd.f32 0.0, %v2070
        %v2072 = vpop.f32.mrf.mxu0
        %v2073 = vadd.f32 0.0, %v2072
        %2074 = vmatprep.mubr.bf16.mxu0 %v2007
        %2075 = vmatmul.mubr.bf16.gmra.mxu0 %v1999
        %v2076 = vpop.f32.mrf.mxu0
        %v2077 = vadd.f32 0.0, %v2076
        %v2078 = vpop.f32.mrf.mxu0
        %v2079 = vadd.f32 0.0, %v2078
        %v2080 = vpop.f32.mrf.mxu0
        %v2081 = vadd.f32 0.0, %v2080
        %v2082 = vpop.f32.mrf.mxu0
        %v2083 = vadd.f32 0.0, %v2082
        %2084 = vmatprep.mubr.bf16.mxu0 %v2008
        %2085 = vmatmul.mubr.bf16.gmra.mxu0 %v2000
        %v2086 = vpop.f32.mrf.mxu0
        %v2087 = vadd.f32 0.0, %v2086
        %v2088 = vpop.f32.mrf.mxu0
        %v2089 = vadd.f32 0.0, %v2088
        %v2090 = vpop.f32.mrf.mxu0
        %v2091 = vadd.f32 0.0, %v2090
        %v2092 = vpop.f32.mrf.mxu0
        %v2093 = vadd.f32 0.0, %v2092
        %2094 = vmatprep.mubr.bf16.mxu0 %v2009
        %2095 = vmatmul.mubr.bf16.gmra.mxu0 %v2001
        %v2096 = vpop.f32.mrf.mxu0
        %v2097 = vadd.f32 0.0, %v2096
        %v2098 = vpop.f32.mrf.mxu0
        %v2099 = vadd.f32 0.0, %v2098
        %v2100 = vpop.f32.mrf.mxu0
        %v2101 = vadd.f32 0.0, %v2100
        %v2102 = vpop.f32.mrf.mxu0
        %v2103 = vadd.f32 0.0, %v2102
        %2104 = vmatprep.mubr.bf16.mxu0 %v2010
        %2105 = vmatmul.mubr.bf16.gmra.mxu0 %v2002
        %v2106 = vpop.f32.mrf.mxu0
        %v2107 = vadd.f32 0.0, %v2106
        %v2108 = vpop.f32.mrf.mxu0
        %v2109 = vadd.f32 0.0, %v2108
        %v2110 = vpop.f32.mrf.mxu0
        %v2111 = vadd.f32 0.0, %v2110
        %v2112 = vpop.f32.mrf.mxu0
        %v2113 = vadd.f32 0.0, %v2112
        %2114 = vmatprep.mubr.bf16.mxu0 %v2011
        %2115 = vmatmul.mubr.bf16.gmra.mxu0 %v2003
        %v2116 = vpop.f32.mrf.mxu0
        %v2117 = vadd.f32 0.0, %v2116
        %v2118 = vpop.f32.mrf.mxu0
        %v2119 = vadd.f32 0.0, %v2118
        %v2120 = vpop.f32.mrf.mxu0
        %v2121 = vadd.f32 0.0, %v2120
        %v2122 = vpop.f32.mrf.mxu0
        %v2123 = vadd.f32 0.0, %v2122
        %2124 = vdwg.mxu0
        %v2125 = vpack.c.bf16 %v2051, %v2047
        %v2126 = vpack.c.bf16 %v2061, %v2057
        %v2127 = vpack.c.bf16 %v2071, %v2067
        %v2128 = vpack.c.bf16 %v2081, %v2077
        %v2129 = vpack.c.bf16 %v2091, %v2087
        %v2130 = vpack.c.bf16 %v2101, %v2097
        %v2131 = vpack.c.bf16 %v2111, %v2107
        %v2132 = vpack.c.bf16 %v2121, %v2117
        %v2133 = vpack.c.bf16 %v2053, %v2049
        %v2134 = vpack.c.bf16 %v2063, %v2059
        %v2135 = vpack.c.bf16 %v2073, %v2069
        %v2136 = vpack.c.bf16 %v2083, %v2079
        %v2137 = vpack.c.bf16 %v2093, %v2089
        %v2138 = vpack.c.bf16 %v2103, %v2099
        %v2139 = vpack.c.bf16 %v2113, %v2109
        %v2140 = vpack.c.bf16 %v2123, %v2119
        %v2142 = vlaneseq
        %v2143 = vshrl.u32 %v2142, 7
        %v2144 = vsub.s32 0, %v2143
        %v2145 = vrot.slane %v1404, %v2144
        %2147 = vmatprep.subr.bf16.mxu0 0
        %2148 = vmatpush1.bf16.xpose.msra.mxu0 %v2011
        %2149 = vmatprep.subr.bf16.mxu0 0
        %2150 = vmatpush1.bf16.xpose.msra.mxu0 %v2010
        %2151 = vmatprep.subr.bf16.mxu0 0
        %2152 = vmatpush1.bf16.xpose.msra.mxu0 %v2009
        %2153 = vmatprep.subr.bf16.mxu0 0
        %2154 = vmatpush1.bf16.xpose.msra.mxu0 %v2008
        %2155 = vmatprep.subr.bf16.mxu0 0
        %2156 = vmatpush1.bf16.xpose.msra.mxu0 %v2007
        %2157 = vmatprep.subr.bf16.mxu0 0
        %2158 = vmatpush1.bf16.xpose.msra.mxu0 %v2006
        %2159 = vmatprep.subr.bf16.mxu0 0
        %2160 = vmatpush1.bf16.xpose.msra.mxu0 %v2005
        %2161 = vmatprep.subr.bf16.mxu0 0
        %2162 = vmatpush1.bf16.xpose.msra.mxu0 %v2004
        %2163 = vmatprep.subr.bf16.mxu0 0
        %2164 = vmatpush2.bf16.xpose.msra.mxu0 0
        %2165 = vmatprep.subr.bf16.mxu0 0
        %2166 = vmatpush2.bf16.xpose.msra.mxu0 0
        %2167 = vmatprep.subr.bf16.mxu0 0
        %2168 = vmatpush2.bf16.xpose.msra.mxu0 0
        %2169 = vmatprep.subr.bf16.mxu0 0
        %2170 = vmatpush2.bf16.xpose.msra.mxu0 0
        %2171 = vmatprep.subr.bf16.mxu0 0
        %2172 = vmatpush2.bf16.xpose.msra.mxu0 0
        %2173 = vmatprep.subr.bf16.mxu0 0
        %2174 = vmatpush2.bf16.xpose.msra.mxu0 0
        %2175 = vmatprep.subr.bf16.mxu0 0
        %2176 = vmatpush2.bf16.xpose.msra.mxu0 0
        %2177 = vmatprep.subr.bf16.mxu0 0
        %2178 = vmatpush2.bf16.xpose.msra.mxu0 0
        %2179 = vmatprep.mubr.bf16.mxu0 0
        %2180 = vmatmul.mubr.bf16.gmra.mxu0 %v2125
        %v2181 = vpop.f32.mrf.mxu0
        %v2182 = vadd.f32 %v2145, %v2181
        %v2183 = vpop.f32.mrf.mxu0
        %v2184 = vpop.f32.mrf.mxu0
        %v2185 = vadd.f32 %v2145, %v2184
        %v2186 = vpop.f32.mrf.mxu0
        %2187 = vmatprep.mubr.bf16.mxu0 0
        %2188 = vmatmul.mubr.bf16.gmra.mxu0 %v2126
        %v2189 = vpop.f32.mrf.mxu0
        %v2190 = vadd.f32 %v2145, %v2189
        %v2191 = vpop.f32.mrf.mxu0
        %v2192 = vpop.f32.mrf.mxu0
        %v2193 = vadd.f32 %v2145, %v2192
        %v2194 = vpop.f32.mrf.mxu0
        %2195 = vmatprep.mubr.bf16.mxu0 0
        %2196 = vmatmul.mubr.bf16.gmra.mxu0 %v2127
        %v2197 = vpop.f32.mrf.mxu0
        %v2198 = vadd.f32 %v2145, %v2197
        %v2199 = vpop.f32.mrf.mxu0
        %v2200 = vpop.f32.mrf.mxu0
        %v2201 = vadd.f32 %v2145, %v2200
        %v2202 = vpop.f32.mrf.mxu0
        %2203 = vmatprep.mubr.bf16.mxu0 0
        %2204 = vmatmul.mubr.bf16.gmra.mxu0 %v2128
        %v2205 = vpop.f32.mrf.mxu0
        %v2206 = vadd.f32 %v2145, %v2205
        %v2207 = vpop.f32.mrf.mxu0
        %v2208 = vpop.f32.mrf.mxu0
        %v2209 = vadd.f32 %v2145, %v2208
        %v2210 = vpop.f32.mrf.mxu0
        %2211 = vmatprep.mubr.bf16.mxu0 0
        %2212 = vmatmul.mubr.bf16.gmra.mxu0 %v2129
        %v2213 = vpop.f32.mrf.mxu0
        %v2214 = vadd.f32 %v2145, %v2213
        %v2215 = vpop.f32.mrf.mxu0
        %v2216 = vpop.f32.mrf.mxu0
        %v2217 = vadd.f32 %v2145, %v2216
        %v2218 = vpop.f32.mrf.mxu0
        %2219 = vmatprep.mubr.bf16.mxu0 0
        %2220 = vmatmul.mubr.bf16.gmra.mxu0 %v2130
        %v2221 = vpop.f32.mrf.mxu0
        %v2222 = vadd.f32 %v2145, %v2221
        %v2223 = vpop.f32.mrf.mxu0
        %v2224 = vpop.f32.mrf.mxu0
        %v2225 = vadd.f32 %v2145, %v2224
        %v2226 = vpop.f32.mrf.mxu0
        %2227 = vmatprep.mubr.bf16.mxu0 0
        %2228 = vmatmul.mubr.bf16.gmra.mxu0 %v2131
        %v2229 = vpop.f32.mrf.mxu0
        %v2230 = vadd.f32 %v2145, %v2229
        %v2231 = vpop.f32.mrf.mxu0
        %v2232 = vpop.f32.mrf.mxu0
        %v2233 = vadd.f32 %v2145, %v2232
        %v2234 = vpop.f32.mrf.mxu0
        %2235 = vmatprep.mubr.bf16.mxu0 0
        %2236 = vmatmul.mubr.bf16.gmra.mxu0 %v2132
        %v2237 = vpop.f32.mrf.mxu0
        %v2238 = vadd.f32 %v2145, %v2237
        %v2239 = vpop.f32.mrf.mxu0
        %v2240 = vpop.f32.mrf.mxu0
        %v2241 = vadd.f32 %v2145, %v2240
        %v2242 = vpop.f32.mrf.mxu0
        %2243 = vdwg.mxu0
        %2244 = vmatprep.subr.bf16.mxu0 0
        %2245 = vmatpush1.bf16.xpose.msra.mxu0 %v2003
        %2246 = vmatprep.subr.bf16.mxu0 0
        %2247 = vmatpush1.bf16.xpose.msra.mxu0 %v2002
        %2248 = vmatprep.subr.bf16.mxu0 0
        %2249 = vmatpush1.bf16.xpose.msra.mxu0 %v2001
        %2250 = vmatprep.subr.bf16.mxu0 0
        %2251 = vmatpush1.bf16.xpose.msra.mxu0 %v2000
        %2252 = vmatprep.subr.bf16.mxu0 0
        %2253 = vmatpush1.bf16.xpose.msra.mxu0 %v1999
        %2254 = vmatprep.subr.bf16.mxu0 0
        %2255 = vmatpush1.bf16.xpose.msra.mxu0 %v1998
        %2256 = vmatprep.subr.bf16.mxu0 0
        %2257 = vmatpush1.bf16.xpose.msra.mxu0 %v1997
        %2258 = vmatprep.subr.bf16.mxu0 0
        %2259 = vmatpush1.bf16.xpose.msra.mxu0 %v1996
        %2260 = vmatprep.subr.bf16.mxu0 0
        %2261 = vmatpush2.bf16.xpose.msra.mxu0 0
        %2262 = vmatprep.subr.bf16.mxu0 0
        %2263 = vmatpush2.bf16.xpose.msra.mxu0 0
        %2264 = vmatprep.subr.bf16.mxu0 0
        %2265 = vmatpush2.bf16.xpose.msra.mxu0 0
        %2266 = vmatprep.subr.bf16.mxu0 0
        %2267 = vmatpush2.bf16.xpose.msra.mxu0 0
        %2268 = vmatprep.subr.bf16.mxu0 0
        %2269 = vmatpush2.bf16.xpose.msra.mxu0 0
        %2270 = vmatprep.subr.bf16.mxu0 0
        %2271 = vmatpush2.bf16.xpose.msra.mxu0 0
        %2272 = vmatprep.subr.bf16.mxu0 0
        %2273 = vmatpush2.bf16.xpose.msra.mxu0 0
        %2274 = vmatprep.subr.bf16.mxu0 0
        %2275 = vmatpush2.bf16.xpose.msra.mxu0 0
        %2276 = vmatprep.mubr.bf16.mxu0 0
        %2277 = vmatmul.mubr.bf16.gmra.mxu0 %v2133
        %v2278 = vpop.f32.mrf.mxu0
        %v2279 = vadd.f32 %v2145, %v2278
        %v2280 = vpop.f32.mrf.mxu0
        %v2281 = vpop.f32.mrf.mxu0
        %v2282 = vadd.f32 %v2145, %v2281
        %v2283 = vpop.f32.mrf.mxu0
        %2284 = vmatprep.mubr.bf16.mxu0 0
        %2285 = vmatmul.mubr.bf16.gmra.mxu0 %v2134
        %v2286 = vpop.f32.mrf.mxu0
        %v2287 = vadd.f32 %v2145, %v2286
        %v2288 = vpop.f32.mrf.mxu0
        %v2289 = vpop.f32.mrf.mxu0
        %v2290 = vadd.f32 %v2145, %v2289
        %v2291 = vpop.f32.mrf.mxu0
        %2292 = vmatprep.mubr.bf16.mxu0 0
        %2293 = vmatmul.mubr.bf16.gmra.mxu0 %v2135
        %v2294 = vpop.f32.mrf.mxu0
        %v2295 = vadd.f32 %v2145, %v2294
        %v2296 = vpop.f32.mrf.mxu0
        %v2297 = vpop.f32.mrf.mxu0
        %v2298 = vadd.f32 %v2145, %v2297
        %v2299 = vpop.f32.mrf.mxu0
        %2300 = vmatprep.mubr.bf16.mxu0 0
        %2301 = vmatmul.mubr.bf16.gmra.mxu0 %v2136
        %v2302 = vpop.f32.mrf.mxu0
        %v2303 = vadd.f32 %v2145, %v2302
        %v2304 = vpop.f32.mrf.mxu0
        %v2305 = vpop.f32.mrf.mxu0
        %v2306 = vadd.f32 %v2145, %v2305
        %v2307 = vpop.f32.mrf.mxu0
        %2308 = vmatprep.mubr.bf16.mxu0 0
        %2309 = vmatmul.mubr.bf16.gmra.mxu0 %v2137
        %v2310 = vpop.f32.mrf.mxu0
        %v2311 = vadd.f32 %v2145, %v2310
        %v2312 = vpop.f32.mrf.mxu0
        %v2313 = vpop.f32.mrf.mxu0
        %v2314 = vadd.f32 %v2145, %v2313
        %v2315 = vpop.f32.mrf.mxu0
        %2316 = vmatprep.mubr.bf16.mxu0 0
        %2317 = vmatmul.mubr.bf16.gmra.mxu0 %v2138
        %v2318 = vpop.f32.mrf.mxu0
        %v2319 = vadd.f32 %v2145, %v2318
        %v2320 = vpop.f32.mrf.mxu0
        %v2321 = vpop.f32.mrf.mxu0
        %v2322 = vadd.f32 %v2145, %v2321
        %v2323 = vpop.f32.mrf.mxu0
        %2324 = vmatprep.mubr.bf16.mxu0 0
        %2325 = vmatmul.mubr.bf16.gmra.mxu0 %v2139
        %v2326 = vpop.f32.mrf.mxu0
        %v2327 = vadd.f32 %v2145, %v2326
        %v2328 = vpop.f32.mrf.mxu0
        %v2329 = vpop.f32.mrf.mxu0
        %v2330 = vadd.f32 %v2145, %v2329
        %v2331 = vpop.f32.mrf.mxu0
        %2332 = vmatprep.mubr.bf16.mxu0 0
        %2333 = vmatmul.mubr.bf16.gmra.mxu0 %v2140
        %v2334 = vpop.f32.mrf.mxu0
        %v2335 = vadd.f32 %v2145, %v2334
        %v2336 = vpop.f32.mrf.mxu0
        %v2337 = vpop.f32.mrf.mxu0
        %v2338 = vadd.f32 %v2145, %v2337
        %v2339 = vpop.f32.mrf.mxu0
        %2340 = vdwg.mxu0
        %2341 = vmax.xlane.f32.xlu0 %v2182
        %v2342 = vpop.xlane.xlu0 %2341
        %2343 = vmax.xlane.f32.xlu0 %v2185
        %v2344 = vpop.xlane.xlu0 %2343
        %2345 = vmax.xlane.f32.xlu0 %v2190
        %v2346 = vpop.xlane.xlu0 %2345
        %2347 = vmax.xlane.f32.xlu0 %v2193
        %v2348 = vpop.xlane.xlu0 %2347
        %2349 = vmax.xlane.f32.xlu0 %v2198
        %v2350 = vpop.xlane.xlu0 %2349
        %2351 = vmax.xlane.f32.xlu0 %v2201
        %v2352 = vpop.xlane.xlu0 %2351
        %2353 = vmax.xlane.f32.xlu0 %v2206
        %v2354 = vpop.xlane.xlu0 %2353
        %2355 = vmax.xlane.f32.xlu0 %v2209
        %v2356 = vpop.xlane.xlu0 %2355
        %2357 = vmax.xlane.f32.xlu0 %v2214
        %v2358 = vpop.xlane.xlu0 %2357
        %2359 = vmax.xlane.f32.xlu0 %v2217
        %v2360 = vpop.xlane.xlu0 %2359
        %2361 = vmax.xlane.f32.xlu0 %v2222
        %v2362 = vpop.xlane.xlu0 %2361
        %2363 = vmax.xlane.f32.xlu0 %v2225
        %v2364 = vpop.xlane.xlu0 %2363
        %2365 = vmax.xlane.f32.xlu0 %v2230
        %v2366 = vpop.xlane.xlu0 %2365
        %2367 = vmax.xlane.f32.xlu0 %v2233
        %v2368 = vpop.xlane.xlu0 %2367
        %2369 = vmax.xlane.f32.xlu0 %v2238
        %v2370 = vpop.xlane.xlu0 %2369
        %2371 = vmax.xlane.f32.xlu0 %v2241
        %v2372 = vpop.xlane.xlu0 %2371
        %v2373 = vsub.f32 %v2182, %v2342
        %v2374 = vsub.f32 %v2185, %v2344
        %v2375 = vsub.f32 %v2190, %v2346
        %v2376 = vsub.f32 %v2193, %v2348
        %v2377 = vsub.f32 %v2198, %v2350
        %v2378 = vsub.f32 %v2201, %v2352
        %v2379 = vsub.f32 %v2206, %v2354
        %v2380 = vsub.f32 %v2209, %v2356
        %v2381 = vsub.f32 %v2214, %v2358
        %v2382 = vsub.f32 %v2217, %v2360
        %v2383 = vsub.f32 %v2222, %v2362
        %v2384 = vsub.f32 %v2225, %v2364
        %v2385 = vsub.f32 %v2230, %v2366
        %v2386 = vsub.f32 %v2233, %v2368
        %v2387 = vsub.f32 %v2238, %v2370
        %v2388 = vsub.f32 %v2241, %v2372
        %v2389 = vmul.f32 %v2373, 1.442695
        %v2390 = vpow.pop %v2389
        %v2391 = vmul.f32 %v2374, 1.442695
        %v2392 = vpow.pop %v2391
        %v2393 = vmul.f32 %v2375, 1.442695
        %v2394 = vpow.pop %v2393
        %v2395 = vmul.f32 %v2376, 1.442695
        %v2396 = vpow.pop %v2395
        %v2397 = vmul.f32 %v2377, 1.442695
        %v2398 = vpow.pop %v2397
        %v2399 = vmul.f32 %v2378, 1.442695
        %v2400 = vpow.pop %v2399
        %v2401 = vmul.f32 %v2379, 1.442695
        %v2402 = vpow.pop %v2401
        %v2403 = vmul.f32 %v2380, 1.442695
        %v2404 = vpow.pop %v2403
        %v2405 = vmul.f32 %v2381, 1.442695
        %v2406 = vpow.pop %v2405
        %v2407 = vmul.f32 %v2382, 1.442695
        %v2408 = vpow.pop %v2407
        %v2409 = vmul.f32 %v2383, 1.442695
        %v2410 = vpow.pop %v2409
        %v2411 = vmul.f32 %v2384, 1.442695
        %v2412 = vpow.pop %v2411
        %v2413 = vmul.f32 %v2385, 1.442695
        %v2414 = vpow.pop %v2413
        %v2415 = vmul.f32 %v2386, 1.442695
        %v2416 = vpow.pop %v2415
        %v2417 = vmul.f32 %v2387, 1.442695
        %v2418 = vpow.pop %v2417
        %v2419 = vmul.f32 %v2388, 1.442695
        %v2420 = vpow.pop %v2419
        %2421 = vadd.xlane.f32.xlu0 %v2390
        %v2422 = vpop.xlane.xlu0 %2421
        %2423 = vadd.xlane.f32.xlu0 %v2392
        %v2424 = vpop.xlane.xlu0 %2423
        %2425 = vadd.xlane.f32.xlu0 %v2394
        %v2426 = vpop.xlane.xlu0 %2425
        %2427 = vadd.xlane.f32.xlu0 %v2396
        %v2428 = vpop.xlane.xlu0 %2427
        %2429 = vadd.xlane.f32.xlu0 %v2398
        %v2430 = vpop.xlane.xlu0 %2429
        %2431 = vadd.xlane.f32.xlu0 %v2400
        %v2432 = vpop.xlane.xlu0 %2431
        %2433 = vadd.xlane.f32.xlu0 %v2402
        %v2434 = vpop.xlane.xlu0 %2433
        %2435 = vadd.xlane.f32.xlu0 %v2404
        %v2436 = vpop.xlane.xlu0 %2435
        %2437 = vadd.xlane.f32.xlu0 %v2406
        %v2438 = vpop.xlane.xlu0 %2437
        %2439 = vadd.xlane.f32.xlu0 %v2408
        %v2440 = vpop.xlane.xlu0 %2439
        %2441 = vadd.xlane.f32.xlu0 %v2410
        %v2442 = vpop.xlane.xlu0 %2441
        %2443 = vadd.xlane.f32.xlu0 %v2412
        %v2444 = vpop.xlane.xlu0 %2443
        %2445 = vadd.xlane.f32.xlu0 %v2414
        %v2446 = vpop.xlane.xlu0 %2445
        %2447 = vadd.xlane.f32.xlu0 %v2416
        %v2448 = vpop.xlane.xlu0 %2447
        %2449 = vadd.xlane.f32.xlu0 %v2418
        %v2450 = vpop.xlane.xlu0 %2449
        %2451 = vadd.xlane.f32.xlu0 %v2420
        %v2452 = vpop.xlane.xlu0 %2451
        %v2453 = vrcp.pop %v2422
        %v2454 = vrcp.pop %v2424
        %v2455 = vrcp.pop %v2426
        %v2456 = vrcp.pop %v2428
        %v2457 = vrcp.pop %v2430
        %v2458 = vrcp.pop %v2432
        %v2459 = vrcp.pop %v2434
        %v2460 = vrcp.pop %v2436
        %v2461 = vrcp.pop %v2438
        %v2462 = vrcp.pop %v2440
        %v2463 = vrcp.pop %v2442
        %v2464 = vrcp.pop %v2444
        %v2465 = vrcp.pop %v2446
        %v2466 = vrcp.pop %v2448
        %v2467 = vrcp.pop %v2450
        %v2468 = vrcp.pop %v2452
        %v2469 = vmul.f32 %v2390, %v2453
        %v2470 = vmul.f32 %v2392, %v2454
        %v2471 = vmul.f32 %v2394, %v2455
        %v2472 = vmul.f32 %v2396, %v2456
        %v2473 = vmul.f32 %v2398, %v2457
        %v2474 = vmul.f32 %v2400, %v2458
        %v2475 = vmul.f32 %v2402, %v2459
        %v2476 = vmul.f32 %v2404, %v2460
        %v2477 = vmul.f32 %v2406, %v2461
        %v2478 = vmul.f32 %v2408, %v2462
        %v2479 = vmul.f32 %v2410, %v2463
        %v2480 = vmul.f32 %v2412, %v2464
        %v2481 = vmul.f32 %v2414, %v2465
        %v2482 = vmul.f32 %v2416, %v2466
        %v2483 = vmul.f32 %v2418, %v2467
        %v2484 = vmul.f32 %v2420, %v2468
        %v2485 = vpack.c.bf16 %v2470, %v2469
        %v2486 = vpack.c.bf16 %v2472, %v2471
        %v2487 = vpack.c.bf16 %v2474, %v2473
        %v2488 = vpack.c.bf16 %v2476, %v2475
        %v2489 = vpack.c.bf16 %v2478, %v2477
        %v2490 = vpack.c.bf16 %v2480, %v2479
        %v2491 = vpack.c.bf16 %v2482, %v2481
        %v2492 = vpack.c.bf16 %v2484, %v2483
        %2493 = vmax.xlane.f32.xlu0 %v2279
        %v2494 = vpop.xlane.xlu0 %2493
        %2495 = vmax.xlane.f32.xlu0 %v2282
        %v2496 = vpop.xlane.xlu0 %2495
        %2497 = vmax.xlane.f32.xlu0 %v2287
        %v2498 = vpop.xlane.xlu0 %2497
        %2499 = vmax.xlane.f32.xlu0 %v2290
        %v2500 = vpop.xlane.xlu0 %2499
        %2501 = vmax.xlane.f32.xlu0 %v2295
        %v2502 = vpop.xlane.xlu0 %2501
        %2503 = vmax.xlane.f32.xlu0 %v2298
        %v2504 = vpop.xlane.xlu0 %2503
        %2505 = vmax.xlane.f32.xlu0 %v2303
        %v2506 = vpop.xlane.xlu0 %2505
        %2507 = vmax.xlane.f32.xlu0 %v2306
        %v2508 = vpop.xlane.xlu0 %2507
        %2509 = vmax.xlane.f32.xlu0 %v2311
        %v2510 = vpop.xlane.xlu0 %2509
        %2511 = vmax.xlane.f32.xlu0 %v2314
        %v2512 = vpop.xlane.xlu0 %2511
        %2513 = vmax.xlane.f32.xlu0 %v2319
        %v2514 = vpop.xlane.xlu0 %2513
        %2515 = vmax.xlane.f32.xlu0 %v2322
        %v2516 = vpop.xlane.xlu0 %2515
        %2517 = vmax.xlane.f32.xlu0 %v2327
        %v2518 = vpop.xlane.xlu0 %2517
        %2519 = vmax.xlane.f32.xlu0 %v2330
        %v2520 = vpop.xlane.xlu0 %2519
        %2521 = vmax.xlane.f32.xlu0 %v2335
        %v2522 = vpop.xlane.xlu0 %2521
        %2523 = vmax.xlane.f32.xlu0 %v2338
        %v2524 = vpop.xlane.xlu0 %2523
        %v2525 = vsub.f32 %v2279, %v2494
        %v2526 = vsub.f32 %v2282, %v2496
        %v2527 = vsub.f32 %v2287, %v2498
        %v2528 = vsub.f32 %v2290, %v2500
        %v2529 = vsub.f32 %v2295, %v2502
        %v2530 = vsub.f32 %v2298, %v2504
        %v2531 = vsub.f32 %v2303, %v2506
        %v2532 = vsub.f32 %v2306, %v2508
        %v2533 = vsub.f32 %v2311, %v2510
        %v2534 = vsub.f32 %v2314, %v2512
        %v2535 = vsub.f32 %v2319, %v2514
        %v2536 = vsub.f32 %v2322, %v2516
        %v2537 = vsub.f32 %v2327, %v2518
        %v2538 = vsub.f32 %v2330, %v2520
        %v2539 = vsub.f32 %v2335, %v2522
        %v2540 = vsub.f32 %v2338, %v2524
        %v2541 = vmul.f32 %v2525, 1.442695
        %v2542 = vpow.pop %v2541
        %v2543 = vmul.f32 %v2526, 1.442695
        %v2544 = vpow.pop %v2543
        %v2545 = vmul.f32 %v2527, 1.442695
        %v2546 = vpow.pop %v2545
        %v2547 = vmul.f32 %v2528, 1.442695
        %v2548 = vpow.pop %v2547
        %v2549 = vmul.f32 %v2529, 1.442695
        %v2550 = vpow.pop %v2549
        %v2551 = vmul.f32 %v2530, 1.442695
        %v2552 = vpow.pop %v2551
        %v2553 = vmul.f32 %v2531, 1.442695
        %v2554 = vpow.pop %v2553
        %v2555 = vmul.f32 %v2532, 1.442695
        %v2556 = vpow.pop %v2555
        %v2557 = vmul.f32 %v2533, 1.442695
        %v2558 = vpow.pop %v2557
        %v2559 = vmul.f32 %v2534, 1.442695
        %v2560 = vpow.pop %v2559
        %v2561 = vmul.f32 %v2535, 1.442695
        %v2562 = vpow.pop %v2561
        %v2563 = vmul.f32 %v2536, 1.442695
        %v2564 = vpow.pop %v2563
        %v2565 = vmul.f32 %v2537, 1.442695
        %v2566 = vpow.pop %v2565
        %v2567 = vmul.f32 %v2538, 1.442695
        %v2568 = vpow.pop %v2567
        %v2569 = vmul.f32 %v2539, 1.442695
        %v2570 = vpow.pop %v2569
        %v2571 = vmul.f32 %v2540, 1.442695
        %v2572 = vpow.pop %v2571
        %2573 = vadd.xlane.f32.xlu0 %v2542
        %v2574 = vpop.xlane.xlu0 %2573
        %2575 = vadd.xlane.f32.xlu0 %v2544
        %v2576 = vpop.xlane.xlu0 %2575
        %2577 = vadd.xlane.f32.xlu0 %v2546
        %v2578 = vpop.xlane.xlu0 %2577
        %2579 = vadd.xlane.f32.xlu0 %v2548
        %v2580 = vpop.xlane.xlu0 %2579
        %2581 = vadd.xlane.f32.xlu0 %v2550
        %v2582 = vpop.xlane.xlu0 %2581
        %2583 = vadd.xlane.f32.xlu0 %v2552
        %v2584 = vpop.xlane.xlu0 %2583
        %2585 = vadd.xlane.f32.xlu0 %v2554
        %v2586 = vpop.xlane.xlu0 %2585
        %2587 = vadd.xlane.f32.xlu0 %v2556
        %v2588 = vpop.xlane.xlu0 %2587
        %2589 = vadd.xlane.f32.xlu0 %v2558
        %v2590 = vpop.xlane.xlu0 %2589
        %2591 = vadd.xlane.f32.xlu0 %v2560
        %v2592 = vpop.xlane.xlu0 %2591
        %2593 = vadd.xlane.f32.xlu0 %v2562
        %v2594 = vpop.xlane.xlu0 %2593
        %2595 = vadd.xlane.f32.xlu0 %v2564
        %v2596 = vpop.xlane.xlu0 %2595
        %2597 = vadd.xlane.f32.xlu0 %v2566
        %v2598 = vpop.xlane.xlu0 %2597
        %2599 = vadd.xlane.f32.xlu0 %v2568
        %v2600 = vpop.xlane.xlu0 %2599
        %2601 = vadd.xlane.f32.xlu0 %v2570
        %v2602 = vpop.xlane.xlu0 %2601
        %2603 = vadd.xlane.f32.xlu0 %v2572
        %v2604 = vpop.xlane.xlu0 %2603
        %v2605 = vrcp.pop %v2574
        %v2606 = vrcp.pop %v2576
        %v2607 = vrcp.pop %v2578
        %v2608 = vrcp.pop %v2580
        %v2609 = vrcp.pop %v2582
        %v2610 = vrcp.pop %v2584
        %v2611 = vrcp.pop %v2586
        %v2612 = vrcp.pop %v2588
        %v2613 = vrcp.pop %v2590
        %v2614 = vrcp.pop %v2592
        %v2615 = vrcp.pop %v2594
        %v2616 = vrcp.pop %v2596
        %v2617 = vrcp.pop %v2598
        %v2618 = vrcp.pop %v2600
        %v2619 = vrcp.pop %v2602
        %v2620 = vrcp.pop %v2604
        %v2621 = vmul.f32 %v2542, %v2605
        %v2622 = vmul.f32 %v2544, %v2606
        %v2623 = vmul.f32 %v2546, %v2607
        %v2624 = vmul.f32 %v2548, %v2608
        %v2625 = vmul.f32 %v2550, %v2609
        %v2626 = vmul.f32 %v2552, %v2610
        %v2627 = vmul.f32 %v2554, %v2611
        %v2628 = vmul.f32 %v2556, %v2612
        %v2629 = vmul.f32 %v2558, %v2613
        %v2630 = vmul.f32 %v2560, %v2614
        %v2631 = vmul.f32 %v2562, %v2615
        %v2632 = vmul.f32 %v2564, %v2616
        %v2633 = vmul.f32 %v2566, %v2617
        %v2634 = vmul.f32 %v2568, %v2618
        %v2635 = vmul.f32 %v2570, %v2619
        %v2636 = vmul.f32 %v2572, %v2620
        %v2637 = vpack.c.bf16 %v2622, %v2621
        %v2638 = vpack.c.bf16 %v2624, %v2623
        %v2639 = vpack.c.bf16 %v2626, %v2625
        %v2640 = vpack.c.bf16 %v2628, %v2627
        %v2641 = vpack.c.bf16 %v2630, %v2629
        %v2642 = vpack.c.bf16 %v2632, %v2631
        %v2643 = vpack.c.bf16 %v2634, %v2633
        %v2644 = vpack.c.bf16 %v2636, %v2635
        %2645 = vmatprep.subr.bf16.mxu0 0
        %2646 = vmatpush1.bf16.msra.mxu0 %v2011
        %2647 = vmatprep.subr.bf16.mxu0 0
        %2648 = vmatpush1.bf16.msra.mxu0 %v2010
        %2649 = vmatprep.subr.bf16.mxu0 0
        %2650 = vmatpush1.bf16.msra.mxu0 %v2009
        %2651 = vmatprep.subr.bf16.mxu0 0
        %2652 = vmatpush1.bf16.msra.mxu0 %v2008
        %2653 = vmatprep.subr.bf16.mxu0 0
        %2654 = vmatpush1.bf16.msra.mxu0 %v2007
        %2655 = vmatprep.subr.bf16.mxu0 0
        %2656 = vmatpush1.bf16.msra.mxu0 %v2006
        %2657 = vmatprep.subr.bf16.mxu0 0
        %2658 = vmatpush1.bf16.msra.mxu0 %v2005
        %2659 = vmatprep.subr.bf16.mxu0 0
        %2660 = vmatpush1.bf16.msra.mxu0 %v2004
        %2661 = vmatprep.subr.bf16.mxu0 0
        %2662 = vmatpush2.bf16.msra.mxu0 0
        %2663 = vmatprep.subr.bf16.mxu0 0
        %2664 = vmatpush2.bf16.msra.mxu0 0
        %2665 = vmatprep.subr.bf16.mxu0 0
        %2666 = vmatpush2.bf16.msra.mxu0 0
        %2667 = vmatprep.subr.bf16.mxu0 0
        %2668 = vmatpush2.bf16.msra.mxu0 0
        %2669 = vmatprep.subr.bf16.mxu0 0
        %2670 = vmatpush2.bf16.msra.mxu0 0
        %2671 = vmatprep.subr.bf16.mxu0 0
        %2672 = vmatpush2.bf16.msra.mxu0 0
        %2673 = vmatprep.subr.bf16.mxu0 0
        %2674 = vmatpush2.bf16.msra.mxu0 0
        %2675 = vmatprep.subr.bf16.mxu0 0
        %2676 = vmatpush2.bf16.msra.mxu0 0
        %2677 = vmatprep.mubr.bf16.mxu0 0
        %2678 = vmatmul.mubr.bf16.gmra.mxu0 %v2485
        %v2679 = vpop.f32.mrf.mxu0
        %v2680 = vadd.f32 0.0, %v2679
        %v2681 = vpop.f32.mrf.mxu0
        %v2682 = vpop.f32.mrf.mxu0
        %v2683 = vadd.f32 0.0, %v2682
        %v2684 = vpop.f32.mrf.mxu0
        %2685 = vmatprep.mubr.bf16.mxu0 0
        %2686 = vmatmul.mubr.bf16.gmra.mxu0 %v2486
        %v2687 = vpop.f32.mrf.mxu0
        %v2688 = vadd.f32 0.0, %v2687
        %v2689 = vpop.f32.mrf.mxu0
        %v2690 = vpop.f32.mrf.mxu0
        %v2691 = vadd.f32 0.0, %v2690
        %v2692 = vpop.f32.mrf.mxu0
        %2693 = vmatprep.mubr.bf16.mxu0 0
        %2694 = vmatmul.mubr.bf16.gmra.mxu0 %v2487
        %v2695 = vpop.f32.mrf.mxu0
        %v2696 = vadd.f32 0.0, %v2695
        %v2697 = vpop.f32.mrf.mxu0
        %v2698 = vpop.f32.mrf.mxu0
        %v2699 = vadd.f32 0.0, %v2698
        %v2700 = vpop.f32.mrf.mxu0
        %2701 = vmatprep.mubr.bf16.mxu0 0
        %2702 = vmatmul.mubr.bf16.gmra.mxu0 %v2488
        %v2703 = vpop.f32.mrf.mxu0
        %v2704 = vadd.f32 0.0, %v2703
        %v2705 = vpop.f32.mrf.mxu0
        %v2706 = vpop.f32.mrf.mxu0
        %v2707 = vadd.f32 0.0, %v2706
        %v2708 = vpop.f32.mrf.mxu0
        %2709 = vmatprep.mubr.bf16.mxu0 0
        %2710 = vmatmul.mubr.bf16.gmra.mxu0 %v2489
        %v2711 = vpop.f32.mrf.mxu0
        %v2712 = vadd.f32 0.0, %v2711
        %v2713 = vpop.f32.mrf.mxu0
        %v2714 = vpop.f32.mrf.mxu0
        %v2715 = vadd.f32 0.0, %v2714
        %v2716 = vpop.f32.mrf.mxu0
        %2717 = vmatprep.mubr.bf16.mxu0 0
        %2718 = vmatmul.mubr.bf16.gmra.mxu0 %v2490
        %v2719 = vpop.f32.mrf.mxu0
        %v2720 = vadd.f32 0.0, %v2719
        %v2721 = vpop.f32.mrf.mxu0
        %v2722 = vpop.f32.mrf.mxu0
        %v2723 = vadd.f32 0.0, %v2722
        %v2724 = vpop.f32.mrf.mxu0
        %2725 = vmatprep.mubr.bf16.mxu0 0
        %2726 = vmatmul.mubr.bf16.gmra.mxu0 %v2491
        %v2727 = vpop.f32.mrf.mxu0
        %v2728 = vadd.f32 0.0, %v2727
        %v2729 = vpop.f32.mrf.mxu0
        %v2730 = vpop.f32.mrf.mxu0
        %v2731 = vadd.f32 0.0, %v2730
        %v2732 = vpop.f32.mrf.mxu0
        %2733 = vmatprep.mubr.bf16.mxu0 0
        %2734 = vmatmul.mubr.bf16.gmra.mxu0 %v2492
        %v2735 = vpop.f32.mrf.mxu0
        %v2736 = vadd.f32 0.0, %v2735
        %v2737 = vpop.f32.mrf.mxu0
        %v2738 = vpop.f32.mrf.mxu0
        %v2739 = vadd.f32 0.0, %v2738
        %v2740 = vpop.f32.mrf.mxu0
        %2741 = vdwg.mxu0
        %2742 = vmatprep.subr.bf16.mxu0 0
        %2743 = vmatpush1.bf16.msra.mxu0 %v2003
        %2744 = vmatprep.subr.bf16.mxu0 0
        %2745 = vmatpush1.bf16.msra.mxu0 %v2002
        %2746 = vmatprep.subr.bf16.mxu0 0
        %2747 = vmatpush1.bf16.msra.mxu0 %v2001
        %2748 = vmatprep.subr.bf16.mxu0 0
        %2749 = vmatpush1.bf16.msra.mxu0 %v2000
        %2750 = vmatprep.subr.bf16.mxu0 0
        %2751 = vmatpush1.bf16.msra.mxu0 %v1999
        %2752 = vmatprep.subr.bf16.mxu0 0
        %2753 = vmatpush1.bf16.msra.mxu0 %v1998
        %2754 = vmatprep.subr.bf16.mxu0 0
        %2755 = vmatpush1.bf16.msra.mxu0 %v1997
        %2756 = vmatprep.subr.bf16.mxu0 0
        %2757 = vmatpush1.bf16.msra.mxu0 %v1996
        %2758 = vmatprep.subr.bf16.mxu0 0
        %2759 = vmatpush2.bf16.msra.mxu0 0
        %2760 = vmatprep.subr.bf16.mxu0 0
        %2761 = vmatpush2.bf16.msra.mxu0 0
        %2762 = vmatprep.subr.bf16.mxu0 0
        %2763 = vmatpush2.bf16.msra.mxu0 0
        %2764 = vmatprep.subr.bf16.mxu0 0
        %2765 = vmatpush2.bf16.msra.mxu0 0
        %2766 = vmatprep.subr.bf16.mxu0 0
        %2767 = vmatpush2.bf16.msra.mxu0 0
        %2768 = vmatprep.subr.bf16.mxu0 0
        %2769 = vmatpush2.bf16.msra.mxu0 0
        %2770 = vmatprep.subr.bf16.mxu0 0
        %2771 = vmatpush2.bf16.msra.mxu0 0
        %2772 = vmatprep.subr.bf16.mxu0 0
        %2773 = vmatpush2.bf16.msra.mxu0 0
        %2774 = vmatprep.mubr.bf16.mxu0 0
        %2775 = vmatmul.mubr.bf16.gmra.mxu0 %v2637
        %v2776 = vpop.f32.mrf.mxu0
        %v2777 = vadd.f32 0.0, %v2776
        %v2778 = vpop.f32.mrf.mxu0
        %v2779 = vpop.f32.mrf.mxu0
        %v2780 = vadd.f32 0.0, %v2779
        %v2781 = vpop.f32.mrf.mxu0
        %2782 = vmatprep.mubr.bf16.mxu0 0
        %2783 = vmatmul.mubr.bf16.gmra.mxu0 %v2638
        %v2784 = vpop.f32.mrf.mxu0
        %v2785 = vadd.f32 0.0, %v2784
        %v2786 = vpop.f32.mrf.mxu0
        %v2787 = vpop.f32.mrf.mxu0
        %v2788 = vadd.f32 0.0, %v2787
        %v2789 = vpop.f32.mrf.mxu0
        %2790 = vmatprep.mubr.bf16.mxu0 0
        %2791 = vmatmul.mubr.bf16.gmra.mxu0 %v2639
        %v2792 = vpop.f32.mrf.mxu0
        %v2793 = vadd.f32 0.0, %v2792
        %v2794 = vpop.f32.mrf.mxu0
        %v2795 = vpop.f32.mrf.mxu0
        %v2796 = vadd.f32 0.0, %v2795
        %v2797 = vpop.f32.mrf.mxu0
        %2798 = vmatprep.mubr.bf16.mxu0 0
        %2799 = vmatmul.mubr.bf16.gmra.mxu0 %v2640
        %v2800 = vpop.f32.mrf.mxu0
        %v2801 = vadd.f32 0.0, %v2800
        %v2802 = vpop.f32.mrf.mxu0
        %v2803 = vpop.f32.mrf.mxu0
        %v2804 = vadd.f32 0.0, %v2803
        %v2805 = vpop.f32.mrf.mxu0
        %2806 = vmatprep.mubr.bf16.mxu0 0
        %2807 = vmatmul.mubr.bf16.gmra.mxu0 %v2641
        %v2808 = vpop.f32.mrf.mxu0
        %v2809 = vadd.f32 0.0, %v2808
        %v2810 = vpop.f32.mrf.mxu0
        %v2811 = vpop.f32.mrf.mxu0
        %v2812 = vadd.f32 0.0, %v2811
        %v2813 = vpop.f32.mrf.mxu0
        %2814 = vmatprep.mubr.bf16.mxu0 0
        %2815 = vmatmul.mubr.bf16.gmra.mxu0 %v2642
        %v2816 = vpop.f32.mrf.mxu0
        %v2817 = vadd.f32 0.0, %v2816
        %v2818 = vpop.f32.mrf.mxu0
        %v2819 = vpop.f32.mrf.mxu0
        %v2820 = vadd.f32 0.0, %v2819
        %v2821 = vpop.f32.mrf.mxu0
        %2822 = vmatprep.mubr.bf16.mxu0 0
        %2823 = vmatmul.mubr.bf16.gmra.mxu0 %v2643
        %v2824 = vpop.f32.mrf.mxu0
        %v2825 = vadd.f32 0.0, %v2824
        %v2826 = vpop.f32.mrf.mxu0
        %v2827 = vpop.f32.mrf.mxu0
        %v2828 = vadd.f32 0.0, %v2827
        %v2829 = vpop.f32.mrf.mxu0
        %2830 = vmatprep.mubr.bf16.mxu0 0
        %2831 = vmatmul.mubr.bf16.gmra.mxu0 %v2644
        %v2832 = vpop.f32.mrf.mxu0
        %v2833 = vadd.f32 0.0, %v2832
        %v2834 = vpop.f32.mrf.mxu0
        %v2835 = vpop.f32.mrf.mxu0
        %v2836 = vadd.f32 0.0, %v2835
        %v2837 = vpop.f32.mrf.mxu0
        %2838 = vdwg.mxu0
        %s2839 = scalar_lea.vmem [#allocation9], 512
        %v2840 = vld [vmem:[%s2839] sm:$0xff]
        %v2841 = vld [vmem:[%s2839 + $0x8] sm:$0xff]
        %v2842 = vld [vmem:[%s2839 + $0x10] sm:$0xff]
        %v2843 = vld [vmem:[%s2839 + $0x18] sm:$0xff]
        %v2844 = vld [vmem:[%s2839 + $0x20] sm:$0xff]
        %v2845 = vld [vmem:[%s2839 + $0x28] sm:$0xff]
        %v2846 = vld [vmem:[%s2839 + $0x30] sm:$0xff]
        %v2847 = vld [vmem:[%s2839 + $0x38] sm:$0xff]
        %v2848 = vld [vmem:[%s2839 + $0x40] sm:$0xff]
        %v2849 = vld [vmem:[%s2839 + $0x48] sm:$0xff]
        %v2850 = vld [vmem:[%s2839 + $0x50] sm:$0xff]
        %v2851 = vld [vmem:[%s2839 + $0x58] sm:$0xff]
        %v2852 = vld [vmem:[%s2839 + $0x60] sm:$0xff]
        %v2853 = vld [vmem:[%s2839 + $0x68] sm:$0xff]
        %v2854 = vld [vmem:[%s2839 + $0x70] sm:$0xff]
        %v2855 = vld [vmem:[%s2839 + $0x78] sm:$0xff]
        %v2856 = vld [vmem:[%s2839 + $0x80] sm:$0xff]
        %v2857 = vld [vmem:[%s2839 + $0x88] sm:$0xff]
        %v2858 = vld [vmem:[%s2839 + $0x90] sm:$0xff]
        %v2859 = vld [vmem:[%s2839 + $0x98] sm:$0xff]
        %v2860 = vld [vmem:[%s2839 + $0xa0] sm:$0xff]
        %v2861 = vld [vmem:[%s2839 + $0xa8] sm:$0xff]
        %v2862 = vld [vmem:[%s2839 + $0xb0] sm:$0xff]
        %v2863 = vld [vmem:[%s2839 + $0xb8] sm:$0xff]
        %v2864 = vld [vmem:[%s2839 + $0xc0] sm:$0xff]
        %v2865 = vld [vmem:[%s2839 + $0xc8] sm:$0xff]
        %v2866 = vld [vmem:[%s2839 + $0xd0] sm:$0xff]
        %v2867 = vld [vmem:[%s2839 + $0xd8] sm:$0xff]
        %v2868 = vld [vmem:[%s2839 + $0xe0] sm:$0xff]
        %v2869 = vld [vmem:[%s2839 + $0xe8] sm:$0xff]
        %v2870 = vld [vmem:[%s2839 + $0xf0] sm:$0xff]
        %v2871 = vld [vmem:[%s2839 + $0xf8] sm:$0xff]
        %v2872 = vld [vmem:[%s2839 + $0x100] sm:$0xff]
        %v2873 = vld [vmem:[%s2839 + $0x108] sm:$0xff]
        %v2874 = vld [vmem:[%s2839 + $0x110] sm:$0xff]
        %v2875 = vld [vmem:[%s2839 + $0x118] sm:$0xff]
        %v2876 = vld [vmem:[%s2839 + $0x120] sm:$0xff]
        %v2877 = vld [vmem:[%s2839 + $0x128] sm:$0xff]
        %v2878 = vld [vmem:[%s2839 + $0x130] sm:$0xff]
        %v2879 = vld [vmem:[%s2839 + $0x138] sm:$0xff]
        %v2880 = vld [vmem:[%s2839 + $0x140] sm:$0xff]
        %v2881 = vld [vmem:[%s2839 + $0x148] sm:$0xff]
        %v2882 = vld [vmem:[%s2839 + $0x150] sm:$0xff]
        %v2883 = vld [vmem:[%s2839 + $0x158] sm:$0xff]
        %v2884 = vld [vmem:[%s2839 + $0x160] sm:$0xff]
        %v2885 = vld [vmem:[%s2839 + $0x168] sm:$0xff]
        %v2886 = vld [vmem:[%s2839 + $0x170] sm:$0xff]
        %v2887 = vld [vmem:[%s2839 + $0x178] sm:$0xff]
        %v2888 = vld [vmem:[%s2839 + $0x180] sm:$0xff]
        %v2889 = vld [vmem:[%s2839 + $0x188] sm:$0xff]
        %v2890 = vld [vmem:[%s2839 + $0x190] sm:$0xff]
        %v2891 = vld [vmem:[%s2839 + $0x198] sm:$0xff]
        %v2892 = vld [vmem:[%s2839 + $0x1a0] sm:$0xff]
        %v2893 = vld [vmem:[%s2839 + $0x1a8] sm:$0xff]
        %v2894 = vld [vmem:[%s2839 + $0x1b0] sm:$0xff]
        %v2895 = vld [vmem:[%s2839 + $0x1b8] sm:$0xff]
        %v2896 = vld [vmem:[%s2839 + $0x1c0] sm:$0xff]
        %v2897 = vld [vmem:[%s2839 + $0x1c8] sm:$0xff]
        %v2898 = vld [vmem:[%s2839 + $0x1d0] sm:$0xff]
        %v2899 = vld [vmem:[%s2839 + $0x1d8] sm:$0xff]
        %v2900 = vld [vmem:[%s2839 + $0x1e0] sm:$0xff]
        %v2901 = vld [vmem:[%s2839 + $0x1e8] sm:$0xff]
        %v2902 = vld [vmem:[%s2839 + $0x1f0] sm:$0xff]
        %v2903 = vld [vmem:[%s2839 + $0x1f8] sm:$0xff]
        %s2904 = scalar_lea.vmem %s9, 2
        %v2905 = vld [vmem:[%s2904] sm:$0x3]
        %v2906 = vpack.c.bf16 %v2683, %v2680
        %v2907 = vpack.c.bf16 %v2691, %v2688
        %v2908 = vpack.c.bf16 %v2699, %v2696
        %v2909 = vpack.c.bf16 %v2707, %v2704
        %v2910 = vpack.c.bf16 %v2715, %v2712
        %v2911 = vpack.c.bf16 %v2723, %v2720
        %v2912 = vpack.c.bf16 %v2731, %v2728
        %v2913 = vpack.c.bf16 %v2739, %v2736
        %2914 = vmatprep.subr.bf16.mxu0 0
        %2915 = vmatpush1.bf16.msra.mxu0 %v2913
        %2916 = vmatprep.subr.bf16.mxu0 0
        %2917 = vmatpush1.bf16.msra.mxu0 %v2912
        %2918 = vmatprep.subr.bf16.mxu0 0
        %2919 = vmatpush1.bf16.msra.mxu0 %v2911
        %2920 = vmatprep.subr.bf16.mxu0 0
        %2921 = vmatpush1.bf16.msra.mxu0 %v2910
        %2922 = vmatprep.subr.bf16.mxu0 0
        %2923 = vmatpush1.bf16.msra.mxu0 %v2909
        %2924 = vmatprep.subr.bf16.mxu0 0
        %2925 = vmatpush1.bf16.msra.mxu0 %v2908
        %2926 = vmatprep.subr.bf16.mxu0 0
        %2927 = vmatpush1.bf16.msra.mxu0 %v2907
        %2928 = vmatprep.subr.bf16.mxu0 0
        %2929 = vmatpush1.bf16.msra.mxu0 %v2906
        %2930 = vmatprep.subr.bf16.mxu0 0
        %2931 = vmatpush2.bf16.msra.mxu0 0
        %2932 = vmatprep.subr.bf16.mxu0 0
        %2933 = vmatpush2.bf16.msra.mxu0 0
        %2934 = vmatprep.subr.bf16.mxu0 0
        %2935 = vmatpush2.bf16.msra.mxu0 0
        %2936 = vmatprep.subr.bf16.mxu0 0
        %2937 = vmatpush2.bf16.msra.mxu0 0
        %2938 = vmatprep.subr.bf16.mxu0 0
        %2939 = vmatpush2.bf16.msra.mxu0 0
        %2940 = vmatprep.subr.bf16.mxu0 0
        %2941 = vmatpush2.bf16.msra.mxu0 0
        %2942 = vmatprep.subr.bf16.mxu0 0
        %2943 = vmatpush2.bf16.msra.mxu0 0
        %2944 = vmatprep.subr.bf16.mxu0 0
        %2945 = vmatpush2.bf16.msra.mxu0 0
        %2946 = vmatprep.mubr.bf16.mxu0 0
        %2947 = vmatmul.mubr.bf16.gmra.mxu0 %v1388
        %v2948 = vpop.f32.mrf.mxu0
        %v2949 = vadd.f32 0.0, %v2948
        %v2950 = vpop.f32.mrf.mxu0
        %v2951 = vpop.f32.mrf.mxu0
        %v2952 = vadd.f32 0.0, %v2951
        %v2953 = vpop.f32.mrf.mxu0
        %2954 = vmatprep.mubr.bf16.mxu0 0
        %2955 = vmatmul.mubr.bf16.gmra.mxu0 %v1389
        %v2956 = vpop.f32.mrf.mxu0
        %v2957 = vadd.f32 0.0, %v2956
        %v2958 = vpop.f32.mrf.mxu0
        %v2959 = vpop.f32.mrf.mxu0
        %v2960 = vadd.f32 0.0, %v2959
        %v2961 = vpop.f32.mrf.mxu0
        %2962 = vmatprep.mubr.bf16.mxu0 0
        %2963 = vmatmul.mubr.bf16.gmra.mxu0 %v1390
        %v2964 = vpop.f32.mrf.mxu0
        %v2965 = vadd.f32 0.0, %v2964
        %v2966 = vpop.f32.mrf.mxu0
        %v2967 = vpop.f32.mrf.mxu0
        %v2968 = vadd.f32 0.0, %v2967
        %v2969 = vpop.f32.mrf.mxu0
        %2970 = vmatprep.mubr.bf16.mxu0 0
        %2971 = vmatmul.mubr.bf16.gmra.mxu0 %v1391
        %v2972 = vpop.f32.mrf.mxu0
        %v2973 = vadd.f32 0.0, %v2972
        %v2974 = vpop.f32.mrf.mxu0
        %v2975 = vpop.f32.mrf.mxu0
        %v2976 = vadd.f32 0.0, %v2975
        %v2977 = vpop.f32.mrf.mxu0
        %2978 = vmatprep.mubr.bf16.mxu0 0
        %2979 = vmatmul.mubr.bf16.gmra.mxu0 %v1392
        %v2980 = vpop.f32.mrf.mxu0
        %v2981 = vadd.f32 0.0, %v2980
        %v2982 = vpop.f32.mrf.mxu0
        %v2983 = vpop.f32.mrf.mxu0
        %v2984 = vadd.f32 0.0, %v2983
        %v2985 = vpop.f32.mrf.mxu0
        %2986 = vmatprep.mubr.bf16.mxu0 0
        %2987 = vmatmul.mubr.bf16.gmra.mxu0 %v1393
        %v2988 = vpop.f32.mrf.mxu0
        %v2989 = vadd.f32 0.0, %v2988
        %v2990 = vpop.f32.mrf.mxu0
        %v2991 = vpop.f32.mrf.mxu0
        %v2992 = vadd.f32 0.0, %v2991
        %v2993 = vpop.f32.mrf.mxu0
        %2994 = vmatprep.mubr.bf16.mxu0 0
        %2995 = vmatmul.mubr.bf16.gmra.mxu0 %v1394
        %v2996 = vpop.f32.mrf.mxu0
        %v2997 = vadd.f32 0.0, %v2996
        %v2998 = vpop.f32.mrf.mxu0
        %v2999 = vpop.f32.mrf.mxu0
        %v3000 = vadd.f32 0.0, %v2999
        %v3001 = vpop.f32.mrf.mxu0
        %3002 = vmatprep.mubr.bf16.mxu0 0
        %3003 = vmatmul.mubr.bf16.gmra.mxu0 %v1395
        %v3004 = vpop.f32.mrf.mxu0
        %v3005 = vadd.f32 0.0, %v3004
        %v3006 = vpop.f32.mrf.mxu0
        %v3007 = vpop.f32.mrf.mxu0
        %v3008 = vadd.f32 0.0, %v3007
        %v3009 = vpop.f32.mrf.mxu0
        %3010 = vdwg.mxu0
        %v3011 = vpack.c.bf16 %v2780, %v2777
        %v3012 = vpack.c.bf16 %v2788, %v2785
        %v3013 = vpack.c.bf16 %v2796, %v2793
        %v3014 = vpack.c.bf16 %v2804, %v2801
        %v3015 = vpack.c.bf16 %v2812, %v2809
        %v3016 = vpack.c.bf16 %v2820, %v2817
        %v3017 = vpack.c.bf16 %v2828, %v2825
        %v3018 = vpack.c.bf16 %v2836, %v2833
        %3019 = vmatprep.subr.bf16.mxu0 0
        %3020 = vmatpush1.bf16.msra.mxu0 %v3018
        %3021 = vmatprep.subr.bf16.mxu0 0
        %3022 = vmatpush1.bf16.msra.mxu0 %v3017
        %3023 = vmatprep.subr.bf16.mxu0 0
        %3024 = vmatpush1.bf16.msra.mxu0 %v3016
        %3025 = vmatprep.subr.bf16.mxu0 0
        %3026 = vmatpush1.bf16.msra.mxu0 %v3015
        %3027 = vmatprep.subr.bf16.mxu0 0
        %3028 = vmatpush1.bf16.msra.mxu0 %v3014
        %3029 = vmatprep.subr.bf16.mxu0 0
        %3030 = vmatpush1.bf16.msra.mxu0 %v3013
        %3031 = vmatprep.subr.bf16.mxu0 0
        %3032 = vmatpush1.bf16.msra.mxu0 %v3012
        %3033 = vmatprep.subr.bf16.mxu0 0
        %3034 = vmatpush1.bf16.msra.mxu0 %v3011
        %3035 = vmatprep.subr.bf16.mxu0 0
        %3036 = vmatpush2.bf16.msra.mxu0 0
        %3037 = vmatprep.subr.bf16.mxu0 0
        %3038 = vmatpush2.bf16.msra.mxu0 0
        %3039 = vmatprep.subr.bf16.mxu0 0
        %3040 = vmatpush2.bf16.msra.mxu0 0
        %3041 = vmatprep.subr.bf16.mxu0 0
        %3042 = vmatpush2.bf16.msra.mxu0 0
        %3043 = vmatprep.subr.bf16.mxu0 0
        %3044 = vmatpush2.bf16.msra.mxu0 0
        %3045 = vmatprep.subr.bf16.mxu0 0
        %3046 = vmatpush2.bf16.msra.mxu0 0
        %3047 = vmatprep.subr.bf16.mxu0 0
        %3048 = vmatpush2.bf16.msra.mxu0 0
        %3049 = vmatprep.subr.bf16.mxu0 0
        %3050 = vmatpush2.bf16.msra.mxu0 0
        %3051 = vmatprep.mubr.bf16.mxu0 0
        %3052 = vmatmul.mubr.bf16.gmra.mxu0 %v1396
        %v3053 = vpop.f32.mrf.mxu0
        %v3054 = vadd.f32 0.0, %v3053
        %v3055 = vpop.f32.mrf.mxu0
        %v3056 = vpop.f32.mrf.mxu0
        %v3057 = vadd.f32 0.0, %v3056
        %v3058 = vpop.f32.mrf.mxu0
        %3059 = vmatprep.mubr.bf16.mxu0 0
        %3060 = vmatmul.mubr.bf16.gmra.mxu0 %v1397
        %v3061 = vpop.f32.mrf.mxu0
        %v3062 = vadd.f32 0.0, %v3061
        %v3063 = vpop.f32.mrf.mxu0
        %v3064 = vpop.f32.mrf.mxu0
        %v3065 = vadd.f32 0.0, %v3064
        %v3066 = vpop.f32.mrf.mxu0
        %3067 = vmatprep.mubr.bf16.mxu0 0
        %3068 = vmatmul.mubr.bf16.gmra.mxu0 %v1398
        %v3069 = vpop.f32.mrf.mxu0
        %v3070 = vadd.f32 0.0, %v3069
        %v3071 = vpop.f32.mrf.mxu0
        %v3072 = vpop.f32.mrf.mxu0
        %v3073 = vadd.f32 0.0, %v3072
        %v3074 = vpop.f32.mrf.mxu0
        %3075 = vmatprep.mubr.bf16.mxu0 0
        %3076 = vmatmul.mubr.bf16.gmra.mxu0 %v1399
        %v3077 = vpop.f32.mrf.mxu0
        %v3078 = vadd.f32 0.0, %v3077
        %v3079 = vpop.f32.mrf.mxu0
        %v3080 = vpop.f32.mrf.mxu0
        %v3081 = vadd.f32 0.0, %v3080
        %v3082 = vpop.f32.mrf.mxu0
        %3083 = vmatprep.mubr.bf16.mxu0 0
        %3084 = vmatmul.mubr.bf16.gmra.mxu0 %v1400
        %v3085 = vpop.f32.mrf.mxu0
        %v3086 = vadd.f32 0.0, %v3085
        %v3087 = vpop.f32.mrf.mxu0
        %v3088 = vpop.f32.mrf.mxu0
        %v3089 = vadd.f32 0.0, %v3088
        %v3090 = vpop.f32.mrf.mxu0
        %3091 = vmatprep.mubr.bf16.mxu0 0
        %3092 = vmatmul.mubr.bf16.gmra.mxu0 %v1401
        %v3093 = vpop.f32.mrf.mxu0
        %v3094 = vadd.f32 0.0, %v3093
        %v3095 = vpop.f32.mrf.mxu0
        %v3096 = vpop.f32.mrf.mxu0
        %v3097 = vadd.f32 0.0, %v3096
        %v3098 = vpop.f32.mrf.mxu0
        %3099 = vmatprep.mubr.bf16.mxu0 0
        %3100 = vmatmul.mubr.bf16.gmra.mxu0 %v1402
        %v3101 = vpop.f32.mrf.mxu0
        %v3102 = vadd.f32 0.0, %v3101
        %v3103 = vpop.f32.mrf.mxu0
        %v3104 = vpop.f32.mrf.mxu0
        %v3105 = vadd.f32 0.0, %v3104
        %v3106 = vpop.f32.mrf.mxu0
        %3107 = vmatprep.mubr.bf16.mxu0 0
        %3108 = vmatmul.mubr.bf16.gmra.mxu0 %v1403
        %v3109 = vpop.f32.mrf.mxu0
        %v3110 = vadd.f32 0.0, %v3109
        %v3111 = vpop.f32.mrf.mxu0
        %v3112 = vpop.f32.mrf.mxu0
        %v3113 = vadd.f32 0.0, %v3112
        %v3114 = vpop.f32.mrf.mxu0
        %3115 = vdwg.mxu0
        %v3116 = vpack.c.bf16 %v2952, %v2949
        %v3117 = vpack.c.bf16 %v3057, %v3054
        %v3118 = vpack.c.bf16 %v2960, %v2957
        %v3119 = vpack.c.bf16 %v3065, %v3062
        %v3120 = vpack.c.bf16 %v2968, %v2965
        %v3121 = vpack.c.bf16 %v3073, %v3070
        %v3122 = vpack.c.bf16 %v2976, %v2973
        %v3123 = vpack.c.bf16 %v3081, %v3078
        %v3124 = vpack.c.bf16 %v2984, %v2981
        %v3125 = vpack.c.bf16 %v3089, %v3086
        %v3126 = vpack.c.bf16 %v2992, %v2989
        %v3127 = vpack.c.bf16 %v3097, %v3094
        %v3128 = vpack.c.bf16 %v3000, %v2997
        %v3129 = vpack.c.bf16 %v3105, %v3102
        %v3130 = vpack.c.bf16 %v3008, %v3005
        %v3131 = vpack.c.bf16 %v3113, %v3110
        %v3132 = vpack.c.bf16 %v2842, %v2840
        %v3133 = vpack.c.bf16 %v2843, %v2841
        %v3134 = vpack.c.bf16 %v2846, %v2844
        %v3135 = vpack.c.bf16 %v2847, %v2845
        %v3136 = vpack.c.bf16 %v2850, %v2848
        %v3137 = vpack.c.bf16 %v2851, %v2849
        %v3138 = vpack.c.bf16 %v2854, %v2852
        %v3139 = vpack.c.bf16 %v2855, %v2853
        %v3140 = vpack.c.bf16 %v2858, %v2856
        %v3141 = vpack.c.bf16 %v2859, %v2857
        %v3142 = vpack.c.bf16 %v2862, %v2860
        %v3143 = vpack.c.bf16 %v2863, %v2861
        %v3144 = vpack.c.bf16 %v2866, %v2864
        %v3145 = vpack.c.bf16 %v2867, %v2865
        %v3146 = vpack.c.bf16 %v2870, %v2868
        %v3147 = vpack.c.bf16 %v2871, %v2869
        %v3148 = vpack.c.bf16 %v2874, %v2872
        %v3149 = vpack.c.bf16 %v2875, %v2873
        %v3150 = vpack.c.bf16 %v2878, %v2876
        %v3151 = vpack.c.bf16 %v2879, %v2877
        %v3152 = vpack.c.bf16 %v2882, %v2880
        %v3153 = vpack.c.bf16 %v2883, %v2881
        %v3154 = vpack.c.bf16 %v2886, %v2884
        %v3155 = vpack.c.bf16 %v2887, %v2885
        %v3156 = vpack.c.bf16 %v2890, %v2888
        %v3157 = vpack.c.bf16 %v2891, %v2889
        %v3158 = vpack.c.bf16 %v2894, %v2892
        %v3159 = vpack.c.bf16 %v2895, %v2893
        %v3160 = vpack.c.bf16 %v2898, %v2896
        %v3161 = vpack.c.bf16 %v2899, %v2897
        %v3162 = vpack.c.bf16 %v2902, %v2900
        %v3163 = vpack.c.bf16 %v2903, %v2901
        %v3165 = vlaneseq
        %v3166 = vshrl.u32 %v3165, 7
        %v3167 = vsub.s32 0, %v3166
        %v3168 = vrot.slane %v2905, %v3167
        %v3169 = vlaneseq
        %v3170 = vshrl.u32 %v3169, 7
        %v3171 = vsub.s32 1, %v3170
        %v3172 = vrot.slane %v2905, %v3171
        %3175 = vmatprep.subr.bf16.mxu0 %v3147
        %3176 = vmatpush1.bf16.msra.mxu0 %v3146
        %3177 = vmatprep.subr.bf16.mxu0 %v3145
        %3178 = vmatpush1.bf16.msra.mxu0 %v3144
        %3179 = vmatprep.subr.bf16.mxu0 %v3143
        %3180 = vmatpush1.bf16.msra.mxu0 %v3142
        %3181 = vmatprep.subr.bf16.mxu0 %v3141
        %3182 = vmatpush1.bf16.msra.mxu0 %v3140
        %3183 = vmatprep.subr.bf16.mxu0 %v3139
        %3184 = vmatpush1.bf16.msra.mxu0 %v3138
        %3185 = vmatprep.subr.bf16.mxu0 %v3137
        %3186 = vmatpush1.bf16.msra.mxu0 %v3136
        %3187 = vmatprep.subr.bf16.mxu0 %v3135
        %3188 = vmatpush1.bf16.msra.mxu0 %v3134
        %3189 = vmatprep.subr.bf16.mxu0 %v3133
        %3190 = vmatpush1.bf16.msra.mxu0 %v3132
        %3191 = vmatprep.subr.bf16.mxu0 %v3163
        %3192 = vmatpush2.bf16.msra.mxu0 %v3162
        %3193 = vmatprep.subr.bf16.mxu0 %v3161
        %3194 = vmatpush2.bf16.msra.mxu0 %v3160
        %3195 = vmatprep.subr.bf16.mxu0 %v3159
        %3196 = vmatpush2.bf16.msra.mxu0 %v3158
        %3197 = vmatprep.subr.bf16.mxu0 %v3157
        %3198 = vmatpush2.bf16.msra.mxu0 %v3156
        %3199 = vmatprep.subr.bf16.mxu0 %v3155
        %3200 = vmatpush2.bf16.msra.mxu0 %v3154
        %3201 = vmatprep.subr.bf16.mxu0 %v3153
        %3202 = vmatpush2.bf16.msra.mxu0 %v3152
        %3203 = vmatprep.subr.bf16.mxu0 %v3151
        %3204 = vmatpush2.bf16.msra.mxu0 %v3150
        %3205 = vmatprep.subr.bf16.mxu0 %v3149
        %3206 = vmatpush2.bf16.msra.mxu0 %v3148
        %3207 = vmatprep.mubr.bf16.mxu0 %v3117
        %3208 = vmatmul.mubr.bf16.gmra.mxu0 %v3116
        %v3209 = vpop.f32.mrf.mxu0
        %v3210 = vadd.f32 %v3168, %v3209
        %v3211 = vpop.f32.mrf.mxu0
        %v3212 = vadd.f32 %v3172, %v3211
        %v3213 = vpop.f32.mrf.mxu0
        %v3214 = vadd.f32 %v3168, %v3213
        %v3215 = vpop.f32.mrf.mxu0
        %v3216 = vadd.f32 %v3172, %v3215
        %3217 = vmatprep.mubr.bf16.mxu0 %v3119
        %3218 = vmatmul.mubr.bf16.gmra.mxu0 %v3118
        %v3219 = vpop.f32.mrf.mxu0
        %v3220 = vadd.f32 %v3168, %v3219
        %v3221 = vpop.f32.mrf.mxu0
        %v3222 = vadd.f32 %v3172, %v3221
        %v3223 = vpop.f32.mrf.mxu0
        %v3224 = vadd.f32 %v3168, %v3223
        %v3225 = vpop.f32.mrf.mxu0
        %v3226 = vadd.f32 %v3172, %v3225
        %3227 = vmatprep.mubr.bf16.mxu0 %v3121
        %3228 = vmatmul.mubr.bf16.gmra.mxu0 %v3120
        %v3229 = vpop.f32.mrf.mxu0
        %v3230 = vadd.f32 %v3168, %v3229
        %v3231 = vpop.f32.mrf.mxu0
        %v3232 = vadd.f32 %v3172, %v3231
        %v3233 = vpop.f32.mrf.mxu0
        %v3234 = vadd.f32 %v3168, %v3233
        %v3235 = vpop.f32.mrf.mxu0
        %v3236 = vadd.f32 %v3172, %v3235
        %3237 = vmatprep.mubr.bf16.mxu0 %v3123
        %3238 = vmatmul.mubr.bf16.gmra.mxu0 %v3122
        %v3239 = vpop.f32.mrf.mxu0
        %v3240 = vadd.f32 %v3168, %v3239
        %v3241 = vpop.f32.mrf.mxu0
        %v3242 = vadd.f32 %v3172, %v3241
        %v3243 = vpop.f32.mrf.mxu0
        %v3244 = vadd.f32 %v3168, %v3243
        %v3245 = vpop.f32.mrf.mxu0
        %v3246 = vadd.f32 %v3172, %v3245
        %3247 = vmatprep.mubr.bf16.mxu0 %v3125
        %3248 = vmatmul.mubr.bf16.gmra.mxu0 %v3124
        %v3249 = vpop.f32.mrf.mxu0
        %v3250 = vadd.f32 %v3168, %v3249
        %v3251 = vpop.f32.mrf.mxu0
        %v3252 = vadd.f32 %v3172, %v3251
        %v3253 = vpop.f32.mrf.mxu0
        %v3254 = vadd.f32 %v3168, %v3253
        %v3255 = vpop.f32.mrf.mxu0
        %v3256 = vadd.f32 %v3172, %v3255
        %3257 = vmatprep.mubr.bf16.mxu0 %v3127
        %3258 = vmatmul.mubr.bf16.gmra.mxu0 %v3126
        %v3259 = vpop.f32.mrf.mxu0
        %v3260 = vadd.f32 %v3168, %v3259
        %v3261 = vpop.f32.mrf.mxu0
        %v3262 = vadd.f32 %v3172, %v3261
        %v3263 = vpop.f32.mrf.mxu0
        %v3264 = vadd.f32 %v3168, %v3263
        %v3265 = vpop.f32.mrf.mxu0
        %v3266 = vadd.f32 %v3172, %v3265
        %3267 = vmatprep.mubr.bf16.mxu0 %v3129
        %3268 = vmatmul.mubr.bf16.gmra.mxu0 %v3128
        %v3269 = vpop.f32.mrf.mxu0
        %v3270 = vadd.f32 %v3168, %v3269
        %v3271 = vpop.f32.mrf.mxu0
        %v3272 = vadd.f32 %v3172, %v3271
        %v3273 = vpop.f32.mrf.mxu0
        %v3274 = vadd.f32 %v3168, %v3273
        %v3275 = vpop.f32.mrf.mxu0
        %v3276 = vadd.f32 %v3172, %v3275
        %3277 = vmatprep.mubr.bf16.mxu0 %v3131
        %3278 = vmatmul.mubr.bf16.gmra.mxu0 %v3130
        %v3279 = vpop.f32.mrf.mxu0
        %v3280 = vadd.f32 %v3168, %v3279
        %v3281 = vpop.f32.mrf.mxu0
        %v3282 = vadd.f32 %v3172, %v3281
        %v3283 = vpop.f32.mrf.mxu0
        %v3284 = vadd.f32 %v3168, %v3283
        %v3285 = vpop.f32.mrf.mxu0
        %v3286 = vadd.f32 %v3172, %v3285
        %3287 = vdwg.mxu0
        %v3288 = vmul.f32 %v3210, %v1308
        %v3289 = vmul.f32 %v3214, %v1309
        %v3290 = vmul.f32 %v3220, %v1310
        %v3291 = vmul.f32 %v3224, %v1311
        %v3292 = vmul.f32 %v3230, %v1312
        %v3293 = vmul.f32 %v3234, %v1313
        %v3294 = vmul.f32 %v3240, %v1314
        %v3295 = vmul.f32 %v3244, %v1315
        %v3296 = vmul.f32 %v3250, %v1316
        %v3297 = vmul.f32 %v3254, %v1317
        %v3298 = vmul.f32 %v3260, %v1318
        %v3299 = vmul.f32 %v3264, %v1319
        %v3300 = vmul.f32 %v3270, %v1320
        %v3301 = vmul.f32 %v3274, %v1321
        %v3302 = vmul.f32 %v3280, %v1322
        %v3303 = vmul.f32 %v3284, %v1323
        %v3304 = vmax.f32 %v3288, 0.0
        %v3305 = vmax.f32 %v3289, 0.0
        %v3306 = vmax.f32 %v3290, 0.0
        %v3307 = vmax.f32 %v3291, 0.0
        %v3308 = vmax.f32 %v3292, 0.0
        %v3309 = vmax.f32 %v3293, 0.0
        %v3310 = vmax.f32 %v3294, 0.0
        %v3311 = vmax.f32 %v3295, 0.0
        %v3312 = vmax.f32 %v3296, 0.0
        %v3313 = vmax.f32 %v3297, 0.0
        %v3314 = vmax.f32 %v3298, 0.0
        %v3315 = vmax.f32 %v3299, 0.0
        %v3316 = vmax.f32 %v3300, 0.0
        %v3317 = vmax.f32 %v3301, 0.0
        %v3318 = vmax.f32 %v3302, 0.0
        %v3319 = vmax.f32 %v3303, 0.0
        %v3320 = vmul.f32 %v3212, %v1372
        %v3321 = vmul.f32 %v3216, %v1373
        %v3322 = vmul.f32 %v3222, %v1374
        %v3323 = vmul.f32 %v3226, %v1375
        %v3324 = vmul.f32 %v3232, %v1376
        %v3325 = vmul.f32 %v3236, %v1377
        %v3326 = vmul.f32 %v3242, %v1378
        %v3327 = vmul.f32 %v3246, %v1379
        %v3328 = vmul.f32 %v3252, %v1380
        %v3329 = vmul.f32 %v3256, %v1381
        %v3330 = vmul.f32 %v3262, %v1382
        %v3331 = vmul.f32 %v3266, %v1383
        %v3332 = vmul.f32 %v3272, %v1384
        %v3333 = vmul.f32 %v3276, %v1385
        %v3334 = vmul.f32 %v3282, %v1386
        %v3335 = vmul.f32 %v3286, %v1387
        %v3336 = vmax.f32 %v3320, 0.0
        %v3337 = vmax.f32 %v3321, 0.0
        %v3338 = vmax.f32 %v3322, 0.0
        %v3339 = vmax.f32 %v3323, 0.0
        %v3340 = vmax.f32 %v3324, 0.0
        %v3341 = vmax.f32 %v3325, 0.0
        %v3342 = vmax.f32 %v3326, 0.0
        %v3343 = vmax.f32 %v3327, 0.0
        %v3344 = vmax.f32 %v3328, 0.0
        %v3345 = vmax.f32 %v3329, 0.0
        %v3346 = vmax.f32 %v3330, 0.0
        %v3347 = vmax.f32 %v3331, 0.0
        %v3348 = vmax.f32 %v3332, 0.0
        %v3349 = vmax.f32 %v3333, 0.0
        %v3350 = vmax.f32 %v3334, 0.0
        %v3351 = vmax.f32 %v3335, 0.0
        %v3352 = vpack.c.bf16 %v3305, %v3304
        %v3353 = vpack.c.bf16 %v3307, %v3306
        %v3354 = vpack.c.bf16 %v3309, %v3308
        %v3355 = vpack.c.bf16 %v3311, %v3310
        %v3356 = vpack.c.bf16 %v3313, %v3312
        %v3357 = vpack.c.bf16 %v3315, %v3314
        %v3358 = vpack.c.bf16 %v3317, %v3316
        %v3359 = vpack.c.bf16 %v3319, %v3318
        %v3360 = vpack.c.bf16 %v3337, %v3336
        %v3361 = vpack.c.bf16 %v3339, %v3338
        %v3362 = vpack.c.bf16 %v3341, %v3340
        %v3363 = vpack.c.bf16 %v3343, %v3342
        %v3364 = vpack.c.bf16 %v3345, %v3344
        %v3365 = vpack.c.bf16 %v3347, %v3346
        %v3366 = vpack.c.bf16 %v3349, %v3348
        %v3367 = vpack.c.bf16 %v3351, %v3350
        %3368 = vmatprep.subr.bf16.mxu0 %v1484
        %3369 = vmatpush1.bf16.msra.mxu0 %v1483
        %3370 = vmatprep.subr.bf16.mxu0 %v1482
        %3371 = vmatpush1.bf16.msra.mxu0 %v1481
        %3372 = vmatprep.subr.bf16.mxu0 %v1480
        %3373 = vmatpush1.bf16.msra.mxu0 %v1479
        %3374 = vmatprep.subr.bf16.mxu0 %v1478
        %3375 = vmatpush1.bf16.msra.mxu0 %v1477
        %3376 = vmatprep.subr.bf16.mxu0 %v1476
        %3377 = vmatpush1.bf16.msra.mxu0 %v1475
        %3378 = vmatprep.subr.bf16.mxu0 %v1474
        %3379 = vmatpush1.bf16.msra.mxu0 %v1473
        %3380 = vmatprep.subr.bf16.mxu0 %v1472
        %3381 = vmatpush1.bf16.msra.mxu0 %v1471
        %3382 = vmatprep.subr.bf16.mxu0 %v1470
        %3383 = vmatpush1.bf16.msra.mxu0 %v1469
        %3384 = vmatprep.subr.bf16.mxu0 %v1500
        %3385 = vmatpush2.bf16.msra.mxu0 %v1499
        %3386 = vmatprep.subr.bf16.mxu0 %v1498
        %3387 = vmatpush2.bf16.msra.mxu0 %v1497
        %3388 = vmatprep.subr.bf16.mxu0 %v1496
        %3389 = vmatpush2.bf16.msra.mxu0 %v1495
        %3390 = vmatprep.subr.bf16.mxu0 %v1494
        %3391 = vmatpush2.bf16.msra.mxu0 %v1493
        %3392 = vmatprep.subr.bf16.mxu0 %v1492
        %3393 = vmatpush2.bf16.msra.mxu0 %v1491
        %3394 = vmatprep.subr.bf16.mxu0 %v1490
        %3395 = vmatpush2.bf16.msra.mxu0 %v1489
        %3396 = vmatprep.subr.bf16.mxu0 %v1488
        %3397 = vmatpush2.bf16.msra.mxu0 %v1487
        %3398 = vmatprep.subr.bf16.mxu0 %v1486
        %3399 = vmatpush2.bf16.msra.mxu0 %v1485
        %3400 = vmatprep.mubr.bf16.mxu0 %v3360
        %3401 = vmatmul.mubr.bf16.gmra.mxu0 %v3352
        %v3402 = vpop.f32.mrf.mxu0
        %v3403 = vadd.f32 0.0, %v3402
        %v3404 = vpop.f32.mrf.mxu0
        %v3405 = vadd.f32 0.0, %v3404
        %v3406 = vpop.f32.mrf.mxu0
        %v3407 = vadd.f32 0.0, %v3406
        %v3408 = vpop.f32.mrf.mxu0
        %v3409 = vadd.f32 0.0, %v3408
        %3410 = vmatprep.mubr.bf16.mxu0 %v3361
        %3411 = vmatmul.mubr.bf16.gmra.mxu0 %v3353
        %v3412 = vpop.f32.mrf.mxu0
        %v3413 = vadd.f32 0.0, %v3412
        %v3414 = vpop.f32.mrf.mxu0
        %v3415 = vadd.f32 0.0, %v3414
        %v3416 = vpop.f32.mrf.mxu0
        %v3417 = vadd.f32 0.0, %v3416
        %v3418 = vpop.f32.mrf.mxu0
        %v3419 = vadd.f32 0.0, %v3418
        %3420 = vmatprep.mubr.bf16.mxu0 %v3362
        %3421 = vmatmul.mubr.bf16.gmra.mxu0 %v3354
        %v3422 = vpop.f32.mrf.mxu0
        %v3423 = vadd.f32 0.0, %v3422
        %v3424 = vpop.f32.mrf.mxu0
        %v3425 = vadd.f32 0.0, %v3424
        %v3426 = vpop.f32.mrf.mxu0
        %v3427 = vadd.f32 0.0, %v3426
        %v3428 = vpop.f32.mrf.mxu0
        %v3429 = vadd.f32 0.0, %v3428
        %3430 = vmatprep.mubr.bf16.mxu0 %v3363
        %3431 = vmatmul.mubr.bf16.gmra.mxu0 %v3355
        %v3432 = vpop.f32.mrf.mxu0
        %v3433 = vadd.f32 0.0, %v3432
        %v3434 = vpop.f32.mrf.mxu0
        %v3435 = vadd.f32 0.0, %v3434
        %v3436 = vpop.f32.mrf.mxu0
        %v3437 = vadd.f32 0.0, %v3436
        %v3438 = vpop.f32.mrf.mxu0
        %v3439 = vadd.f32 0.0, %v3438
        %3440 = vmatprep.mubr.bf16.mxu0 %v3364
        %3441 = vmatmul.mubr.bf16.gmra.mxu0 %v3356
        %v3442 = vpop.f32.mrf.mxu0
        %v3443 = vadd.f32 0.0, %v3442
        %v3444 = vpop.f32.mrf.mxu0
        %v3445 = vadd.f32 0.0, %v3444
        %v3446 = vpop.f32.mrf.mxu0
        %v3447 = vadd.f32 0.0, %v3446
        %v3448 = vpop.f32.mrf.mxu0
        %v3449 = vadd.f32 0.0, %v3448
        %3450 = vmatprep.mubr.bf16.mxu0 %v3365
        %3451 = vmatmul.mubr.bf16.gmra.mxu0 %v3357
        %v3452 = vpop.f32.mrf.mxu0
        %v3453 = vadd.f32 0.0, %v3452
        %v3454 = vpop.f32.mrf.mxu0
        %v3455 = vadd.f32 0.0, %v3454
        %v3456 = vpop.f32.mrf.mxu0
        %v3457 = vadd.f32 0.0, %v3456
        %v3458 = vpop.f32.mrf.mxu0
        %v3459 = vadd.f32 0.0, %v3458
        %3460 = vmatprep.mubr.bf16.mxu0 %v3366
        %3461 = vmatmul.mubr.bf16.gmra.mxu0 %v3358
        %v3462 = vpop.f32.mrf.mxu0
        %v3463 = vadd.f32 0.0, %v3462
        %v3464 = vpop.f32.mrf.mxu0
        %v3465 = vadd.f32 0.0, %v3464
        %v3466 = vpop.f32.mrf.mxu0
        %v3467 = vadd.f32 0.0, %v3466
        %v3468 = vpop.f32.mrf.mxu0
        %v3469 = vadd.f32 0.0, %v3468
        %3470 = vmatprep.mubr.bf16.mxu0 %v3367
        %3471 = vmatmul.mubr.bf16.gmra.mxu0 %v3359
        %v3472 = vpop.f32.mrf.mxu0
        %v3473 = vadd.f32 0.0, %v3472
        %v3474 = vpop.f32.mrf.mxu0
        %v3475 = vadd.f32 0.0, %v3474
        %v3476 = vpop.f32.mrf.mxu0
        %v3477 = vadd.f32 0.0, %v3476
        %v3478 = vpop.f32.mrf.mxu0
        %v3479 = vadd.f32 0.0, %v3478
        %3480 = vdwg.mxu0
        %v3481 = vpack.c.bf16 %v3407, %v3403
        %v3482 = vpack.c.bf16 %v3417, %v3413
        %v3483 = vpack.c.bf16 %v3427, %v3423
        %v3484 = vpack.c.bf16 %v3437, %v3433
        %v3485 = vpack.c.bf16 %v3447, %v3443
        %v3486 = vpack.c.bf16 %v3457, %v3453
        %v3487 = vpack.c.bf16 %v3467, %v3463
        %v3488 = vpack.c.bf16 %v3477, %v3473
        %v3489 = vpack.c.bf16 %v3409, %v3405
        %v3490 = vpack.c.bf16 %v3419, %v3415
        %v3491 = vpack.c.bf16 %v3429, %v3425
        %v3492 = vpack.c.bf16 %v3439, %v3435
        %v3493 = vpack.c.bf16 %v3449, %v3445
        %v3494 = vpack.c.bf16 %v3459, %v3455
        %v3495 = vpack.c.bf16 %v3469, %v3465
        %v3496 = vpack.c.bf16 %v3479, %v3475
        %3497 = vmatprep.subr.bf16.mxu0 0
        %3498 = vmatpush1.bf16.xpose.msra.mxu0 %v3367
        %3499 = vmatprep.subr.bf16.mxu0 0
        %3500 = vmatpush1.bf16.xpose.msra.mxu0 %v3366
        %3501 = vmatprep.subr.bf16.mxu0 0
        %3502 = vmatpush1.bf16.xpose.msra.mxu0 %v3365
        %3503 = vmatprep.subr.bf16.mxu0 0
        %3504 = vmatpush1.bf16.xpose.msra.mxu0 %v3364
        %3505 = vmatprep.subr.bf16.mxu0 0
        %3506 = vmatpush1.bf16.xpose.msra.mxu0 %v3363
        %3507 = vmatprep.subr.bf16.mxu0 0
        %3508 = vmatpush1.bf16.xpose.msra.mxu0 %v3362
        %3509 = vmatprep.subr.bf16.mxu0 0
        %3510 = vmatpush1.bf16.xpose.msra.mxu0 %v3361
        %3511 = vmatprep.subr.bf16.mxu0 0
        %3512 = vmatpush1.bf16.xpose.msra.mxu0 %v3360
        %3513 = vmatprep.subr.bf16.mxu0 0
        %3514 = vmatpush2.bf16.xpose.msra.mxu0 0
        %3515 = vmatprep.subr.bf16.mxu0 0
        %3516 = vmatpush2.bf16.xpose.msra.mxu0 0
        %3517 = vmatprep.subr.bf16.mxu0 0
        %3518 = vmatpush2.bf16.xpose.msra.mxu0 0
        %3519 = vmatprep.subr.bf16.mxu0 0
        %3520 = vmatpush2.bf16.xpose.msra.mxu0 0
        %3521 = vmatprep.subr.bf16.mxu0 0
        %3522 = vmatpush2.bf16.xpose.msra.mxu0 0
        %3523 = vmatprep.subr.bf16.mxu0 0
        %3524 = vmatpush2.bf16.xpose.msra.mxu0 0
        %3525 = vmatprep.subr.bf16.mxu0 0
        %3526 = vmatpush2.bf16.xpose.msra.mxu0 0
        %3527 = vmatprep.subr.bf16.mxu0 0
        %3528 = vmatpush2.bf16.xpose.msra.mxu0 0
        %3529 = vmatprep.mubr.bf16.mxu0 0
        %3530 = vmatmul.mubr.bf16.gmra.mxu0 %v3481
        %v3531 = vpop.f32.mrf.mxu0
        %v3532 = vadd.f32 %v2145, %v3531
        %v3533 = vpop.f32.mrf.mxu0
        %v3534 = vpop.f32.mrf.mxu0
        %v3535 = vadd.f32 %v2145, %v3534
        %v3536 = vpop.f32.mrf.mxu0
        %3537 = vmatprep.mubr.bf16.mxu0 0
        %3538 = vmatmul.mubr.bf16.gmra.mxu0 %v3482
        %v3539 = vpop.f32.mrf.mxu0
        %v3540 = vadd.f32 %v2145, %v3539
        %v3541 = vpop.f32.mrf.mxu0
        %v3542 = vpop.f32.mrf.mxu0
        %v3543 = vadd.f32 %v2145, %v3542
        %v3544 = vpop.f32.mrf.mxu0
        %3545 = vmatprep.mubr.bf16.mxu0 0
        %3546 = vmatmul.mubr.bf16.gmra.mxu0 %v3483
        %v3547 = vpop.f32.mrf.mxu0
        %v3548 = vadd.f32 %v2145, %v3547
        %v3549 = vpop.f32.mrf.mxu0
        %v3550 = vpop.f32.mrf.mxu0
        %v3551 = vadd.f32 %v2145, %v3550
        %v3552 = vpop.f32.mrf.mxu0
        %3553 = vmatprep.mubr.bf16.mxu0 0
        %3554 = vmatmul.mubr.bf16.gmra.mxu0 %v3484
        %v3555 = vpop.f32.mrf.mxu0
        %v3556 = vadd.f32 %v2145, %v3555
        %v3557 = vpop.f32.mrf.mxu0
        %v3558 = vpop.f32.mrf.mxu0
        %v3559 = vadd.f32 %v2145, %v3558
        %v3560 = vpop.f32.mrf.mxu0
        %3561 = vmatprep.mubr.bf16.mxu0 0
        %3562 = vmatmul.mubr.bf16.gmra.mxu0 %v3485
        %v3563 = vpop.f32.mrf.mxu0
        %v3564 = vadd.f32 %v2145, %v3563
        %v3565 = vpop.f32.mrf.mxu0
        %v3566 = vpop.f32.mrf.mxu0
        %v3567 = vadd.f32 %v2145, %v3566
        %v3568 = vpop.f32.mrf.mxu0
        %3569 = vmatprep.mubr.bf16.mxu0 0
        %3570 = vmatmul.mubr.bf16.gmra.mxu0 %v3486
        %v3571 = vpop.f32.mrf.mxu0
        %v3572 = vadd.f32 %v2145, %v3571
        %v3573 = vpop.f32.mrf.mxu0
        %v3574 = vpop.f32.mrf.mxu0
        %v3575 = vadd.f32 %v2145, %v3574
        %v3576 = vpop.f32.mrf.mxu0
        %3577 = vmatprep.mubr.bf16.mxu0 0
        %3578 = vmatmul.mubr.bf16.gmra.mxu0 %v3487
        %v3579 = vpop.f32.mrf.mxu0
        %v3580 = vadd.f32 %v2145, %v3579
        %v3581 = vpop.f32.mrf.mxu0
        %v3582 = vpop.f32.mrf.mxu0
        %v3583 = vadd.f32 %v2145, %v3582
        %v3584 = vpop.f32.mrf.mxu0
        %3585 = vmatprep.mubr.bf16.mxu0 0
        %3586 = vmatmul.mubr.bf16.gmra.mxu0 %v3488
        %v3587 = vpop.f32.mrf.mxu0
        %v3588 = vadd.f32 %v2145, %v3587
        %v3589 = vpop.f32.mrf.mxu0
        %v3590 = vpop.f32.mrf.mxu0
        %v3591 = vadd.f32 %v2145, %v3590
        %v3592 = vpop.f32.mrf.mxu0
        %3593 = vdwg.mxu0
        %3594 = vmatprep.subr.bf16.mxu0 0
        %3595 = vmatpush1.bf16.xpose.msra.mxu0 %v3359
        %3596 = vmatprep.subr.bf16.mxu0 0
        %3597 = vmatpush1.bf16.xpose.msra.mxu0 %v3358
        %3598 = vmatprep.subr.bf16.mxu0 0
        %3599 = vmatpush1.bf16.xpose.msra.mxu0 %v3357
        %3600 = vmatprep.subr.bf16.mxu0 0
        %3601 = vmatpush1.bf16.xpose.msra.mxu0 %v3356
        %3602 = vmatprep.subr.bf16.mxu0 0
        %3603 = vmatpush1.bf16.xpose.msra.mxu0 %v3355
        %3604 = vmatprep.subr.bf16.mxu0 0
        %3605 = vmatpush1.bf16.xpose.msra.mxu0 %v3354
        %3606 = vmatprep.subr.bf16.mxu0 0
        %3607 = vmatpush1.bf16.xpose.msra.mxu0 %v3353
        %3608 = vmatprep.subr.bf16.mxu0 0
        %3609 = vmatpush1.bf16.xpose.msra.mxu0 %v3352
        %3610 = vmatprep.subr.bf16.mxu0 0
        %3611 = vmatpush2.bf16.xpose.msra.mxu0 0
        %3612 = vmatprep.subr.bf16.mxu0 0
        %3613 = vmatpush2.bf16.xpose.msra.mxu0 0
        %3614 = vmatprep.subr.bf16.mxu0 0
        %3615 = vmatpush2.bf16.xpose.msra.mxu0 0
        %3616 = vmatprep.subr.bf16.mxu0 0
        %3617 = vmatpush2.bf16.xpose.msra.mxu0 0
        %3618 = vmatprep.subr.bf16.mxu0 0
        %3619 = vmatpush2.bf16.xpose.msra.mxu0 0
        %3620 = vmatprep.subr.bf16.mxu0 0
        %3621 = vmatpush2.bf16.xpose.msra.mxu0 0
        %3622 = vmatprep.subr.bf16.mxu0 0
        %3623 = vmatpush2.bf16.xpose.msra.mxu0 0
        %3624 = vmatprep.subr.bf16.mxu0 0
        %3625 = vmatpush2.bf16.xpose.msra.mxu0 0
        %3626 = vmatprep.mubr.bf16.mxu0 0
        %3627 = vmatmul.mubr.bf16.gmra.mxu0 %v3489
        %v3628 = vpop.f32.mrf.mxu0
        %v3629 = vadd.f32 %v2145, %v3628
        %v3630 = vpop.f32.mrf.mxu0
        %v3631 = vpop.f32.mrf.mxu0
        %v3632 = vadd.f32 %v2145, %v3631
        %v3633 = vpop.f32.mrf.mxu0
        %3634 = vmatprep.mubr.bf16.mxu0 0
        %3635 = vmatmul.mubr.bf16.gmra.mxu0 %v3490
        %v3636 = vpop.f32.mrf.mxu0
        %v3637 = vadd.f32 %v2145, %v3636
        %v3638 = vpop.f32.mrf.mxu0
        %v3639 = vpop.f32.mrf.mxu0
        %v3640 = vadd.f32 %v2145, %v3639
        %v3641 = vpop.f32.mrf.mxu0
        %3642 = vmatprep.mubr.bf16.mxu0 0
        %3643 = vmatmul.mubr.bf16.gmra.mxu0 %v3491
        %v3644 = vpop.f32.mrf.mxu0
        %v3645 = vadd.f32 %v2145, %v3644
        %v3646 = vpop.f32.mrf.mxu0
        %v3647 = vpop.f32.mrf.mxu0
        %v3648 = vadd.f32 %v2145, %v3647
        %v3649 = vpop.f32.mrf.mxu0
        %3650 = vmatprep.mubr.bf16.mxu0 0
        %3651 = vmatmul.mubr.bf16.gmra.mxu0 %v3492
        %v3652 = vpop.f32.mrf.mxu0
        %v3653 = vadd.f32 %v2145, %v3652
        %v3654 = vpop.f32.mrf.mxu0
        %v3655 = vpop.f32.mrf.mxu0
        %v3656 = vadd.f32 %v2145, %v3655
        %v3657 = vpop.f32.mrf.mxu0
        %3658 = vmatprep.mubr.bf16.mxu0 0
        %3659 = vmatmul.mubr.bf16.gmra.mxu0 %v3493
        %v3660 = vpop.f32.mrf.mxu0
        %v3661 = vadd.f32 %v2145, %v3660
        %v3662 = vpop.f32.mrf.mxu0
        %v3663 = vpop.f32.mrf.mxu0
        %v3664 = vadd.f32 %v2145, %v3663
        %v3665 = vpop.f32.mrf.mxu0
        %3666 = vmatprep.mubr.bf16.mxu0 0
        %3667 = vmatmul.mubr.bf16.gmra.mxu0 %v3494
        %v3668 = vpop.f32.mrf.mxu0
        %v3669 = vadd.f32 %v2145, %v3668
        %v3670 = vpop.f32.mrf.mxu0
        %v3671 = vpop.f32.mrf.mxu0
        %v3672 = vadd.f32 %v2145, %v3671
        %v3673 = vpop.f32.mrf.mxu0
        %3674 = vmatprep.mubr.bf16.mxu0 0
        %3675 = vmatmul.mubr.bf16.gmra.mxu0 %v3495
        %v3676 = vpop.f32.mrf.mxu0
        %v3677 = vadd.f32 %v2145, %v3676
        %v3678 = vpop.f32.mrf.mxu0
        %v3679 = vpop.f32.mrf.mxu0
        %v3680 = vadd.f32 %v2145, %v3679
        %v3681 = vpop.f32.mrf.mxu0
        %3682 = vmatprep.mubr.bf16.mxu0 0
        %3683 = vmatmul.mubr.bf16.gmra.mxu0 %v3496
        %v3684 = vpop.f32.mrf.mxu0
        %v3685 = vadd.f32 %v2145, %v3684
        %v3686 = vpop.f32.mrf.mxu0
        %v3687 = vpop.f32.mrf.mxu0
        %v3688 = vadd.f32 %v2145, %v3687
        %v3689 = vpop.f32.mrf.mxu0
        %3690 = vdwg.mxu0
        %3691 = vmax.xlane.f32.xlu0 %v3532
        %v3692 = vpop.xlane.xlu0 %3691
        %3693 = vmax.xlane.f32.xlu0 %v3535
        %v3694 = vpop.xlane.xlu0 %3693
        %3695 = vmax.xlane.f32.xlu0 %v3540
        %v3696 = vpop.xlane.xlu0 %3695
        %3697 = vmax.xlane.f32.xlu0 %v3543
        %v3698 = vpop.xlane.xlu0 %3697
        %3699 = vmax.xlane.f32.xlu0 %v3548
        %v3700 = vpop.xlane.xlu0 %3699
        %3701 = vmax.xlane.f32.xlu0 %v3551
        %v3702 = vpop.xlane.xlu0 %3701
        %3703 = vmax.xlane.f32.xlu0 %v3556
        %v3704 = vpop.xlane.xlu0 %3703
        %3705 = vmax.xlane.f32.xlu0 %v3559
        %v3706 = vpop.xlane.xlu0 %3705
        %3707 = vmax.xlane.f32.xlu0 %v3564
        %v3708 = vpop.xlane.xlu0 %3707
        %3709 = vmax.xlane.f32.xlu0 %v3567
        %v3710 = vpop.xlane.xlu0 %3709
        %3711 = vmax.xlane.f32.xlu0 %v3572
        %v3712 = vpop.xlane.xlu0 %3711
        %3713 = vmax.xlane.f32.xlu0 %v3575
        %v3714 = vpop.xlane.xlu0 %3713
        %3715 = vmax.xlane.f32.xlu0 %v3580
        %v3716 = vpop.xlane.xlu0 %3715
        %3717 = vmax.xlane.f32.xlu0 %v3583
        %v3718 = vpop.xlane.xlu0 %3717
        %3719 = vmax.xlane.f32.xlu0 %v3588
        %v3720 = vpop.xlane.xlu0 %3719
        %3721 = vmax.xlane.f32.xlu0 %v3591
        %v3722 = vpop.xlane.xlu0 %3721
        %v3723 = vsub.f32 %v3532, %v3692
        %v3724 = vsub.f32 %v3535, %v3694
        %v3725 = vsub.f32 %v3540, %v3696
        %v3726 = vsub.f32 %v3543, %v3698
        %v3727 = vsub.f32 %v3548, %v3700
        %v3728 = vsub.f32 %v3551, %v3702
        %v3729 = vsub.f32 %v3556, %v3704
        %v3730 = vsub.f32 %v3559, %v3706
        %v3731 = vsub.f32 %v3564, %v3708
        %v3732 = vsub.f32 %v3567, %v3710
        %v3733 = vsub.f32 %v3572, %v3712
        %v3734 = vsub.f32 %v3575, %v3714
        %v3735 = vsub.f32 %v3580, %v3716
        %v3736 = vsub.f32 %v3583, %v3718
        %v3737 = vsub.f32 %v3588, %v3720
        %v3738 = vsub.f32 %v3591, %v3722
        %v3739 = vmul.f32 %v3723, 1.442695
        %v3740 = vpow.pop %v3739
        %v3741 = vmul.f32 %v3724, 1.442695
        %v3742 = vpow.pop %v3741
        %v3743 = vmul.f32 %v3725, 1.442695
        %v3744 = vpow.pop %v3743
        %v3745 = vmul.f32 %v3726, 1.442695
        %v3746 = vpow.pop %v3745
        %v3747 = vmul.f32 %v3727, 1.442695
        %v3748 = vpow.pop %v3747
        %v3749 = vmul.f32 %v3728, 1.442695
        %v3750 = vpow.pop %v3749
        %v3751 = vmul.f32 %v3729, 1.442695
        %v3752 = vpow.pop %v3751
        %v3753 = vmul.f32 %v3730, 1.442695
        %v3754 = vpow.pop %v3753
        %v3755 = vmul.f32 %v3731, 1.442695
        %v3756 = vpow.pop %v3755
        %v3757 = vmul.f32 %v3732, 1.442695
        %v3758 = vpow.pop %v3757
        %v3759 = vmul.f32 %v3733, 1.442695
        %v3760 = vpow.pop %v3759
        %v3761 = vmul.f32 %v3734, 1.442695
        %v3762 = vpow.pop %v3761
        %v3763 = vmul.f32 %v3735, 1.442695
        %v3764 = vpow.pop %v3763
        %v3765 = vmul.f32 %v3736, 1.442695
        %v3766 = vpow.pop %v3765
        %v3767 = vmul.f32 %v3737, 1.442695
        %v3768 = vpow.pop %v3767
        %v3769 = vmul.f32 %v3738, 1.442695
        %v3770 = vpow.pop %v3769
        %3771 = vadd.xlane.f32.xlu0 %v3740
        %v3772 = vpop.xlane.xlu0 %3771
        %3773 = vadd.xlane.f32.xlu0 %v3742
        %v3774 = vpop.xlane.xlu0 %3773
        %3775 = vadd.xlane.f32.xlu0 %v3744
        %v3776 = vpop.xlane.xlu0 %3775
        %3777 = vadd.xlane.f32.xlu0 %v3746
        %v3778 = vpop.xlane.xlu0 %3777
        %3779 = vadd.xlane.f32.xlu0 %v3748
        %v3780 = vpop.xlane.xlu0 %3779
        %3781 = vadd.xlane.f32.xlu0 %v3750
        %v3782 = vpop.xlane.xlu0 %3781
        %3783 = vadd.xlane.f32.xlu0 %v3752
        %v3784 = vpop.xlane.xlu0 %3783
        %3785 = vadd.xlane.f32.xlu0 %v3754
        %v3786 = vpop.xlane.xlu0 %3785
        %3787 = vadd.xlane.f32.xlu0 %v3756
        %v3788 = vpop.xlane.xlu0 %3787
        %3789 = vadd.xlane.f32.xlu0 %v3758
        %v3790 = vpop.xlane.xlu0 %3789
        %3791 = vadd.xlane.f32.xlu0 %v3760
        %v3792 = vpop.xlane.xlu0 %3791
        %3793 = vadd.xlane.f32.xlu0 %v3762
        %v3794 = vpop.xlane.xlu0 %3793
        %3795 = vadd.xlane.f32.xlu0 %v3764
        %v3796 = vpop.xlane.xlu0 %3795
        %3797 = vadd.xlane.f32.xlu0 %v3766
        %v3798 = vpop.xlane.xlu0 %3797
        %3799 = vadd.xlane.f32.xlu0 %v3768
        %v3800 = vpop.xlane.xlu0 %3799
        %3801 = vadd.xlane.f32.xlu0 %v3770
        %v3802 = vpop.xlane.xlu0 %3801
        %v3803 = vrcp.pop %v3772
        %v3804 = vrcp.pop %v3774
        %v3805 = vrcp.pop %v3776
        %v3806 = vrcp.pop %v3778
        %v3807 = vrcp.pop %v3780
        %v3808 = vrcp.pop %v3782
        %v3809 = vrcp.pop %v3784
        %v3810 = vrcp.pop %v3786
        %v3811 = vrcp.pop %v3788
        %v3812 = vrcp.pop %v3790
        %v3813 = vrcp.pop %v3792
        %v3814 = vrcp.pop %v3794
        %v3815 = vrcp.pop %v3796
        %v3816 = vrcp.pop %v3798
        %v3817 = vrcp.pop %v3800
        %v3818 = vrcp.pop %v3802
        %v3819 = vmul.f32 %v3740, %v3803
        %v3820 = vmul.f32 %v3742, %v3804
        %v3821 = vmul.f32 %v3744, %v3805
        %v3822 = vmul.f32 %v3746, %v3806
        %v3823 = vmul.f32 %v3748, %v3807
        %v3824 = vmul.f32 %v3750, %v3808
        %v3825 = vmul.f32 %v3752, %v3809
        %v3826 = vmul.f32 %v3754, %v3810
        %v3827 = vmul.f32 %v3756, %v3811
        %v3828 = vmul.f32 %v3758, %v3812
        %v3829 = vmul.f32 %v3760, %v3813
        %v3830 = vmul.f32 %v3762, %v3814
        %v3831 = vmul.f32 %v3764, %v3815
        %v3832 = vmul.f32 %v3766, %v3816
        %v3833 = vmul.f32 %v3768, %v3817
        %v3834 = vmul.f32 %v3770, %v3818
        %v3835 = vpack.c.bf16 %v3820, %v3819
        %v3836 = vpack.c.bf16 %v3822, %v3821
        %v3837 = vpack.c.bf16 %v3824, %v3823
        %v3838 = vpack.c.bf16 %v3826, %v3825
        %v3839 = vpack.c.bf16 %v3828, %v3827
        %v3840 = vpack.c.bf16 %v3830, %v3829
        %v3841 = vpack.c.bf16 %v3832, %v3831
        %v3842 = vpack.c.bf16 %v3834, %v3833
        %3843 = vmax.xlane.f32.xlu0 %v3629
        %v3844 = vpop.xlane.xlu0 %3843
        %3845 = vmax.xlane.f32.xlu0 %v3632
        %v3846 = vpop.xlane.xlu0 %3845
        %3847 = vmax.xlane.f32.xlu0 %v3637
        %v3848 = vpop.xlane.xlu0 %3847
        %3849 = vmax.xlane.f32.xlu0 %v3640
        %v3850 = vpop.xlane.xlu0 %3849
        %3851 = vmax.xlane.f32.xlu0 %v3645
        %v3852 = vpop.xlane.xlu0 %3851
        %3853 = vmax.xlane.f32.xlu0 %v3648
        %v3854 = vpop.xlane.xlu0 %3853
        %3855 = vmax.xlane.f32.xlu0 %v3653
        %v3856 = vpop.xlane.xlu0 %3855
        %3857 = vmax.xlane.f32.xlu0 %v3656
        %v3858 = vpop.xlane.xlu0 %3857
        %3859 = vmax.xlane.f32.xlu0 %v3661
        %v3860 = vpop.xlane.xlu0 %3859
        %3861 = vmax.xlane.f32.xlu0 %v3664
        %v3862 = vpop.xlane.xlu0 %3861
        %3863 = vmax.xlane.f32.xlu0 %v3669
        %v3864 = vpop.xlane.xlu0 %3863
        %3865 = vmax.xlane.f32.xlu0 %v3672
        %v3866 = vpop.xlane.xlu0 %3865
        %3867 = vmax.xlane.f32.xlu0 %v3677
        %v3868 = vpop.xlane.xlu0 %3867
        %3869 = vmax.xlane.f32.xlu0 %v3680
        %v3870 = vpop.xlane.xlu0 %3869
        %3871 = vmax.xlane.f32.xlu0 %v3685
        %v3872 = vpop.xlane.xlu0 %3871
        %3873 = vmax.xlane.f32.xlu0 %v3688
        %v3874 = vpop.xlane.xlu0 %3873
        %v3875 = vsub.f32 %v3629, %v3844
        %v3876 = vsub.f32 %v3632, %v3846
        %v3877 = vsub.f32 %v3637, %v3848
        %v3878 = vsub.f32 %v3640, %v3850
        %v3879 = vsub.f32 %v3645, %v3852
        %v3880 = vsub.f32 %v3648, %v3854
        %v3881 = vsub.f32 %v3653, %v3856
        %v3882 = vsub.f32 %v3656, %v3858
        %v3883 = vsub.f32 %v3661, %v3860
        %v3884 = vsub.f32 %v3664, %v3862
        %v3885 = vsub.f32 %v3669, %v3864
        %v3886 = vsub.f32 %v3672, %v3866
        %v3887 = vsub.f32 %v3677, %v3868
        %v3888 = vsub.f32 %v3680, %v3870
        %v3889 = vsub.f32 %v3685, %v3872
        %v3890 = vsub.f32 %v3688, %v3874
        %v3891 = vmul.f32 %v3875, 1.442695
        %v3892 = vpow.pop %v3891
        %v3893 = vmul.f32 %v3876, 1.442695
        %v3894 = vpow.pop %v3893
        %v3895 = vmul.f32 %v3877, 1.442695
        %v3896 = vpow.pop %v3895
        %v3897 = vmul.f32 %v3878, 1.442695
        %v3898 = vpow.pop %v3897
        %v3899 = vmul.f32 %v3879, 1.442695
        %v3900 = vpow.pop %v3899
        %v3901 = vmul.f32 %v3880, 1.442695
        %v3902 = vpow.pop %v3901
        %v3903 = vmul.f32 %v3881, 1.442695
        %v3904 = vpow.pop %v3903
        %v3905 = vmul.f32 %v3882, 1.442695
        %v3906 = vpow.pop %v3905
        %v3907 = vmul.f32 %v3883, 1.442695
        %v3908 = vpow.pop %v3907
        %v3909 = vmul.f32 %v3884, 1.442695
        %v3910 = vpow.pop %v3909
        %v3911 = vmul.f32 %v3885, 1.442695
        %v3912 = vpow.pop %v3911
        %v3913 = vmul.f32 %v3886, 1.442695
        %v3914 = vpow.pop %v3913
        %v3915 = vmul.f32 %v3887, 1.442695
        %v3916 = vpow.pop %v3915
        %v3917 = vmul.f32 %v3888, 1.442695
        %v3918 = vpow.pop %v3917
        %v3919 = vmul.f32 %v3889, 1.442695
        %v3920 = vpow.pop %v3919
        %v3921 = vmul.f32 %v3890, 1.442695
        %v3922 = vpow.pop %v3921
        %3923 = vadd.xlane.f32.xlu0 %v3892
        %v3924 = vpop.xlane.xlu0 %3923
        %3925 = vadd.xlane.f32.xlu0 %v3894
        %v3926 = vpop.xlane.xlu0 %3925
        %3927 = vadd.xlane.f32.xlu0 %v3896
        %v3928 = vpop.xlane.xlu0 %3927
        %3929 = vadd.xlane.f32.xlu0 %v3898
        %v3930 = vpop.xlane.xlu0 %3929
        %3931 = vadd.xlane.f32.xlu0 %v3900
        %v3932 = vpop.xlane.xlu0 %3931
        %3933 = vadd.xlane.f32.xlu0 %v3902
        %v3934 = vpop.xlane.xlu0 %3933
        %3935 = vadd.xlane.f32.xlu0 %v3904
        %v3936 = vpop.xlane.xlu0 %3935
        %3937 = vadd.xlane.f32.xlu0 %v3906
        %v3938 = vpop.xlane.xlu0 %3937
        %3939 = vadd.xlane.f32.xlu0 %v3908
        %v3940 = vpop.xlane.xlu0 %3939
        %3941 = vadd.xlane.f32.xlu0 %v3910
        %v3942 = vpop.xlane.xlu0 %3941
        %3943 = vadd.xlane.f32.xlu0 %v3912
        %v3944 = vpop.xlane.xlu0 %3943
        %3945 = vadd.xlane.f32.xlu0 %v3914
        %v3946 = vpop.xlane.xlu0 %3945
        %3947 = vadd.xlane.f32.xlu0 %v3916
        %v3948 = vpop.xlane.xlu0 %3947
        %3949 = vadd.xlane.f32.xlu0 %v3918
        %v3950 = vpop.xlane.xlu0 %3949
        %3951 = vadd.xlane.f32.xlu0 %v3920
        %v3952 = vpop.xlane.xlu0 %3951
        %3953 = vadd.xlane.f32.xlu0 %v3922
        %v3954 = vpop.xlane.xlu0 %3953
        %v3955 = vrcp.pop %v3924
        %v3956 = vrcp.pop %v3926
        %v3957 = vrcp.pop %v3928
        %v3958 = vrcp.pop %v3930
        %v3959 = vrcp.pop %v3932
        %v3960 = vrcp.pop %v3934
        %v3961 = vrcp.pop %v3936
        %v3962 = vrcp.pop %v3938
        %v3963 = vrcp.pop %v3940
        %v3964 = vrcp.pop %v3942
        %v3965 = vrcp.pop %v3944
        %v3966 = vrcp.pop %v3946
        %v3967 = vrcp.pop %v3948
        %v3968 = vrcp.pop %v3950
        %v3969 = vrcp.pop %v3952
        %v3970 = vrcp.pop %v3954
        %v3971 = vmul.f32 %v3892, %v3955
        %v3972 = vmul.f32 %v3894, %v3956
        %v3973 = vmul.f32 %v3896, %v3957
        %v3974 = vmul.f32 %v3898, %v3958
        %v3975 = vmul.f32 %v3900, %v3959
        %v3976 = vmul.f32 %v3902, %v3960
        %v3977 = vmul.f32 %v3904, %v3961
        %v3978 = vmul.f32 %v3906, %v3962
        %v3979 = vmul.f32 %v3908, %v3963
        %v3980 = vmul.f32 %v3910, %v3964
        %v3981 = vmul.f32 %v3912, %v3965
        %v3982 = vmul.f32 %v3914, %v3966
        %v3983 = vmul.f32 %v3916, %v3967
        %v3984 = vmul.f32 %v3918, %v3968
        %v3985 = vmul.f32 %v3920, %v3969
        %v3986 = vmul.f32 %v3922, %v3970
        %v3987 = vpack.c.bf16 %v3972, %v3971
        %v3988 = vpack.c.bf16 %v3974, %v3973
        %v3989 = vpack.c.bf16 %v3976, %v3975
        %v3990 = vpack.c.bf16 %v3978, %v3977
        %v3991 = vpack.c.bf16 %v3980, %v3979
        %v3992 = vpack.c.bf16 %v3982, %v3981
        %v3993 = vpack.c.bf16 %v3984, %v3983
        %v3994 = vpack.c.bf16 %v3986, %v3985
        %3995 = vmatprep.subr.bf16.mxu0 0
        %3996 = vmatpush1.bf16.msra.mxu0 %v3367
        %3997 = vmatprep.subr.bf16.mxu0 0
        %3998 = vmatpush1.bf16.msra.mxu0 %v3366
        %3999 = vmatprep.subr.bf16.mxu0 0
        %4000 = vmatpush1.bf16.msra.mxu0 %v3365
        %4001 = vmatprep.subr.bf16.mxu0 0
        %4002 = vmatpush1.bf16.msra.mxu0 %v3364
        %4003 = vmatprep.subr.bf16.mxu0 0
        %4004 = vmatpush1.bf16.msra.mxu0 %v3363
        %4005 = vmatprep.subr.bf16.mxu0 0
        %4006 = vmatpush1.bf16.msra.mxu0 %v3362
        %4007 = vmatprep.subr.bf16.mxu0 0
        %4008 = vmatpush1.bf16.msra.mxu0 %v3361
        %4009 = vmatprep.subr.bf16.mxu0 0
        %4010 = vmatpush1.bf16.msra.mxu0 %v3360
        %4011 = vmatprep.subr.bf16.mxu0 0
        %4012 = vmatpush2.bf16.msra.mxu0 0
        %4013 = vmatprep.subr.bf16.mxu0 0
        %4014 = vmatpush2.bf16.msra.mxu0 0
        %4015 = vmatprep.subr.bf16.mxu0 0
        %4016 = vmatpush2.bf16.msra.mxu0 0
        %4017 = vmatprep.subr.bf16.mxu0 0
        %4018 = vmatpush2.bf16.msra.mxu0 0
        %4019 = vmatprep.subr.bf16.mxu0 0
        %4020 = vmatpush2.bf16.msra.mxu0 0
        %4021 = vmatprep.subr.bf16.mxu0 0
        %4022 = vmatpush2.bf16.msra.mxu0 0
        %4023 = vmatprep.subr.bf16.mxu0 0
        %4024 = vmatpush2.bf16.msra.mxu0 0
        %4025 = vmatprep.subr.bf16.mxu0 0
        %4026 = vmatpush2.bf16.msra.mxu0 0
        %4027 = vmatprep.mubr.bf16.mxu0 0
        %4028 = vmatmul.mubr.bf16.gmra.mxu0 %v3835
        %v4029 = vpop.f32.mrf.mxu0
        %v4030 = vadd.f32 0.0, %v4029
        %v4031 = vpop.f32.mrf.mxu0
        %v4032 = vpop.f32.mrf.mxu0
        %v4033 = vadd.f32 0.0, %v4032
        %v4034 = vpop.f32.mrf.mxu0
        %4035 = vmatprep.mubr.bf16.mxu0 0
        %4036 = vmatmul.mubr.bf16.gmra.mxu0 %v3836
        %v4037 = vpop.f32.mrf.mxu0
        %v4038 = vadd.f32 0.0, %v4037
        %v4039 = vpop.f32.mrf.mxu0
        %v4040 = vpop.f32.mrf.mxu0
        %v4041 = vadd.f32 0.0, %v4040
        %v4042 = vpop.f32.mrf.mxu0
        %4043 = vmatprep.mubr.bf16.mxu0 0
        %4044 = vmatmul.mubr.bf16.gmra.mxu0 %v3837
        %v4045 = vpop.f32.mrf.mxu0
        %v4046 = vadd.f32 0.0, %v4045
        %v4047 = vpop.f32.mrf.mxu0
        %v4048 = vpop.f32.mrf.mxu0
        %v4049 = vadd.f32 0.0, %v4048
        %v4050 = vpop.f32.mrf.mxu0
        %4051 = vmatprep.mubr.bf16.mxu0 0
        %4052 = vmatmul.mubr.bf16.gmra.mxu0 %v3838
        %v4053 = vpop.f32.mrf.mxu0
        %v4054 = vadd.f32 0.0, %v4053
        %v4055 = vpop.f32.mrf.mxu0
        %v4056 = vpop.f32.mrf.mxu0
        %v4057 = vadd.f32 0.0, %v4056
        %v4058 = vpop.f32.mrf.mxu0
        %4059 = vmatprep.mubr.bf16.mxu0 0
        %4060 = vmatmul.mubr.bf16.gmra.mxu0 %v3839
        %v4061 = vpop.f32.mrf.mxu0
        %v4062 = vadd.f32 0.0, %v4061
        %v4063 = vpop.f32.mrf.mxu0
        %v4064 = vpop.f32.mrf.mxu0
        %v4065 = vadd.f32 0.0, %v4064
        %v4066 = vpop.f32.mrf.mxu0
        %4067 = vmatprep.mubr.bf16.mxu0 0
        %4068 = vmatmul.mubr.bf16.gmra.mxu0 %v3840
        %v4069 = vpop.f32.mrf.mxu0
        %v4070 = vadd.f32 0.0, %v4069
        %v4071 = vpop.f32.mrf.mxu0
        %v4072 = vpop.f32.mrf.mxu0
        %v4073 = vadd.f32 0.0, %v4072
        %v4074 = vpop.f32.mrf.mxu0
        %4075 = vmatprep.mubr.bf16.mxu0 0
        %4076 = vmatmul.mubr.bf16.gmra.mxu0 %v3841
        %v4077 = vpop.f32.mrf.mxu0
        %v4078 = vadd.f32 0.0, %v4077
        %v4079 = vpop.f32.mrf.mxu0
        %v4080 = vpop.f32.mrf.mxu0
        %v4081 = vadd.f32 0.0, %v4080
        %v4082 = vpop.f32.mrf.mxu0
        %4083 = vmatprep.mubr.bf16.mxu0 0
        %4084 = vmatmul.mubr.bf16.gmra.mxu0 %v3842
        %v4085 = vpop.f32.mrf.mxu0
        %v4086 = vadd.f32 0.0, %v4085
        %v4087 = vpop.f32.mrf.mxu0
        %v4088 = vpop.f32.mrf.mxu0
        %v4089 = vadd.f32 0.0, %v4088
        %v4090 = vpop.f32.mrf.mxu0
        %4091 = vdwg.mxu0
        %4092 = vmatprep.subr.bf16.mxu0 0
        %4093 = vmatpush1.bf16.msra.mxu0 %v3359
        %4094 = vmatprep.subr.bf16.mxu0 0
        %4095 = vmatpush1.bf16.msra.mxu0 %v3358
        %4096 = vmatprep.subr.bf16.mxu0 0
        %4097 = vmatpush1.bf16.msra.mxu0 %v3357
        %4098 = vmatprep.subr.bf16.mxu0 0
        %4099 = vmatpush1.bf16.msra.mxu0 %v3356
        %4100 = vmatprep.subr.bf16.mxu0 0
        %4101 = vmatpush1.bf16.msra.mxu0 %v3355
        %4102 = vmatprep.subr.bf16.mxu0 0
        %4103 = vmatpush1.bf16.msra.mxu0 %v3354
        %4104 = vmatprep.subr.bf16.mxu0 0
        %4105 = vmatpush1.bf16.msra.mxu0 %v3353
        %4106 = vmatprep.subr.bf16.mxu0 0
        %4107 = vmatpush1.bf16.msra.mxu0 %v3352
        %4108 = vmatprep.subr.bf16.mxu0 0
        %4109 = vmatpush2.bf16.msra.mxu0 0
        %4110 = vmatprep.subr.bf16.mxu0 0
        %4111 = vmatpush2.bf16.msra.mxu0 0
        %4112 = vmatprep.subr.bf16.mxu0 0
        %4113 = vmatpush2.bf16.msra.mxu0 0
        %4114 = vmatprep.subr.bf16.mxu0 0
        %4115 = vmatpush2.bf16.msra.mxu0 0
        %4116 = vmatprep.subr.bf16.mxu0 0
        %4117 = vmatpush2.bf16.msra.mxu0 0
        %4118 = vmatprep.subr.bf16.mxu0 0
        %4119 = vmatpush2.bf16.msra.mxu0 0
        %4120 = vmatprep.subr.bf16.mxu0 0
        %4121 = vmatpush2.bf16.msra.mxu0 0
        %4122 = vmatprep.subr.bf16.mxu0 0
        %4123 = vmatpush2.bf16.msra.mxu0 0
        %4124 = vmatprep.mubr.bf16.mxu0 0
        %4125 = vmatmul.mubr.bf16.gmra.mxu0 %v3987
        %v4126 = vpop.f32.mrf.mxu0
        %v4127 = vadd.f32 0.0, %v4126
        %v4128 = vpop.f32.mrf.mxu0
        %v4129 = vpop.f32.mrf.mxu0
        %v4130 = vadd.f32 0.0, %v4129
        %v4131 = vpop.f32.mrf.mxu0
        %4132 = vmatprep.mubr.bf16.mxu0 0
        %4133 = vmatmul.mubr.bf16.gmra.mxu0 %v3988
        %v4134 = vpop.f32.mrf.mxu0
        %v4135 = vadd.f32 0.0, %v4134
        %v4136 = vpop.f32.mrf.mxu0
        %v4137 = vpop.f32.mrf.mxu0
        %v4138 = vadd.f32 0.0, %v4137
        %v4139 = vpop.f32.mrf.mxu0
        %4140 = vmatprep.mubr.bf16.mxu0 0
        %4141 = vmatmul.mubr.bf16.gmra.mxu0 %v3989
        %v4142 = vpop.f32.mrf.mxu0
        %v4143 = vadd.f32 0.0, %v4142
        %v4144 = vpop.f32.mrf.mxu0
        %v4145 = vpop.f32.mrf.mxu0
        %v4146 = vadd.f32 0.0, %v4145
        %v4147 = vpop.f32.mrf.mxu0
        %4148 = vmatprep.mubr.bf16.mxu0 0
        %4149 = vmatmul.mubr.bf16.gmra.mxu0 %v3990
        %v4150 = vpop.f32.mrf.mxu0
        %v4151 = vadd.f32 0.0, %v4150
        %v4152 = vpop.f32.mrf.mxu0
        %v4153 = vpop.f32.mrf.mxu0
        %v4154 = vadd.f32 0.0, %v4153
        %v4155 = vpop.f32.mrf.mxu0
        %4156 = vmatprep.mubr.bf16.mxu0 0
        %4157 = vmatmul.mubr.bf16.gmra.mxu0 %v3991
        %v4158 = vpop.f32.mrf.mxu0
        %v4159 = vadd.f32 0.0, %v4158
        %v4160 = vpop.f32.mrf.mxu0
        %v4161 = vpop.f32.mrf.mxu0
        %v4162 = vadd.f32 0.0, %v4161
        %v4163 = vpop.f32.mrf.mxu0
        %4164 = vmatprep.mubr.bf16.mxu0 0
        %4165 = vmatmul.mubr.bf16.gmra.mxu0 %v3992
        %v4166 = vpop.f32.mrf.mxu0
        %v4167 = vadd.f32 0.0, %v4166
        %v4168 = vpop.f32.mrf.mxu0
        %v4169 = vpop.f32.mrf.mxu0
        %v4170 = vadd.f32 0.0, %v4169
        %v4171 = vpop.f32.mrf.mxu0
        %4172 = vmatprep.mubr.bf16.mxu0 0
        %4173 = vmatmul.mubr.bf16.gmra.mxu0 %v3993
        %v4174 = vpop.f32.mrf.mxu0
        %v4175 = vadd.f32 0.0, %v4174
        %v4176 = vpop.f32.mrf.mxu0
        %v4177 = vpop.f32.mrf.mxu0
        %v4178 = vadd.f32 0.0, %v4177
        %v4179 = vpop.f32.mrf.mxu0
        %4180 = vmatprep.mubr.bf16.mxu0 0
        %4181 = vmatmul.mubr.bf16.gmra.mxu0 %v3994
        %v4182 = vpop.f32.mrf.mxu0
        %v4183 = vadd.f32 0.0, %v4182
        %v4184 = vpop.f32.mrf.mxu0
        %v4185 = vpop.f32.mrf.mxu0
        %v4186 = vadd.f32 0.0, %v4185
        %v4187 = vpop.f32.mrf.mxu0
        %4188 = vdwg.mxu0
        %4189 = vst [vmem:[%s588] sm:$0xff] %v4030
        %4190 = vst [vmem:[%s588 + $0x8] sm:$0xff] %v4033
        %4191 = vst [vmem:[%s588 + $0x10] sm:$0xff] %v4038
        %4192 = vst [vmem:[%s588 + $0x18] sm:$0xff] %v4041
        %4193 = vst [vmem:[%s588 + $0x20] sm:$0xff] %v4046
        %4194 = vst [vmem:[%s588 + $0x28] sm:$0xff] %v4049
        %4195 = vst [vmem:[%s588 + $0x30] sm:$0xff] %v4054
        %4196 = vst [vmem:[%s588 + $0x38] sm:$0xff] %v4057
        %4197 = vst [vmem:[%s588 + $0x40] sm:$0xff] %v4062
        %4198 = vst [vmem:[%s588 + $0x48] sm:$0xff] %v4065
        %4199 = vst [vmem:[%s588 + $0x50] sm:$0xff] %v4070
        %4200 = vst [vmem:[%s588 + $0x58] sm:$0xff] %v4073
        %4201 = vst [vmem:[%s588 + $0x60] sm:$0xff] %v4078
        %4202 = vst [vmem:[%s588 + $0x68] sm:$0xff] %v4081
        %4203 = vst [vmem:[%s588 + $0x70] sm:$0xff] %v4086
        %4204 = vst [vmem:[%s588 + $0x78] sm:$0xff] %v4089
        %4205 = vst [vmem:[%s595] sm:$0xff] %v4127
        %4206 = vst [vmem:[%s595 + $0x8] sm:$0xff] %v4130
        %4207 = vst [vmem:[%s595 + $0x10] sm:$0xff] %v4135
        %4208 = vst [vmem:[%s595 + $0x18] sm:$0xff] %v4138
        %4209 = vst [vmem:[%s595 + $0x20] sm:$0xff] %v4143
        %4210 = vst [vmem:[%s595 + $0x28] sm:$0xff] %v4146
        %4211 = vst [vmem:[%s595 + $0x30] sm:$0xff] %v4151
        %4212 = vst [vmem:[%s595 + $0x38] sm:$0xff] %v4154
        %4213 = vst [vmem:[%s595 + $0x40] sm:$0xff] %v4159
        %4214 = vst [vmem:[%s595 + $0x48] sm:$0xff] %v4162
        %4215 = vst [vmem:[%s595 + $0x50] sm:$0xff] %v4167
        %4216 = vst [vmem:[%s595 + $0x58] sm:$0xff] %v4170
        %4217 = vst [vmem:[%s595 + $0x60] sm:$0xff] %v4175
        %4218 = vst [vmem:[%s595 + $0x68] sm:$0xff] %v4178
        %4219 = vst [vmem:[%s595 + $0x70] sm:$0xff] %v4183
        %4220 = vst [vmem:[%s595 + $0x78] sm:$0xff] %v4186
        %s4221 = sand.u32 %s295, 1
        %s4222 = scalar_lea.sflag [#allocation4], %s4221
        %s4223 = sand.u32 %s295, 1
        %s4224 = smul.addr %s4223, 128
        %s4225 = scalar_lea.vmem [#allocation12], %s4224
        %s4226 = sand.u32 %s36, 1
        %s4227 = scalar_lea.sflag [#allocation14], %s4226
        %s4228 = sand.u32 %s321, 1
        %s4229 = smul.addr %s4228, 128
        %s4230 = scalar_lea.vmem [#allocation13], %s4229
        %s4231 = sand.u32 %s36, 1
        %s4232 = scalar_lea.sflag [#allocation14], %s4231
        %s4233 = sand.u32 %s347, 1
        %s4234 = smul.addr %s4233, 128
        %s4235 = scalar_lea.vmem [#allocation15], %s4234
        // Predicated region
        $region89: #{tpu_custom_call.1} parent=63 // pred_check
          %p4236 = pneg %p305
        $region90: #{tpu_custom_call.1} parent=63 // pred_check_branch
          %4238 = sbr.rel (%p4236) target = $region92
        $region91: #{tpu_custom_call.1} parent=63 // pred_region
          %s4240 = ssub.s32 2048, 2048
          %4241 = vsyncadd %s4222, %s4240
          %s4242 = smul.addr %s36, 16
          %s4243 = smul.addr %s4242, 128
          %s4244 = scalar_lea.hbm %s11, %s4243
          %s4245 = sshll.u32 %s4225, 4
          %s4246 = int_to_ptr.vmem [resolvable:$true] %s4245
          %4251 = dma.vmem_to_hbm [thread:$0]  %s4246, 2048, %s4244, %s4222, 128, 128, 8
        $region92: #{tpu_custom_call.1} parent=63 // pred_fallthru
          _
        // Predicated region
        $region93: #{tpu_custom_call.1} parent=63 // pred_check
          %p4252 = pneg %p331
        $region94: #{tpu_custom_call.1} parent=63 // pred_check_branch
          %4254 = sbr.rel (%p4252) target = $region96
        $region95: #{tpu_custom_call.1} parent=63 // pred_region
          %s4256 = ssub.s32 2048, 2048
          %4257 = vsyncadd %s4227, %s4256
          %s4258 = smul.addr %s36, 16
          %s4259 = smul.addr %s4258, 128
          %s4260 = scalar_lea.hbm %s12, %s4259
          %s4261 = sshll.u32 %s4230, 4
          %s4262 = int_to_ptr.vmem [resolvable:$true] %s4261
          %4267 = dma.vmem_to_hbm [thread:$0]  %s4262, 2048, %s4260, %s4227, 128, 128, 8
        $region96: #{tpu_custom_call.1} parent=63 // pred_fallthru
          _
        // Predicated region
        $region97: #{tpu_custom_call.1} parent=63 // pred_check
          %p4268 = pneg %p357
        $region98: #{tpu_custom_call.1} parent=63 // pred_check_branch
          %4270 = sbr.rel (%p4268) target = $region100
        $region99: #{tpu_custom_call.1} parent=63 // pred_region
          %s4272 = ssub.s32 2048, 2048
          %4273 = vsyncadd %s4232, %s4272
          %s4274 = smul.addr %s36, 16
          %s4275 = smul.addr %s4274, 128
          %s4276 = scalar_lea.hbm %s13, %s4275
          %s4277 = sshll.u32 %s4235, 4
          %s4278 = int_to_ptr.vmem [resolvable:$true] %s4277
          %4283 = dma.vmem_to_hbm [thread:$0]  %s4278, 2048, %s4276, %s4232, 128, 128, 8
        $region100: #{tpu_custom_call.1} parent=63 // pred_fallthru
          _
      $region64: #{tpu_custom_call.1} parent=5 // pred_fallthru
        _
      %p4284 = scmp.le.s32.totalorder 2, %s31
      // Predicated region
      $region101: #{tpu_custom_call.1} parent=5 // pred_check
        %p4285 = pneg %p4284
      $region102: #{tpu_custom_call.1} parent=5 // pred_check_branch
        %4287 = sbr.rel (%p4285) target = $region104
      $region103: #{tpu_custom_call.1} parent=5 // pred_region
        %s4288 = ssub.s32 %s31, 2
        // Predicated region
        $region105: #{tpu_custom_call.1} parent=103 // pred_check
          %p4289 = pneg %p311
        $region106: #{tpu_custom_call.1} parent=103 // pred_check_branch
          %4291 = sbr.rel (%p4289) target = $region108
        $region107: #{tpu_custom_call.1} parent=103 // pred_region
          %s4292 = sand.u32 %s296, 1
          %s4293 = scalar_lea.sflag [#allocation4], %s4292
          %s4294 = sand.u32 %s296, 1
          %s4295 = smul.addr %s4294, 128
          %s4296 = scalar_lea.vmem [#allocation12], %s4295
          %4297 = dma.done %s4293, 2048
        $region108: #{tpu_custom_call.1} parent=103 // pred_fallthru
          _
        // Predicated region
        $region109: #{tpu_custom_call.1} parent=103 // pred_check
          %p4298 = pneg %p337
        $region110: #{tpu_custom_call.1} parent=103 // pred_check_branch
          %4300 = sbr.rel (%p4298) target = $region112
        $region111: #{tpu_custom_call.1} parent=103 // pred_region
          %s4301 = sand.u32 %s37, 1
          %s4302 = scalar_lea.sflag [#allocation14], %s4301
          %s4303 = sand.u32 %s322, 1
          %s4304 = smul.addr %s4303, 128
          %s4305 = scalar_lea.vmem [#allocation13], %s4304
          %4306 = dma.done %s4302, 2048
        $region112: #{tpu_custom_call.1} parent=103 // pred_fallthru
          _
        // Predicated region
        $region113: #{tpu_custom_call.1} parent=103 // pred_check
          %p4307 = pneg %p363
        $region114: #{tpu_custom_call.1} parent=103 // pred_check_branch
          %4309 = sbr.rel (%p4307) target = $region116
        $region115: #{tpu_custom_call.1} parent=103 // pred_region
          %s4310 = sand.u32 %s37, 1
          %s4311 = scalar_lea.sflag [#allocation14], %s4310
          %s4312 = sand.u32 %s348, 1
          %s4313 = smul.addr %s4312, 128
          %s4314 = scalar_lea.vmem [#allocation15], %s4313
          %4315 = dma.done %s4311, 2048
        $region116: #{tpu_custom_call.1} parent=103 // pred_fallthru
          _
      $region104: #{tpu_custom_call.1} parent=5 // pred_fallthru
        _
    $region6: #{tpu_custom_call.1} parent=1 // loop_footer
      %s35 = sadd.s32 1, %s31
    $region7: #{tpu_custom_call.1} parent=1 // loop_footer_branch
      %30 = sbr.rel target = $region3
    $region8: #{tpu_custom_call.1} parent=1 // loop_exit
      _
    %4316 = vsyncpa [#allocation3], 1
    %s4317 = scalar_lea.sflag [#allocation3], 1
    %4318 = vsyncpa %s4317, 1
    %4319 = vsyncpa [#allocation6], 1
    %4320 = vsyncpa [#allocation10], 1
    %4321 = vsyncpa [#allocation4], 1
    %s4322 = scalar_lea.sflag [#allocation4], 1
    %4323 = vsyncpa %s4322, 1
    %4324 = vsyncpa [#allocation14], 1
    %s4325 = scalar_lea.sflag [#allocation14], 1
    %4326 = vsyncpa %s4325, 1

</llo_original>
